<compile_context>
chip_gen: v5e
topology: v5e:2x2
jax: 0.10.0
libtpu: 0.0.40
codegen_flags: <defaults>
</compile_context>

<pallas_src>
import functools

import jax
import jax.numpy as jnp
from jax import lax
from jax.experimental import pallas as pl
from jax.experimental.pallas import tpu as pltpu


def _round_up(n, m):
    return ((n + m - 1) // m) * m


def _bidir_lstm_kernel(x_ref, wih_f_ref, wih_r_ref, bf_ref, br_ref,
                       whh_f_ref, whh_r_ref, wemb_f_ref, wemb_r_ref, bemb_ref,
                       out_ref,
                       gxf_ref, gxr_ref, hf_ref, hr_ref,
                       *, T, Bp, Hp, cdt):
    """Whole problem resident in VMEM (single invocation, no grid).

    Shapes (padded): x (T*Bp, nIn); wih_* (nIn, 4*Hp); b* (1, 4*Hp);
    whh_* (Hp, 4*Hp); wemb_* (Hp, nOutP); bemb (1, nOutP); out (T*Bp, nOutP).
    Gate order inside every 4*Hp block is (i, f, o, g).
    """
    H3 = 3 * Hp

    # ---- hoisted input projection ------------------------------------------
    # One MXU matmul per direction, bias folded in, written straight into flat
    # 2-D scratch: no fused intermediate, no column slices, no reshape copies
    # (slices / reshapes are not views on TPU).
    gxf_ref[...] = (jnp.dot(x_ref[...], wih_f_ref[...],
                            preferred_element_type=jnp.float32)
                    + bf_ref[...]).astype(gxf_ref.dtype)
    gxr_ref[...] = (jnp.dot(x_ref[...], wih_r_ref[...],
                            preferred_element_type=jnp.float32)
                    + br_ref[...]).astype(gxr_ref.dtype)

    def sigmoid(v):
        # Exact identity sigmoid(x) = 0.5*tanh(0.5*x)+0.5: one EUP op per call
        # instead of exp + divide on the serial recurrence chain.
        return 0.5 * jnp.tanh(0.5 * v) + 0.5

    def cell(gates, c):
        # (i, f, o, g) packing -> one sigmoid over (Bp, 3*Hp), one tanh over (Bp, Hp).
        sg = sigmoid(gates[:, :H3])
        g = jnp.tanh(gates[:, H3:])
        i = sg[:, 0 * Hp:1 * Hp]
        f = sg[:, 1 * Hp:2 * Hp]
        o = sg[:, 2 * Hp:H3]
        c_new = f * c + i * g
        h_new = o * jnp.tanh(c_new)
        return h_new, c_new

    # ---- fused forward + reverse recurrence ---------------------------------
    # Fully unrolled static loop (T is small for CRNN sequence heads): all scratch
    # offsets are compile-time constants -> dense aligned accesses, full LLO
    # scheduler visibility across the two interleaved dependency chains.
    # TODO(synk): switch to lax.fori_loop(..., unroll=4) if T grows into the hundreds.
    z = jnp.zeros((Bp, Hp), jnp.float32)
    hf, cf, hr, cr = z, z, z, z
    for t in range(T):
        tr = T - 1 - t
        rf = pl.ds(t * Bp, Bp)
        rr = pl.ds(tr * Bp, Bp)

        gf = gxf_ref[rf, :].astype(jnp.float32) + jnp.dot(
            hf.astype(cdt), whh_f_ref[...], preferred_element_type=jnp.float32)
        hf, cf = cell(gf, cf)
        hf_ref[rf, :] = hf.astype(hf_ref.dtype)

        gr = gxr_ref[rr, :].astype(jnp.float32) + jnp.dot(
            hr.astype(cdt), whh_r_ref[...], preferred_element_type=jnp.float32)
        hr, cr = cell(gr, cr)
        hr_ref[rr, :] = hr.astype(hr_ref.dtype)

    # ---- embedding: no concat, W_emb split into fwd/rev halves ---------------
    # Fed directly from the h scratch (no end-of-kernel astype passes).
    out_ref[...] = (
        jnp.dot(hf_ref[...], wemb_f_ref[...], preferred_element_type=jnp.float32)
        + jnp.dot(hr_ref[...], wemb_r_ref[...], preferred_element_type=jnp.float32)
        + bemb_ref[...])


def bidirectional_lstm(x, p, compute_dtype=jnp.bfloat16):
    T, B, nIn = x.shape
    H = p["whh_f"].shape[0]
    nOut = p["wemb"].shape[1]

    Hp = _round_up(H, 128)        # lane-align hidden: dense gate slices / h stores
    nOutP = _round_up(nOut, 128)  # lane-dense output store
    Bp = _round_up(B, 8)          # sublane-align batch
    cdt = compute_dtype

    # bf16 scratch (half VMEM / store traffic) only when the padded batch fills whole
    # (16,128) bf16 tiles; otherwise f32 so every per-step 8-row slice is exactly one
    # aligned (8,128) tile (no masked packed sub-tile accesses).
    scratch_dt = cdt if Bp % 16 == 0 else jnp.float32

    def pad_gates(w):
        # (..., 4H) in PyTorch gate order (i,f,g,o) -> (..., 4*Hp) in (i,f,o,g),
        # zero-padded per gate so Hp-wide slices line up on 128-lane boundaries.
        lead = w.shape[:-1]
        w4 = w.reshape(lead + (4, H))
        w4 = jnp.take(w4, jnp.array([0, 1, 3, 2]), axis=-2)
        w4 = jnp.pad(w4, [(0, 0)] * len(lead) + [(0, 0), (0, Hp - H)])
        return w4.reshape(lead + (4 * Hp,))

    wih_f = pad_gates(p["wih_f"]).astype(cdt)          # (nIn, 4Hp)
    wih_r = pad_gates(p["wih_r"]).astype(cdt)
    bf = pad_gates(p["bf"]).astype(jnp.float32)        # (1, 4Hp)  (b_ih + b_hh folded)
    br = pad_gates(p["br"]).astype(jnp.float32)

    def pad_hh(w):                                     # (H, 4H) -> (Hp, 4Hp)
        return jnp.pad(pad_gates(w), [(0, Hp - H), (0, 0)]).astype(cdt)

    whh_f = pad_hh(p["whh_f"])
    whh_r = pad_hh(p["whh_r"])

    def pad_emb(w):                                    # (H, nOut) -> (Hp, nOutP)
        return jnp.pad(w, [(0, Hp - H), (0, nOutP - nOut)]).astype(cdt)

    wemb_f = pad_emb(p["wemb"][:H])
    wemb_r = pad_emb(p["wemb"][H:])
    bemb = jnp.pad(p["bemb"], [(0, 0), (0, nOutP - nOut)]).astype(jnp.float32)

    # x: (T, B, nIn) -> pad batch to Bp, flatten to (T*Bp, nIn) for one big matmul.
    x_p = jnp.pad(x, [(0, 0), (0, Bp - B), (0, 0)])
    x2 = x_p.reshape(T * Bp, nIn).astype(cdt)

    # Derive the VMEM budget from what the kernel actually allocates (single
    # invocation -> no double buffering); 2x + 4 MiB headroom for Mosaic-internal
    # scratch, capped at v7x's 64 MiB per-TC physical VMEM.
    operands = [x2, wih_f, wih_r, bf, br, whh_f, whh_r, wemb_f, wemb_r, bemb]
    sdt_bytes = jnp.dtype(scratch_dt).itemsize
    scratch_bytes = 2 * T * Bp * 4 * Hp * sdt_bytes + 2 * T * Bp * Hp * sdt_bytes
    out_bytes = T * Bp * nOutP * 4
    total = sum(int(a.size) * a.dtype.itemsize for a in operands) \
        + scratch_bytes + out_bytes
    vmem_limit = int(min(64 * 1024 * 1024,
                         max(16 * 1024 * 1024, 2 * total + (4 << 20))))

    kernel = functools.partial(_bidir_lstm_kernel, T=T, Bp=Bp, Hp=Hp, cdt=cdt)
    vmem = pl.BlockSpec(memory_space=pltpu.MemorySpace.VMEM)

    out_p = pl.pallas_call(
        kernel,
        out_shape=jax.ShapeDtypeStruct((T * Bp, nOutP), jnp.float32),
        in_specs=[vmem] * 10,
        out_specs=vmem,
        scratch_shapes=[
            pltpu.VMEM((T * Bp, 4 * Hp), scratch_dt),   # gates from x, forward
            pltpu.VMEM((T * Bp, 4 * Hp), scratch_dt),   # gates from x, reverse
            pltpu.VMEM((T * Bp, Hp), scratch_dt),       # h forward
            pltpu.VMEM((T * Bp, Hp), scratch_dt),       # h reverse
        ],
        compiler_params=pltpu.CompilerParams(vmem_limit_bytes=vmem_limit),
    )(x2, wih_f, wih_r, bf, br, whh_f, whh_r, wemb_f, wemb_r, bemb)

    # Un-pad: (T*Bp, nOutP) -> (T, B, nOut)
    return out_p.reshape(T, Bp, nOutP)[:, :B, :nOut]


def init_params(key, nIn, H, nOut):
    """Deterministic synthetic params, PyTorch-style uniform(-1/sqrt(H), 1/sqrt(H))."""
    ks = jax.random.split(key, 10)
    s = 1.0 / jnp.sqrt(jnp.float32(H))

    def u(k, shape, scale):
        return jax.random.uniform(k, shape, jnp.float32, -scale, scale)

    # PyTorch stores weight_ih_l0 as (4H, nIn), weight_hh_l0 as (4H, H).
    # Pre-transpose so the kernel does x @ W with gate order i, f, g, o.
    wih_f = u(ks[0], (4 * H, nIn), s).T               # (nIn, 4H)
    whh_f = u(ks[1], (4 * H, H), s).T                 # (H,   4H)
    bf = (u(ks[2], (4 * H,), s) + u(ks[3], (4 * H,), s)).reshape(1, 4 * H)
    wih_r = u(ks[4], (4 * H, nIn), s).T
    whh_r = u(ks[5], (4 * H, H), s).T
    br = (u(ks[6], (4 * H,), s) + u(ks[7], (4 * H,), s)).reshape(1, 4 * H)

    se = 1.0 / jnp.sqrt(jnp.float32(2 * H))
    wemb = u(ks[8], (nOut, 2 * H), se).T              # (2H, nOut)
    bemb = u(ks[9], (nOut,), se).reshape(1, nOut)

    return dict(wih_f=wih_f, whh_f=whh_f, bf=bf,
                wih_r=wih_r, whh_r=whh_r, br=br,
                wemb=wemb, bemb=bemb)


def reference(x, p):
    """Pure-JAX f32 reference matching PyTorch BidirectionalLSTM.forward semantics."""
    T, B, _ = x.shape
    H = p["whh_f"].shape[0]

    def run_dir(wih, whh, bias, reverse):
        def cell(carry, xt):
            h, c = carry
            gates = xt @ wih + h @ whh + bias
            i = jax.nn.sigmoid(gates[:, 0 * H:1 * H])
            f = jax.nn.sigmoid(gates[:, 1 * H:2 * H])
            g = jnp.tanh(gates[:, 2 * H:3 * H])
            o = jax.nn.sigmoid(gates[:, 3 * H:4 * H])
            c = f * c + i * g
            h = o * jnp.tanh(c)
            return (h, c), h
        xs = x[::-1] if reverse else x
        init = (jnp.zeros((B, H), jnp.float32), jnp.zeros((B, H), jnp.float32))
        _, hs = lax.scan(cell, init, xs)
        return hs[::-1] if reverse else hs

    hf = run_dir(p["wih_f"], p["whh_f"], p["bf"], reverse=False)
    hr = run_dir(p["wih_r"], p["whh_r"], p["br"], reverse=True)
    rec = jnp.concatenate([hf, hr], axis=-1).reshape(T * B, 2 * H)
    out = rec @ p["wemb"] + p["bemb"]
    return out.reshape(T, B, -1)


if __name__ == "__main__":
    T, B, nIn, H, nOut = 8, 2, 16, 32, 16

    key = jax.random.PRNGKey(0)
    kx, kp = jax.random.split(key)
    x = jax.random.normal(kx, (T, B, nIn), jnp.float32)
    params = init_params(kp, nIn, H, nOut)

    out = bidirectional_lstm(x, params)
    out = jax.block_until_ready(out)

    ref = jax.block_until_ready(reference(x, params))
    assert out.shape == (T, B, nOut), out.shape
    # bf16 matmul operands, f32 accumulation + gate math -> slightly loose tolerance.
    assert jnp.allclose(out, ref, rtol=2e-2, atol=2e-2), \
        float(jnp.max(jnp.abs(out - ref)))

    print("KERNEL_OK")
</pallas_src>

<mosaic_0001>
module attributes {stable_mosaic.version = 11 : i64} {
  func.func @_bidir_lstm_kernel(%arg0: memref<64x16xbf16, #tpu.memory_space<vmem>>, %arg1: memref<16x512xbf16, #tpu.memory_space<vmem>>, %arg2: memref<16x512xbf16, #tpu.memory_space<vmem>>, %arg3: memref<1x512xf32, #tpu.memory_space<vmem>>, %arg4: memref<1x512xf32, #tpu.memory_space<vmem>>, %arg5: memref<128x512xbf16, #tpu.memory_space<vmem>>, %arg6: memref<128x512xbf16, #tpu.memory_space<vmem>>, %arg7: memref<128x128xbf16, #tpu.memory_space<vmem>>, %arg8: memref<128x128xbf16, #tpu.memory_space<vmem>>, %arg9: memref<1x128xf32, #tpu.memory_space<vmem>>, %arg10: memref<64x128xf32, #tpu.memory_space<vmem>>, %arg11: memref<64x512xf32, #tpu.memory_space<vmem>>, %arg12: memref<64x512xf32, #tpu.memory_space<vmem>>, %arg13: memref<64x128xf32, #tpu.memory_space<vmem>>, %arg14: memref<64x128xf32, #tpu.memory_space<vmem>>) attributes {dimension_semantics = [], scalar_prefetch = 0 : i64, scratch_operands = 4 : i64, tpu.core_type = #tpu.core_type<tc>} {
    %c0 = arith.constant 0 : index
    %c0_0 = arith.constant 0 : index
    %0 = vector.load %arg0[%c0, %c0_0] : memref<64x16xbf16, #tpu.memory_space<vmem>>, vector<64x16xbf16>
    %c0_1 = arith.constant 0 : index
    %c0_2 = arith.constant 0 : index
    %1 = vector.load %arg1[%c0_1, %c0_2] : memref<16x512xbf16, #tpu.memory_space<vmem>>, vector<16x512xbf16>
    %cst = arith.constant dense<0.000000e+00> : vector<64x512xf32>
    %2 = tpu.matmul %0, %1, %cst {dimension_numbers = #tpu.dot_dimension_numbers<[1], [0], [0], [1], [0, 0, 1, 1], [], []>} : vector<64x16xbf16>, vector<16x512xbf16>, vector<64x512xf32> -> vector<64x512xf32>
    %c0_3 = arith.constant 0 : index
    %c0_4 = arith.constant 0 : index
    %3 = vector.load %arg3[%c0_3, %c0_4] : memref<1x512xf32, #tpu.memory_space<vmem>>, vector<1x512xf32>
    %4 = vector.broadcast %3 : vector<1x512xf32> to vector<64x512xf32>
    %5 = arith.addf %2, %4 : vector<64x512xf32>
    %c0_5 = arith.constant 0 : index
    %c0_6 = arith.constant 0 : index
    %6 = vector.load %arg11[%c0_5, %c0_6] : memref<64x512xf32, #tpu.memory_space<vmem>>, vector<64x512xf32>
    tpu.vector_store %arg11[%c0_5, %c0_6], %5 {strides = array<i32>} : memref<64x512xf32, #tpu.memory_space<vmem>>, vector<64x512xf32>,
    %c0_7 = arith.constant 0 : index
    %c0_8 = arith.constant 0 : index
    %7 = vector.load %arg0[%c0_7, %c0_8] : memref<64x16xbf16, #tpu.memory_space<vmem>>, vector<64x16xbf16>
    %c0_9 = arith.constant 0 : index
    %c0_10 = arith.constant 0 : index
    %8 = vector.load %arg2[%c0_9, %c0_10] : memref<16x512xbf16, #tpu.memory_space<vmem>>, vector<16x512xbf16>
    %cst_11 = arith.constant dense<0.000000e+00> : vector<64x512xf32>
    %9 = tpu.matmul %7, %8, %cst_11 {dimension_numbers = #tpu.dot_dimension_numbers<[1], [0], [0], [1], [0, 0, 1, 1], [], []>} : vector<64x16xbf16>, vector<16x512xbf16>, vector<64x512xf32> -> vector<64x512xf32>
    %c0_12 = arith.constant 0 : index
    %c0_13 = arith.constant 0 : index
    %10 = vector.load %arg4[%c0_12, %c0_13] : memref<1x512xf32, #tpu.memory_space<vmem>>, vector<1x512xf32>
    %11 = vector.broadcast %10 : vector<1x512xf32> to vector<64x512xf32>
    %12 = arith.addf %9, %11 : vector<64x512xf32>
    %c0_14 = arith.constant 0 : index
    %c0_15 = arith.constant 0 : index
    %13 = vector.load %arg12[%c0_14, %c0_15] : memref<64x512xf32, #tpu.memory_space<vmem>>, vector<64x512xf32>
    tpu.vector_store %arg12[%c0_14, %c0_15], %12 {strides = array<i32>} : memref<64x512xf32, #tpu.memory_space<vmem>>, vector<64x512xf32>,
    %cst_16 = arith.constant 0.000000e+00 : f32
    %14 = vector.broadcast %cst_16 : f32 to vector<8x128xf32>
    %c0_17 = arith.constant 0 : index
    %c0_18 = arith.constant 0 : index
    %15 = vector.load %arg11[%c0_17, %c0_18] : memref<64x512xf32, #tpu.memory_space<vmem>>, vector<8x512xf32>
    %16 = arith.truncf %14 : vector<8x128xf32> to vector<8x128xbf16>
    %c0_19 = arith.constant 0 : index
    %c0_20 = arith.constant 0 : index
    %17 = vector.load %arg5[%c0_19, %c0_20] : memref<128x512xbf16, #tpu.memory_space<vmem>>, vector<128x512xbf16>
    %cst_21 = arith.constant dense<0.000000e+00> : vector<8x512xf32>
    %18 = tpu.matmul %16, %17, %cst_21 {dimension_numbers = #tpu.dot_dimension_numbers<[1], [0], [0], [1], [0, 0, 1, 1], [], []>} : vector<8x128xbf16>, vector<128x512xbf16>, vector<8x512xf32> -> vector<8x512xf32>
    %19 = arith.addf %15, %18 : vector<8x512xf32>
    %20 = vector.extract_strided_slice %19 {offsets = [0, 0], sizes = [8, 384], strides = [1, 1]} : vector<8x512xf32> to vector<8x384xf32>
    %cst_22 = arith.constant 5.000000e-01 : f32
    %21 = vector.broadcast %cst_22 : f32 to vector<8x384xf32>
    %22 = arith.mulf %21, %20 : vector<8x384xf32>
    %23 = math.tanh %22 : vector<8x384xf32>
    %cst_23 = arith.constant 5.000000e-01 : f32
    %24 = vector.broadcast %cst_23 : f32 to vector<8x384xf32>
    %25 = arith.mulf %24, %23 : vector<8x384xf32>
    %cst_24 = arith.constant 5.000000e-01 : f32
    %26 = vector.broadcast %cst_24 : f32 to vector<8x384xf32>
    %27 = arith.addf %25, %26 : vector<8x384xf32>
    %28 = vector.extract_strided_slice %19 {offsets = [0, 384], sizes = [8, 128], strides = [1, 1]} : vector<8x512xf32> to vector<8x128xf32>
    %29 = math.tanh %28 : vector<8x128xf32>
    %30 = vector.extract_strided_slice %27 {offsets = [0, 0], sizes = [8, 128], strides = [1, 1]} : vector<8x384xf32> to vector<8x128xf32>
    %31 = vector.extract_strided_slice %27 {offsets = [0, 128], sizes = [8, 128], strides = [1, 1]} : vector<8x384xf32> to vector<8x128xf32>
    %32 = vector.extract_strided_slice %27 {offsets = [0, 256], sizes = [8, 128], strides = [1, 1]} : vector<8x384xf32> to vector<8x128xf32>
    %33 = arith.mulf %31, %14 : vector<8x128xf32>
    %34 = arith.mulf %30, %29 : vector<8x128xf32>
    %35 = arith.addf %33, %34 : vector<8x128xf32>
    %36 = math.tanh %35 : vector<8x128xf32>
    %37 = arith.mulf %32, %36 : vector<8x128xf32>
    %c0_25 = arith.constant 0 : index
    %c0_26 = arith.constant 0 : index
    %38 = vector.load %arg13[%c0_25, %c0_26] : memref<64x128xf32, #tpu.memory_space<vmem>>, vector<8x128xf32>
    tpu.vector_store %arg13[%c0_25, %c0_26], %37 {strides = array<i32>} : memref<64x128xf32, #tpu.memory_space<vmem>>, vector<8x128xf32>,
    %c56 = arith.constant 56 : index
    %c0_27 = arith.constant 0 : index
    %39 = vector.load %arg12[%c56, %c0_27] : memref<64x512xf32, #tpu.memory_space<vmem>>, vector<8x512xf32>
    %40 = arith.truncf %14 : vector<8x128xf32> to vector<8x128xbf16>
    %c0_28 = arith.constant 0 : index
    %c0_29 = arith.constant 0 : index
    %41 = vector.load %arg6[%c0_28, %c0_29] : memref<128x512xbf16, #tpu.memory_space<vmem>>, vector<128x512xbf16>
    %cst_30 = arith.constant dense<0.000000e+00> : vector<8x512xf32>
    %42 = tpu.matmul %40, %41, %cst_30 {dimension_numbers = #tpu.dot_dimension_numbers<[1], [0], [0], [1], [0, 0, 1, 1], [], []>} : vector<8x128xbf16>, vector<128x512xbf16>, vector<8x512xf32> -> vector<8x512xf32>
    %43 = arith.addf %39, %42 : vector<8x512xf32>
    %44 = vector.extract_strided_slice %43 {offsets = [0, 0], sizes = [8, 384], strides = [1, 1]} : vector<8x512xf32> to vector<8x384xf32>
    %cst_31 = arith.constant 5.000000e-01 : f32
    %45 = vector.broadcast %cst_31 : f32 to vector<8x384xf32>
    %46 = arith.mulf %45, %44 : vector<8x384xf32>
    %47 = math.tanh %46 : vector<8x384xf32>
    %cst_32 = arith.constant 5.000000e-01 : f32
    %48 = vector.broadcast %cst_32 : f32 to vector<8x384xf32>
    %49 = arith.mulf %48, %47 : vector<8x384xf32>
    %cst_33 = arith.constant 5.000000e-01 : f32
    %50 = vector.broadcast %cst_33 : f32 to vector<8x384xf32>
    %51 = arith.addf %49, %50 : vector<8x384xf32>
    %52 = vector.extract_strided_slice %43 {offsets = [0, 384], sizes = [8, 128], strides = [1, 1]} : vector<8x512xf32> to vector<8x128xf32>
    %53 = math.tanh %52 : vector<8x128xf32>
    %54 = vector.extract_strided_slice %51 {offsets = [0, 0], sizes = [8, 128], strides = [1, 1]} : vector<8x384xf32> to vector<8x128xf32>
    %55 = vector.extract_strided_slice %51 {offsets = [0, 128], sizes = [8, 128], strides = [1, 1]} : vector<8x384xf32> to vector<8x128xf32>
    %56 = vector.extract_strided_slice %51 {offsets = [0, 256], sizes = [8, 128], strides = [1, 1]} : vector<8x384xf32> to vector<8x128xf32>
    %57 = arith.mulf %55, %14 : vector<8x128xf32>
    %58 = arith.mulf %54, %53 : vector<8x128xf32>
    %59 = arith.addf %57, %58 : vector<8x128xf32>
    %60 = math.tanh %59 : vector<8x128xf32>
    %61 = arith.mulf %56, %60 : vector<8x128xf32>
    %c56_34 = arith.constant 56 : index
    %c0_35 = arith.constant 0 : index
    %62 = vector.load %arg14[%c56_34, %c0_35] : memref<64x128xf32, #tpu.memory_space<vmem>>, vector<8x128xf32>
    tpu.vector_store %arg14[%c56_34, %c0_35], %61 {strides = array<i32>} : memref<64x128xf32, #tpu.memory_space<vmem>>, vector<8x128xf32>,
    %c8 = arith.constant 8 : index
    %c0_36 = arith.constant 0 : index
    %63 = vector.load %arg11[%c8, %c0_36] : memref<64x512xf32, #tpu.memory_space<vmem>>, vector<8x512xf32>
    %64 = arith.truncf %37 : vector<8x128xf32> to vector<8x128xbf16>
    %c0_37 = arith.constant 0 : index
    %c0_38 = arith.constant 0 : index
    %65 = vector.load %arg5[%c0_37, %c0_38] : memref<128x512xbf16, #tpu.memory_space<vmem>>, vector<128x512xbf16>
    %cst_39 = arith.constant dense<0.000000e+00> : vector<8x512xf32>
    %66 = tpu.matmul %64, %65, %cst_39 {dimension_numbers = #tpu.dot_dimension_numbers<[1], [0], [0], [1], [0, 0, 1, 1], [], []>} : vector<8x128xbf16>, vector<128x512xbf16>, vector<8x512xf32> -> vector<8x512xf32>
    %67 = arith.addf %63, %66 : vector<8x512xf32>
    %68 = vector.extract_strided_slice %67 {offsets = [0, 0], sizes = [8, 384], strides = [1, 1]} : vector<8x512xf32> to vector<8x384xf32>
    %cst_40 = arith.constant 5.000000e-01 : f32
    %69 = vector.broadcast %cst_40 : f32 to vector<8x384xf32>
    %70 = arith.mulf %69, %68 : vector<8x384xf32>
    %71 = math.tanh %70 : vector<8x384xf32>
    %cst_41 = arith.constant 5.000000e-01 : f32
    %72 = vector.broadcast %cst_41 : f32 to vector<8x384xf32>
    %73 = arith.mulf %72, %71 : vector<8x384xf32>
    %cst_42 = arith.constant 5.000000e-01 : f32
    %74 = vector.broadcast %cst_42 : f32 to vector<8x384xf32>
    %75 = arith.addf %73, %74 : vector<8x384xf32>
    %76 = vector.extract_strided_slice %67 {offsets = [0, 384], sizes = [8, 128], strides = [1, 1]} : vector<8x512xf32> to vector<8x128xf32>
    %77 = math.tanh %76 : vector<8x128xf32>
    %78 = vector.extract_strided_slice %75 {offsets = [0, 0], sizes = [8, 128], strides = [1, 1]} : vector<8x384xf32> to vector<8x128xf32>
    %79 = vector.extract_strided_slice %75 {offsets = [0, 128], sizes = [8, 128], strides = [1, 1]} : vector<8x384xf32> to vector<8x128xf32>
    %80 = vector.extract_strided_slice %75 {offsets = [0, 256], sizes = [8, 128], strides = [1, 1]} : vector<8x384xf32> to vector<8x128xf32>
    %81 = arith.mulf %79, %35 : vector<8x128xf32>
    %82 = arith.mulf %78, %77 : vector<8x128xf32>
    %83 = arith.addf %81, %82 : vector<8x128xf32>
    %84 = math.tanh %83 : vector<8x128xf32>
    %85 = arith.mulf %80, %84 : vector<8x128xf32>
    %c8_43 = arith.constant 8 : index
    %c0_44 = arith.constant 0 : index
    %86 = vector.load %arg13[%c8_43, %c0_44] : memref<64x128xf32, #tpu.memory_space<vmem>>, vector<8x128xf32>
    tpu.vector_store %arg13[%c8_43, %c0_44], %85 {strides = array<i32>} : memref<64x128xf32, #tpu.memory_space<vmem>>, vector<8x128xf32>,
    %c48 = arith.constant 48 : index
    %c0_45 = arith.constant 0 : index
    %87 = vector.load %arg12[%c48, %c0_45] : memref<64x512xf32, #tpu.memory_space<vmem>>, vector<8x512xf32>
    %88 = arith.truncf %61 : vector<8x128xf32> to vector<8x128xbf16>
    %c0_46 = arith.constant 0 : index
    %c0_47 = arith.constant 0 : index
    %89 = vector.load %arg6[%c0_46, %c0_47] : memref<128x512xbf16, #tpu.memory_space<vmem>>, vector<128x512xbf16>
    %cst_48 = arith.constant dense<0.000000e+00> : vector<8x512xf32>
    %90 = tpu.matmul %88, %89, %cst_48 {dimension_numbers = #tpu.dot_dimension_numbers<[1], [0], [0], [1], [0, 0, 1, 1], [], []>} : vector<8x128xbf16>, vector<128x512xbf16>, vector<8x512xf32> -> vector<8x512xf32>
    %91 = arith.addf %87, %90 : vector<8x512xf32>
    %92 = vector.extract_strided_slice %91 {offsets = [0, 0], sizes = [8, 384], strides = [1, 1]} : vector<8x512xf32> to vector<8x384xf32>
    %cst_49 = arith.constant 5.000000e-01 : f32
    %93 = vector.broadcast %cst_49 : f32 to vector<8x384xf32>
    %94 = arith.mulf %93, %92 : vector<8x384xf32>
    %95 = math.tanh %94 : vector<8x384xf32>
    %cst_50 = arith.constant 5.000000e-01 : f32
    %96 = vector.broadcast %cst_50 : f32 to vector<8x384xf32>
    %97 = arith.mulf %96, %95 : vector<8x384xf32>
    %cst_51 = arith.constant 5.000000e-01 : f32
    %98 = vector.broadcast %cst_51 : f32 to vector<8x384xf32>
    %99 = arith.addf %97, %98 : vector<8x384xf32>
    %100 = vector.extract_strided_slice %91 {offsets = [0, 384], sizes = [8, 128], strides = [1, 1]} : vector<8x512xf32> to vector<8x128xf32>
    %101 = math.tanh %100 : vector<8x128xf32>
    %102 = vector.extract_strided_slice %99 {offsets = [0, 0], sizes = [8, 128], strides = [1, 1]} : vector<8x384xf32> to vector<8x128xf32>
    %103 = vector.extract_strided_slice %99 {offsets = [0, 128], sizes = [8, 128], strides = [1, 1]} : vector<8x384xf32> to vector<8x128xf32>
    %104 = vector.extract_strided_slice %99 {offsets = [0, 256], sizes = [8, 128], strides = [1, 1]} : vector<8x384xf32> to vector<8x128xf32>
    %105 = arith.mulf %103, %59 : vector<8x128xf32>
    %106 = arith.mulf %102, %101 : vector<8x128xf32>
    %107 = arith.addf %105, %106 : vector<8x128xf32>
    %108 = math.tanh %107 : vector<8x128xf32>
    %109 = arith.mulf %104, %108 : vector<8x128xf32>
    %c48_52 = arith.constant 48 : index
    %c0_53 = arith.constant 0 : index
    %110 = vector.load %arg14[%c48_52, %c0_53] : memref<64x128xf32, #tpu.memory_space<vmem>>, vector<8x128xf32>
    tpu.vector_store %arg14[%c48_52, %c0_53], %109 {strides = array<i32>} : memref<64x128xf32, #tpu.memory_space<vmem>>, vector<8x128xf32>,
    %c16 = arith.constant 16 : index
    %c0_54 = arith.constant 0 : index
    %111 = vector.load %arg11[%c16, %c0_54] : memref<64x512xf32, #tpu.memory_space<vmem>>, vector<8x512xf32>
    %112 = arith.truncf %85 : vector<8x128xf32> to vector<8x128xbf16>
    %c0_55 = arith.constant 0 : index
    %c0_56 = arith.constant 0 : index
    %113 = vector.load %arg5[%c0_55, %c0_56] : memref<128x512xbf16, #tpu.memory_space<vmem>>, vector<128x512xbf16>
    %cst_57 = arith.constant dense<0.000000e+00> : vector<8x512xf32>
    %114 = tpu.matmul %112, %113, %cst_57 {dimension_numbers = #tpu.dot_dimension_numbers<[1], [0], [0], [1], [0, 0, 1, 1], [], []>} : vector<8x128xbf16>, vector<128x512xbf16>, vector<8x512xf32> -> vector<8x512xf32>
    %115 = arith.addf %111, %114 : vector<8x512xf32>
    %116 = vector.extract_strided_slice %115 {offsets = [0, 0], sizes = [8, 384], strides = [1, 1]} : vector<8x512xf32> to vector<8x384xf32>
    %cst_58 = arith.constant 5.000000e-01 : f32
    %117 = vector.broadcast %cst_58 : f32 to vector<8x384xf32>
    %118 = arith.mulf %117, %116 : vector<8x384xf32>
    %119 = math.tanh %118 : vector<8x384xf32>
    %cst_59 = arith.constant 5.000000e-01 : f32
    %120 = vector.broadcast %cst_59 : f32 to vector<8x384xf32>
    %121 = arith.mulf %120, %119 : vector<8x384xf32>
    %cst_60 = arith.constant 5.000000e-01 : f32
    %122 = vector.broadcast %cst_60 : f32 to vector<8x384xf32>
    %123 = arith.addf %121, %122 : vector<8x384xf32>
    %124 = vector.extract_strided_slice %115 {offsets = [0, 384], sizes = [8, 128], strides = [1, 1]} : vector<8x512xf32> to vector<8x128xf32>
    %125 = math.tanh %124 : vector<8x128xf32>
    %126 = vector.extract_strided_slice %123 {offsets = [0, 0], sizes = [8, 128], strides = [1, 1]} : vector<8x384xf32> to vector<8x128xf32>
    %127 = vector.extract_strided_slice %123 {offsets = [0, 128], sizes = [8, 128], strides = [1, 1]} : vector<8x384xf32> to vector<8x128xf32>
    %128 = vector.extract_strided_slice %123 {offsets = [0, 256], sizes = [8, 128], strides = [1, 1]} : vector<8x384xf32> to vector<8x128xf32>
    %129 = arith.mulf %127, %83 : vector<8x128xf32>
    %130 = arith.mulf %126, %125 : vector<8x128xf32>
    %131 = arith.addf %129, %130 : vector<8x128xf32>
    %132 = math.tanh %131 : vector<8x128xf32>
    %133 = arith.mulf %128, %132 : vector<8x128xf32>
    %c16_61 = arith.constant 16 : index
    %c0_62 = arith.constant 0 : index
    %134 = vector.load %arg13[%c16_61, %c0_62] : memref<64x128xf32, #tpu.memory_space<vmem>>, vector<8x128xf32>
    tpu.vector_store %arg13[%c16_61, %c0_62], %133 {strides = array<i32>} : memref<64x128xf32, #tpu.memory_space<vmem>>, vector<8x128xf32>,
    %c40 = arith.constant 40 : index
    %c0_63 = arith.constant 0 : index
    %135 = vector.load %arg12[%c40, %c0_63] : memref<64x512xf32, #tpu.memory_space<vmem>>, vector<8x512xf32>
    %136 = arith.truncf %109 : vector<8x128xf32> to vector<8x128xbf16>
    %c0_64 = arith.constant 0 : index
    %c0_65 = arith.constant 0 : index
    %137 = vector.load %arg6[%c0_64, %c0_65] : memref<128x512xbf16, #tpu.memory_space<vmem>>, vector<128x512xbf16>
    %cst_66 = arith.constant dense<0.000000e+00> : vector<8x512xf32>
    %138 = tpu.matmul %136, %137, %cst_66 {dimension_numbers = #tpu.dot_dimension_numbers<[1], [0], [0], [1], [0, 0, 1, 1], [], []>} : vector<8x128xbf16>, vector<128x512xbf16>, vector<8x512xf32> -> vector<8x512xf32>
    %139 = arith.addf %135, %138 : vector<8x512xf32>
    %140 = vector.extract_strided_slice %139 {offsets = [0, 0], sizes = [8, 384], strides = [1, 1]} : vector<8x512xf32> to vector<8x384xf32>
    %cst_67 = arith.constant 5.000000e-01 : f32
    %141 = vector.broadcast %cst_67 : f32 to vector<8x384xf32>
    %142 = arith.mulf %141, %140 : vector<8x384xf32>
    %143 = math.tanh %142 : vector<8x384xf32>
    %cst_68 = arith.constant 5.000000e-01 : f32
    %144 = vector.broadcast %cst_68 : f32 to vector<8x384xf32>
    %145 = arith.mulf %144, %143 : vector<8x384xf32>
    %cst_69 = arith.constant 5.000000e-01 : f32
    %146 = vector.broadcast %cst_69 : f32 to vector<8x384xf32>
    %147 = arith.addf %145, %146 : vector<8x384xf32>
    %148 = vector.extract_strided_slice %139 {offsets = [0, 384], sizes = [8, 128], strides = [1, 1]} : vector<8x512xf32> to vector<8x128xf32>
    %149 = math.tanh %148 : vector<8x128xf32>
    %150 = vector.extract_strided_slice %147 {offsets = [0, 0], sizes = [8, 128], strides = [1, 1]} : vector<8x384xf32> to vector<8x128xf32>
    %151 = vector.extract_strided_slice %147 {offsets = [0, 128], sizes = [8, 128], strides = [1, 1]} : vector<8x384xf32> to vector<8x128xf32>
    %152 = vector.extract_strided_slice %147 {offsets = [0, 256], sizes = [8, 128], strides = [1, 1]} : vector<8x384xf32> to vector<8x128xf32>
    %153 = arith.mulf %151, %107 : vector<8x128xf32>
    %154 = arith.mulf %150, %149 : vector<8x128xf32>
    %155 = arith.addf %153, %154 : vector<8x128xf32>
    %156 = math.tanh %155 : vector<8x128xf32>
    %157 = arith.mulf %152, %156 : vector<8x128xf32>
    %c40_70 = arith.constant 40 : index
    %c0_71 = arith.constant 0 : index
    %158 = vector.load %arg14[%c40_70, %c0_71] : memref<64x128xf32, #tpu.memory_space<vmem>>, vector<8x128xf32>
    tpu.vector_store %arg14[%c40_70, %c0_71], %157 {strides = array<i32>} : memref<64x128xf32, #tpu.memory_space<vmem>>, vector<8x128xf32>,
    %c24 = arith.constant 24 : index
    %c0_72 = arith.constant 0 : index
    %159 = vector.load %arg11[%c24, %c0_72] : memref<64x512xf32, #tpu.memory_space<vmem>>, vector<8x512xf32>
    %160 = arith.truncf %133 : vector<8x128xf32> to vector<8x128xbf16>
    %c0_73 = arith.constant 0 : index
    %c0_74 = arith.constant 0 : index
    %161 = vector.load %arg5[%c0_73, %c0_74] : memref<128x512xbf16, #tpu.memory_space<vmem>>, vector<128x512xbf16>
    %cst_75 = arith.constant dense<0.000000e+00> : vector<8x512xf32>
    %162 = tpu.matmul %160, %161, %cst_75 {dimension_numbers = #tpu.dot_dimension_numbers<[1], [0], [0], [1], [0, 0, 1, 1], [], []>} : vector<8x128xbf16>, vector<128x512xbf16>, vector<8x512xf32> -> vector<8x512xf32>
    %163 = arith.addf %159, %162 : vector<8x512xf32>
    %164 = vector.extract_strided_slice %163 {offsets = [0, 0], sizes = [8, 384], strides = [1, 1]} : vector<8x512xf32> to vector<8x384xf32>
    %cst_76 = arith.constant 5.000000e-01 : f32
    %165 = vector.broadcast %cst_76 : f32 to vector<8x384xf32>
    %166 = arith.mulf %165, %164 : vector<8x384xf32>
    %167 = math.tanh %166 : vector<8x384xf32>
    %cst_77 = arith.constant 5.000000e-01 : f32
    %168 = vector.broadcast %cst_77 : f32 to vector<8x384xf32>
    %169 = arith.mulf %168, %167 : vector<8x384xf32>
    %cst_78 = arith.constant 5.000000e-01 : f32
    %170 = vector.broadcast %cst_78 : f32 to vector<8x384xf32>
    %171 = arith.addf %169, %170 : vector<8x384xf32>
    %172 = vector.extract_strided_slice %163 {offsets = [0, 384], sizes = [8, 128], strides = [1, 1]} : vector<8x512xf32> to vector<8x128xf32>
    %173 = math.tanh %172 : vector<8x128xf32>
    %174 = vector.extract_strided_slice %171 {offsets = [0, 0], sizes = [8, 128], strides = [1, 1]} : vector<8x384xf32> to vector<8x128xf32>
    %175 = vector.extract_strided_slice %171 {offsets = [0, 128], sizes = [8, 128], strides = [1, 1]} : vector<8x384xf32> to vector<8x128xf32>
    %176 = vector.extract_strided_slice %171 {offsets = [0, 256], sizes = [8, 128], strides = [1, 1]} : vector<8x384xf32> to vector<8x128xf32>
    %177 = arith.mulf %175, %131 : vector<8x128xf32>
    %178 = arith.mulf %174, %173 : vector<8x128xf32>
    %179 = arith.addf %177, %178 : vector<8x128xf32>
    %180 = math.tanh %179 : vector<8x128xf32>
    %181 = arith.mulf %176, %180 : vector<8x128xf32>
    %c24_79 = arith.constant 24 : index
    %c0_80 = arith.constant 0 : index
    %182 = vector.load %arg13[%c24_79, %c0_80] : memref<64x128xf32, #tpu.memory_space<vmem>>, vector<8x128xf32>
    tpu.vector_store %arg13[%c24_79, %c0_80], %181 {strides = array<i32>} : memref<64x128xf32, #tpu.memory_space<vmem>>, vector<8x128xf32>,
    %c32 = arith.constant 32 : index
    %c0_81 = arith.constant 0 : index
    %183 = vector.load %arg12[%c32, %c0_81] : memref<64x512xf32, #tpu.memory_space<vmem>>, vector<8x512xf32>
    %184 = arith.truncf %157 : vector<8x128xf32> to vector<8x128xbf16>
    %c0_82 = arith.constant 0 : index
    %c0_83 = arith.constant 0 : index
    %185 = vector.load %arg6[%c0_82, %c0_83] : memref<128x512xbf16, #tpu.memory_space<vmem>>, vector<128x512xbf16>
    %cst_84 = arith.constant dense<0.000000e+00> : vector<8x512xf32>
    %186 = tpu.matmul %184, %185, %cst_84 {dimension_numbers = #tpu.dot_dimension_numbers<[1], [0], [0], [1], [0, 0, 1, 1], [], []>} : vector<8x128xbf16>, vector<128x512xbf16>, vector<8x512xf32> -> vector<8x512xf32>
    %187 = arith.addf %183, %186 : vector<8x512xf32>
    %188 = vector.extract_strided_slice %187 {offsets = [0, 0], sizes = [8, 384], strides = [1, 1]} : vector<8x512xf32> to vector<8x384xf32>
    %cst_85 = arith.constant 5.000000e-01 : f32
    %189 = vector.broadcast %cst_85 : f32 to vector<8x384xf32>
    %190 = arith.mulf %189, %188 : vector<8x384xf32>
    %191 = math.tanh %190 : vector<8x384xf32>
    %cst_86 = arith.constant 5.000000e-01 : f32
    %192 = vector.broadcast %cst_86 : f32 to vector<8x384xf32>
    %193 = arith.mulf %192, %191 : vector<8x384xf32>
    %cst_87 = arith.constant 5.000000e-01 : f32
    %194 = vector.broadcast %cst_87 : f32 to vector<8x384xf32>
    %195 = arith.addf %193, %194 : vector<8x384xf32>
    %196 = vector.extract_strided_slice %187 {offsets = [0, 384], sizes = [8, 128], strides = [1, 1]} : vector<8x512xf32> to vector<8x128xf32>
    %197 = math.tanh %196 : vector<8x128xf32>
    %198 = vector.extract_strided_slice %195 {offsets = [0, 0], sizes = [8, 128], strides = [1, 1]} : vector<8x384xf32> to vector<8x128xf32>
    %199 = vector.extract_strided_slice %195 {offsets = [0, 128], sizes = [8, 128], strides = [1, 1]} : vector<8x384xf32> to vector<8x128xf32>
    %200 = vector.extract_strided_slice %195 {offsets = [0, 256], sizes = [8, 128], strides = [1, 1]} : vector<8x384xf32> to vector<8x128xf32>
    %201 = arith.mulf %199, %155 : vector<8x128xf32>
    %202 = arith.mulf %198, %197 : vector<8x128xf32>
    %203 = arith.addf %201, %202 : vector<8x128xf32>
    %204 = math.tanh %203 : vector<8x128xf32>
    %205 = arith.mulf %200, %204 : vector<8x128xf32>
    %c32_88 = arith.constant 32 : index
    %c0_89 = arith.constant 0 : index
    %206 = vector.load %arg14[%c32_88, %c0_89] : memref<64x128xf32, #tpu.memory_space<vmem>>, vector<8x128xf32>
    tpu.vector_store %arg14[%c32_88, %c0_89], %205 {strides = array<i32>} : memref<64x128xf32, #tpu.memory_space<vmem>>, vector<8x128xf32>,
    %c32_90 = arith.constant 32 : index
    %c0_91 = arith.constant 0 : index
    %207 = vector.load %arg11[%c32_90, %c0_91] : memref<64x512xf32, #tpu.memory_space<vmem>>, vector<8x512xf32>
    %208 = arith.truncf %181 : vector<8x128xf32> to vector<8x128xbf16>
    %c0_92 = arith.constant 0 : index
    %c0_93 = arith.constant 0 : index
    %209 = vector.load %arg5[%c0_92, %c0_93] : memref<128x512xbf16, #tpu.memory_space<vmem>>, vector<128x512xbf16>
    %cst_94 = arith.constant dense<0.000000e+00> : vector<8x512xf32>
    %210 = tpu.matmul %208, %209, %cst_94 {dimension_numbers = #tpu.dot_dimension_numbers<[1], [0], [0], [1], [0, 0, 1, 1], [], []>} : vector<8x128xbf16>, vector<128x512xbf16>, vector<8x512xf32> -> vector<8x512xf32>
    %211 = arith.addf %207, %210 : vector<8x512xf32>
    %212 = vector.extract_strided_slice %211 {offsets = [0, 0], sizes = [8, 384], strides = [1, 1]} : vector<8x512xf32> to vector<8x384xf32>
    %cst_95 = arith.constant 5.000000e-01 : f32
    %213 = vector.broadcast %cst_95 : f32 to vector<8x384xf32>
    %214 = arith.mulf %213, %212 : vector<8x384xf32>
    %215 = math.tanh %214 : vector<8x384xf32>
    %cst_96 = arith.constant 5.000000e-01 : f32
    %216 = vector.broadcast %cst_96 : f32 to vector<8x384xf32>
    %217 = arith.mulf %216, %215 : vector<8x384xf32>
    %cst_97 = arith.constant 5.000000e-01 : f32
    %218 = vector.broadcast %cst_97 : f32 to vector<8x384xf32>
    %219 = arith.addf %217, %218 : vector<8x384xf32>
    %220 = vector.extract_strided_slice %211 {offsets = [0, 384], sizes = [8, 128], strides = [1, 1]} : vector<8x512xf32> to vector<8x128xf32>
    %221 = math.tanh %220 : vector<8x128xf32>
    %222 = vector.extract_strided_slice %219 {offsets = [0, 0], sizes = [8, 128], strides = [1, 1]} : vector<8x384xf32> to vector<8x128xf32>
    %223 = vector.extract_strided_slice %219 {offsets = [0, 128], sizes = [8, 128], strides = [1, 1]} : vector<8x384xf32> to vector<8x128xf32>
    %224 = vector.extract_strided_slice %219 {offsets = [0, 256], sizes = [8, 128], strides = [1, 1]} : vector<8x384xf32> to vector<8x128xf32>
    %225 = arith.mulf %223, %179 : vector<8x128xf32>
    %226 = arith.mulf %222, %221 : vector<8x128xf32>
    %227 = arith.addf %225, %226 : vector<8x128xf32>
    %228 = math.tanh %227 : vector<8x128xf32>
    %229 = arith.mulf %224, %228 : vector<8x128xf32>
    %c32_98 = arith.constant 32 : index
    %c0_99 = arith.constant 0 : index
    %230 = vector.load %arg13[%c32_98, %c0_99] : memref<64x128xf32, #tpu.memory_space<vmem>>, vector<8x128xf32>
    tpu.vector_store %arg13[%c32_98, %c0_99], %229 {strides = array<i32>} : memref<64x128xf32, #tpu.memory_space<vmem>>, vector<8x128xf32>,
    %c24_100 = arith.constant 24 : index
    %c0_101 = arith.constant 0 : index
    %231 = vector.load %arg12[%c24_100, %c0_101] : memref<64x512xf32, #tpu.memory_space<vmem>>, vector<8x512xf32>
    %232 = arith.truncf %205 : vector<8x128xf32> to vector<8x128xbf16>
    %c0_102 = arith.constant 0 : index
    %c0_103 = arith.constant 0 : index
    %233 = vector.load %arg6[%c0_102, %c0_103] : memref<128x512xbf16, #tpu.memory_space<vmem>>, vector<128x512xbf16>
    %cst_104 = arith.constant dense<0.000000e+00> : vector<8x512xf32>
    %234 = tpu.matmul %232, %233, %cst_104 {dimension_numbers = #tpu.dot_dimension_numbers<[1], [0], [0], [1], [0, 0, 1, 1], [], []>} : vector<8x128xbf16>, vector<128x512xbf16>, vector<8x512xf32> -> vector<8x512xf32>
    %235 = arith.addf %231, %234 : vector<8x512xf32>
    %236 = vector.extract_strided_slice %235 {offsets = [0, 0], sizes = [8, 384], strides = [1, 1]} : vector<8x512xf32> to vector<8x384xf32>
    %cst_105 = arith.constant 5.000000e-01 : f32
    %237 = vector.broadcast %cst_105 : f32 to vector<8x384xf32>
    %238 = arith.mulf %237, %236 : vector<8x384xf32>
    %239 = math.tanh %238 : vector<8x384xf32>
    %cst_106 = arith.constant 5.000000e-01 : f32
    %240 = vector.broadcast %cst_106 : f32 to vector<8x384xf32>
    %241 = arith.mulf %240, %239 : vector<8x384xf32>
    %cst_107 = arith.constant 5.000000e-01 : f32
    %242 = vector.broadcast %cst_107 : f32 to vector<8x384xf32>
    %243 = arith.addf %241, %242 : vector<8x384xf32>
    %244 = vector.extract_strided_slice %235 {offsets = [0, 384], sizes = [8, 128], strides = [1, 1]} : vector<8x512xf32> to vector<8x128xf32>
    %245 = math.tanh %244 : vector<8x128xf32>
    %246 = vector.extract_strided_slice %243 {offsets = [0, 0], sizes = [8, 128], strides = [1, 1]} : vector<8x384xf32> to vector<8x128xf32>
    %247 = vector.extract_strided_slice %243 {offsets = [0, 128], sizes = [8, 128], strides = [1, 1]} : vector<8x384xf32> to vector<8x128xf32>
    %248 = vector.extract_strided_slice %243 {offsets = [0, 256], sizes = [8, 128], strides = [1, 1]} : vector<8x384xf32> to vector<8x128xf32>
    %249 = arith.mulf %247, %203 : vector<8x128xf32>
    %250 = arith.mulf %246, %245 : vector<8x128xf32>
    %251 = arith.addf %249, %250 : vector<8x128xf32>
    %252 = math.tanh %251 : vector<8x128xf32>
    %253 = arith.mulf %248, %252 : vector<8x128xf32>
    %c24_108 = arith.constant 24 : index
    %c0_109 = arith.constant 0 : index
    %254 = vector.load %arg14[%c24_108, %c0_109] : memref<64x128xf32, #tpu.memory_space<vmem>>, vector<8x128xf32>
    tpu.vector_store %arg14[%c24_108, %c0_109], %253 {strides = array<i32>} : memref<64x128xf32, #tpu.memory_space<vmem>>, vector<8x128xf32>,
    %c40_110 = arith.constant 40 : index
    %c0_111 = arith.constant 0 : index
    %255 = vector.load %arg11[%c40_110, %c0_111] : memref<64x512xf32, #tpu.memory_space<vmem>>, vector<8x512xf32>
    %256 = arith.truncf %229 : vector<8x128xf32> to vector<8x128xbf16>
    %c0_112 = arith.constant 0 : index
    %c0_113 = arith.constant 0 : index
    %257 = vector.load %arg5[%c0_112, %c0_113] : memref<128x512xbf16, #tpu.memory_space<vmem>>, vector<128x512xbf16>
    %cst_114 = arith.constant dense<0.000000e+00> : vector<8x512xf32>
    %258 = tpu.matmul %256, %257, %cst_114 {dimension_numbers = #tpu.dot_dimension_numbers<[1], [0], [0], [1], [0, 0, 1, 1], [], []>} : vector<8x128xbf16>, vector<128x512xbf16>, vector<8x512xf32> -> vector<8x512xf32>
    %259 = arith.addf %255, %258 : vector<8x512xf32>
    %260 = vector.extract_strided_slice %259 {offsets = [0, 0], sizes = [8, 384], strides = [1, 1]} : vector<8x512xf32> to vector<8x384xf32>
    %cst_115 = arith.constant 5.000000e-01 : f32
    %261 = vector.broadcast %cst_115 : f32 to vector<8x384xf32>
    %262 = arith.mulf %261, %260 : vector<8x384xf32>
    %263 = math.tanh %262 : vector<8x384xf32>
    %cst_116 = arith.constant 5.000000e-01 : f32
    %264 = vector.broadcast %cst_116 : f32 to vector<8x384xf32>
    %265 = arith.mulf %264, %263 : vector<8x384xf32>
    %cst_117 = arith.constant 5.000000e-01 : f32
    %266 = vector.broadcast %cst_117 : f32 to vector<8x384xf32>
    %267 = arith.addf %265, %266 : vector<8x384xf32>
    %268 = vector.extract_strided_slice %259 {offsets = [0, 384], sizes = [8, 128], strides = [1, 1]} : vector<8x512xf32> to vector<8x128xf32>
    %269 = math.tanh %268 : vector<8x128xf32>
    %270 = vector.extract_strided_slice %267 {offsets = [0, 0], sizes = [8, 128], strides = [1, 1]} : vector<8x384xf32> to vector<8x128xf32>
    %271 = vector.extract_strided_slice %267 {offsets = [0, 128], sizes = [8, 128], strides = [1, 1]} : vector<8x384xf32> to vector<8x128xf32>
    %272 = vector.extract_strided_slice %267 {offsets = [0, 256], sizes = [8, 128], strides = [1, 1]} : vector<8x384xf32> to vector<8x128xf32>
    %273 = arith.mulf %271, %227 : vector<8x128xf32>
    %274 = arith.mulf %270, %269 : vector<8x128xf32>
    %275 = arith.addf %273, %274 : vector<8x128xf32>
    %276 = math.tanh %275 : vector<8x128xf32>
    %277 = arith.mulf %272, %276 : vector<8x128xf32>
    %c40_118 = arith.constant 40 : index
    %c0_119 = arith.constant 0 : index
    %278 = vector.load %arg13[%c40_118, %c0_119] : memref<64x128xf32, #tpu.memory_space<vmem>>, vector<8x128xf32>
    tpu.vector_store %arg13[%c40_118, %c0_119], %277 {strides = array<i32>} : memref<64x128xf32, #tpu.memory_space<vmem>>, vector<8x128xf32>,
    %c16_120 = arith.constant 16 : index
    %c0_121 = arith.constant 0 : index
    %279 = vector.load %arg12[%c16_120, %c0_121] : memref<64x512xf32, #tpu.memory_space<vmem>>, vector<8x512xf32>
    %280 = arith.truncf %253 : vector<8x128xf32> to vector<8x128xbf16>
    %c0_122 = arith.constant 0 : index
    %c0_123 = arith.constant 0 : index
    %281 = vector.load %arg6[%c0_122, %c0_123] : memref<128x512xbf16, #tpu.memory_space<vmem>>, vector<128x512xbf16>
    %cst_124 = arith.constant dense<0.000000e+00> : vector<8x512xf32>
    %282 = tpu.matmul %280, %281, %cst_124 {dimension_numbers = #tpu.dot_dimension_numbers<[1], [0], [0], [1], [0, 0, 1, 1], [], []>} : vector<8x128xbf16>, vector<128x512xbf16>, vector<8x512xf32> -> vector<8x512xf32>
    %283 = arith.addf %279, %282 : vector<8x512xf32>
    %284 = vector.extract_strided_slice %283 {offsets = [0, 0], sizes = [8, 384], strides = [1, 1]} : vector<8x512xf32> to vector<8x384xf32>
    %cst_125 = arith.constant 5.000000e-01 : f32
    %285 = vector.broadcast %cst_125 : f32 to vector<8x384xf32>
    %286 = arith.mulf %285, %284 : vector<8x384xf32>
    %287 = math.tanh %286 : vector<8x384xf32>
    %cst_126 = arith.constant 5.000000e-01 : f32
    %288 = vector.broadcast %cst_126 : f32 to vector<8x384xf32>
    %289 = arith.mulf %288, %287 : vector<8x384xf32>
    %cst_127 = arith.constant 5.000000e-01 : f32
    %290 = vector.broadcast %cst_127 : f32 to vector<8x384xf32>
    %291 = arith.addf %289, %290 : vector<8x384xf32>
    %292 = vector.extract_strided_slice %283 {offsets = [0, 384], sizes = [8, 128], strides = [1, 1]} : vector<8x512xf32> to vector<8x128xf32>
    %293 = math.tanh %292 : vector<8x128xf32>
    %294 = vector.extract_strided_slice %291 {offsets = [0, 0], sizes = [8, 128], strides = [1, 1]} : vector<8x384xf32> to vector<8x128xf32>
    %295 = vector.extract_strided_slice %291 {offsets = [0, 128], sizes = [8, 128], strides = [1, 1]} : vector<8x384xf32> to vector<8x128xf32>
    %296 = vector.extract_strided_slice %291 {offsets = [0, 256], sizes = [8, 128], strides = [1, 1]} : vector<8x384xf32> to vector<8x128xf32>
    %297 = arith.mulf %295, %251 : vector<8x128xf32>
    %298 = arith.mulf %294, %293 : vector<8x128xf32>
    %299 = arith.addf %297, %298 : vector<8x128xf32>
    %300 = math.tanh %299 : vector<8x128xf32>
    %301 = arith.mulf %296, %300 : vector<8x128xf32>
    %c16_128 = arith.constant 16 : index
    %c0_129 = arith.constant 0 : index
    %302 = vector.load %arg14[%c16_128, %c0_129] : memref<64x128xf32, #tpu.memory_space<vmem>>, vector<8x128xf32>
    tpu.vector_store %arg14[%c16_128, %c0_129], %301 {strides = array<i32>} : memref<64x128xf32, #tpu.memory_space<vmem>>, vector<8x128xf32>,
    %c48_130 = arith.constant 48 : index
    %c0_131 = arith.constant 0 : index
    %303 = vector.load %arg11[%c48_130, %c0_131] : memref<64x512xf32, #tpu.memory_space<vmem>>, vector<8x512xf32>
    %304 = arith.truncf %277 : vector<8x128xf32> to vector<8x128xbf16>
    %c0_132 = arith.constant 0 : index
    %c0_133 = arith.constant 0 : index
    %305 = vector.load %arg5[%c0_132, %c0_133] : memref<128x512xbf16, #tpu.memory_space<vmem>>, vector<128x512xbf16>
    %cst_134 = arith.constant dense<0.000000e+00> : vector<8x512xf32>
    %306 = tpu.matmul %304, %305, %cst_134 {dimension_numbers = #tpu.dot_dimension_numbers<[1], [0], [0], [1], [0, 0, 1, 1], [], []>} : vector<8x128xbf16>, vector<128x512xbf16>, vector<8x512xf32> -> vector<8x512xf32>
    %307 = arith.addf %303, %306 : vector<8x512xf32>
    %308 = vector.extract_strided_slice %307 {offsets = [0, 0], sizes = [8, 384], strides = [1, 1]} : vector<8x512xf32> to vector<8x384xf32>
    %cst_135 = arith.constant 5.000000e-01 : f32
    %309 = vector.broadcast %cst_135 : f32 to vector<8x384xf32>
    %310 = arith.mulf %309, %308 : vector<8x384xf32>
    %311 = math.tanh %310 : vector<8x384xf32>
    %cst_136 = arith.constant 5.000000e-01 : f32
    %312 = vector.broadcast %cst_136 : f32 to vector<8x384xf32>
    %313 = arith.mulf %312, %311 : vector<8x384xf32>
    %cst_137 = arith.constant 5.000000e-01 : f32
    %314 = vector.broadcast %cst_137 : f32 to vector<8x384xf32>
    %315 = arith.addf %313, %314 : vector<8x384xf32>
    %316 = vector.extract_strided_slice %307 {offsets = [0, 384], sizes = [8, 128], strides = [1, 1]} : vector<8x512xf32> to vector<8x128xf32>
    %317 = math.tanh %316 : vector<8x128xf32>
    %318 = vector.extract_strided_slice %315 {offsets = [0, 0], sizes = [8, 128], strides = [1, 1]} : vector<8x384xf32> to vector<8x128xf32>
    %319 = vector.extract_strided_slice %315 {offsets = [0, 128], sizes = [8, 128], strides = [1, 1]} : vector<8x384xf32> to vector<8x128xf32>
    %320 = vector.extract_strided_slice %315 {offsets = [0, 256], sizes = [8, 128], strides = [1, 1]} : vector<8x384xf32> to vector<8x128xf32>
    %321 = arith.mulf %319, %275 : vector<8x128xf32>
    %322 = arith.mulf %318, %317 : vector<8x128xf32>
    %323 = arith.addf %321, %322 : vector<8x128xf32>
    %324 = math.tanh %323 : vector<8x128xf32>
    %325 = arith.mulf %320, %324 : vector<8x128xf32>
    %c48_138 = arith.constant 48 : index
    %c0_139 = arith.constant 0 : index
    %326 = vector.load %arg13[%c48_138, %c0_139] : memref<64x128xf32, #tpu.memory_space<vmem>>, vector<8x128xf32>
    tpu.vector_store %arg13[%c48_138, %c0_139], %325 {strides = array<i32>} : memref<64x128xf32, #tpu.memory_space<vmem>>, vector<8x128xf32>,
    %c8_140 = arith.constant 8 : index
    %c0_141 = arith.constant 0 : index
    %327 = vector.load %arg12[%c8_140, %c0_141] : memref<64x512xf32, #tpu.memory_space<vmem>>, vector<8x512xf32>
    %328 = arith.truncf %301 : vector<8x128xf32> to vector<8x128xbf16>
    %c0_142 = arith.constant 0 : index
    %c0_143 = arith.constant 0 : index
    %329 = vector.load %arg6[%c0_142, %c0_143] : memref<128x512xbf16, #tpu.memory_space<vmem>>, vector<128x512xbf16>
    %cst_144 = arith.constant dense<0.000000e+00> : vector<8x512xf32>
    %330 = tpu.matmul %328, %329, %cst_144 {dimension_numbers = #tpu.dot_dimension_numbers<[1], [0], [0], [1], [0, 0, 1, 1], [], []>} : vector<8x128xbf16>, vector<128x512xbf16>, vector<8x512xf32> -> vector<8x512xf32>
    %331 = arith.addf %327, %330 : vector<8x512xf32>
    %332 = vector.extract_strided_slice %331 {offsets = [0, 0], sizes = [8, 384], strides = [1, 1]} : vector<8x512xf32> to vector<8x384xf32>
    %cst_145 = arith.constant 5.000000e-01 : f32
    %333 = vector.broadcast %cst_145 : f32 to vector<8x384xf32>
    %334 = arith.mulf %333, %332 : vector<8x384xf32>
    %335 = math.tanh %334 : vector<8x384xf32>
    %cst_146 = arith.constant 5.000000e-01 : f32
    %336 = vector.broadcast %cst_146 : f32 to vector<8x384xf32>
    %337 = arith.mulf %336, %335 : vector<8x384xf32>
    %cst_147 = arith.constant 5.000000e-01 : f32
    %338 = vector.broadcast %cst_147 : f32 to vector<8x384xf32>
    %339 = arith.addf %337, %338 : vector<8x384xf32>
    %340 = vector.extract_strided_slice %331 {offsets = [0, 384], sizes = [8, 128], strides = [1, 1]} : vector<8x512xf32> to vector<8x128xf32>
    %341 = math.tanh %340 : vector<8x128xf32>
    %342 = vector.extract_strided_slice %339 {offsets = [0, 0], sizes = [8, 128], strides = [1, 1]} : vector<8x384xf32> to vector<8x128xf32>
    %343 = vector.extract_strided_slice %339 {offsets = [0, 128], sizes = [8, 128], strides = [1, 1]} : vector<8x384xf32> to vector<8x128xf32>
    %344 = vector.extract_strided_slice %339 {offsets = [0, 256], sizes = [8, 128], strides = [1, 1]} : vector<8x384xf32> to vector<8x128xf32>
    %345 = arith.mulf %343, %299 : vector<8x128xf32>
    %346 = arith.mulf %342, %341 : vector<8x128xf32>
    %347 = arith.addf %345, %346 : vector<8x128xf32>
    %348 = math.tanh %347 : vector<8x128xf32>
    %349 = arith.mulf %344, %348 : vector<8x128xf32>
    %c8_148 = arith.constant 8 : index
    %c0_149 = arith.constant 0 : index
    %350 = vector.load %arg14[%c8_148, %c0_149] : memref<64x128xf32, #tpu.memory_space<vmem>>, vector<8x128xf32>
    tpu.vector_store %arg14[%c8_148, %c0_149], %349 {strides = array<i32>} : memref<64x128xf32, #tpu.memory_space<vmem>>, vector<8x128xf32>,
    %c56_150 = arith.constant 56 : index
    %c0_151 = arith.constant 0 : index
    %351 = vector.load %arg11[%c56_150, %c0_151] : memref<64x512xf32, #tpu.memory_space<vmem>>, vector<8x512xf32>
    %352 = arith.truncf %325 : vector<8x128xf32> to vector<8x128xbf16>
    %c0_152 = arith.constant 0 : index
    %c0_153 = arith.constant 0 : index
    %353 = vector.load %arg5[%c0_152, %c0_153] : memref<128x512xbf16, #tpu.memory_space<vmem>>, vector<128x512xbf16>
    %cst_154 = arith.constant dense<0.000000e+00> : vector<8x512xf32>
    %354 = tpu.matmul %352, %353, %cst_154 {dimension_numbers = #tpu.dot_dimension_numbers<[1], [0], [0], [1], [0, 0, 1, 1], [], []>} : vector<8x128xbf16>, vector<128x512xbf16>, vector<8x512xf32> -> vector<8x512xf32>
    %355 = arith.addf %351, %354 : vector<8x512xf32>
    %356 = vector.extract_strided_slice %355 {offsets = [0, 0], sizes = [8, 384], strides = [1, 1]} : vector<8x512xf32> to vector<8x384xf32>
    %cst_155 = arith.constant 5.000000e-01 : f32
    %357 = vector.broadcast %cst_155 : f32 to vector<8x384xf32>
    %358 = arith.mulf %357, %356 : vector<8x384xf32>
    %359 = math.tanh %358 : vector<8x384xf32>
    %cst_156 = arith.constant 5.000000e-01 : f32
    %360 = vector.broadcast %cst_156 : f32 to vector<8x384xf32>
    %361 = arith.mulf %360, %359 : vector<8x384xf32>
    %cst_157 = arith.constant 5.000000e-01 : f32
    %362 = vector.broadcast %cst_157 : f32 to vector<8x384xf32>
    %363 = arith.addf %361, %362 : vector<8x384xf32>
    %364 = vector.extract_strided_slice %355 {offsets = [0, 384], sizes = [8, 128], strides = [1, 1]} : vector<8x512xf32> to vector<8x128xf32>
    %365 = math.tanh %364 : vector<8x128xf32>
    %366 = vector.extract_strided_slice %363 {offsets = [0, 0], sizes = [8, 128], strides = [1, 1]} : vector<8x384xf32> to vector<8x128xf32>
    %367 = vector.extract_strided_slice %363 {offsets = [0, 128], sizes = [8, 128], strides = [1, 1]} : vector<8x384xf32> to vector<8x128xf32>
    %368 = vector.extract_strided_slice %363 {offsets = [0, 256], sizes = [8, 128], strides = [1, 1]} : vector<8x384xf32> to vector<8x128xf32>
    %369 = arith.mulf %367, %323 : vector<8x128xf32>
    %370 = arith.mulf %366, %365 : vector<8x128xf32>
    %371 = arith.addf %369, %370 : vector<8x128xf32>
    %372 = math.tanh %371 : vector<8x128xf32>
    %373 = arith.mulf %368, %372 : vector<8x128xf32>
    %c56_158 = arith.constant 56 : index
    %c0_159 = arith.constant 0 : index
    %374 = vector.load %arg13[%c56_158, %c0_159] : memref<64x128xf32, #tpu.memory_space<vmem>>, vector<8x128xf32>
    tpu.vector_store %arg13[%c56_158, %c0_159], %373 {strides = array<i32>} : memref<64x128xf32, #tpu.memory_space<vmem>>, vector<8x128xf32>,
    %c0_160 = arith.constant 0 : index
    %c0_161 = arith.constant 0 : index
    %375 = vector.load %arg12[%c0_160, %c0_161] : memref<64x512xf32, #tpu.memory_space<vmem>>, vector<8x512xf32>
    %376 = arith.truncf %349 : vector<8x128xf32> to vector<8x128xbf16>
    %c0_162 = arith.constant 0 : index
    %c0_163 = arith.constant 0 : index
    %377 = vector.load %arg6[%c0_162, %c0_163] : memref<128x512xbf16, #tpu.memory_space<vmem>>, vector<128x512xbf16>
    %cst_164 = arith.constant dense<0.000000e+00> : vector<8x512xf32>
    %378 = tpu.matmul %376, %377, %cst_164 {dimension_numbers = #tpu.dot_dimension_numbers<[1], [0], [0], [1], [0, 0, 1, 1], [], []>} : vector<8x128xbf16>, vector<128x512xbf16>, vector<8x512xf32> -> vector<8x512xf32>
    %379 = arith.addf %375, %378 : vector<8x512xf32>
    %380 = vector.extract_strided_slice %379 {offsets = [0, 0], sizes = [8, 384], strides = [1, 1]} : vector<8x512xf32> to vector<8x384xf32>
    %cst_165 = arith.constant 5.000000e-01 : f32
    %381 = vector.broadcast %cst_165 : f32 to vector<8x384xf32>
    %382 = arith.mulf %381, %380 : vector<8x384xf32>
    %383 = math.tanh %382 : vector<8x384xf32>
    %cst_166 = arith.constant 5.000000e-01 : f32
    %384 = vector.broadcast %cst_166 : f32 to vector<8x384xf32>
    %385 = arith.mulf %384, %383 : vector<8x384xf32>
    %cst_167 = arith.constant 5.000000e-01 : f32
    %386 = vector.broadcast %cst_167 : f32 to vector<8x384xf32>
    %387 = arith.addf %385, %386 : vector<8x384xf32>
    %388 = vector.extract_strided_slice %379 {offsets = [0, 384], sizes = [8, 128], strides = [1, 1]} : vector<8x512xf32> to vector<8x128xf32>
    %389 = math.tanh %388 : vector<8x128xf32>
    %390 = vector.extract_strided_slice %387 {offsets = [0, 0], sizes = [8, 128], strides = [1, 1]} : vector<8x384xf32> to vector<8x128xf32>
    %391 = vector.extract_strided_slice %387 {offsets = [0, 128], sizes = [8, 128], strides = [1, 1]} : vector<8x384xf32> to vector<8x128xf32>
    %392 = vector.extract_strided_slice %387 {offsets = [0, 256], sizes = [8, 128], strides = [1, 1]} : vector<8x384xf32> to vector<8x128xf32>
    %393 = arith.mulf %391, %347 : vector<8x128xf32>
    %394 = arith.mulf %390, %389 : vector<8x128xf32>
    %395 = arith.addf %393, %394 : vector<8x128xf32>
    %396 = math.tanh %395 : vector<8x128xf32>
    %397 = arith.mulf %392, %396 : vector<8x128xf32>
    %c0_168 = arith.constant 0 : index
    %c0_169 = arith.constant 0 : index
    %398 = vector.load %arg14[%c0_168, %c0_169] : memref<64x128xf32, #tpu.memory_space<vmem>>, vector<8x128xf32>
    tpu.vector_store %arg14[%c0_168, %c0_169], %397 {strides = array<i32>} : memref<64x128xf32, #tpu.memory_space<vmem>>, vector<8x128xf32>,
    %c0_170 = arith.constant 0 : index
    %c0_171 = arith.constant 0 : index
    %399 = vector.load %arg13[%c0_170, %c0_171] : memref<64x128xf32, #tpu.memory_space<vmem>>, vector<64x128xf32>
    %c0_172 = arith.constant 0 : index
    %c0_173 = arith.constant 0 : index
    %400 = vector.load %arg7[%c0_172, %c0_173] : memref<128x128xbf16, #tpu.memory_space<vmem>>, vector<128x128xbf16>
    %cst_174 = arith.constant dense<0.000000e+00> : vector<64x128xf32>
    %401 = tpu.matmul %399, %400, %cst_174 {dimension_numbers = #tpu.dot_dimension_numbers<[1], [0], [0], [1], [0, 0, 1, 1], [], []>} : vector<64x128xf32>, vector<128x128xbf16>, vector<64x128xf32> -> vector<64x128xf32>
    %c0_175 = arith.constant 0 : index
    %c0_176 = arith.constant 0 : index
    %402 = vector.load %arg14[%c0_175, %c0_176] : memref<64x128xf32, #tpu.memory_space<vmem>>, vector<64x128xf32>
    %c0_177 = arith.constant 0 : index
    %c0_178 = arith.constant 0 : index
    %403 = vector.load %arg8[%c0_177, %c0_178] : memref<128x128xbf16, #tpu.memory_space<vmem>>, vector<128x128xbf16>
    %cst_179 = arith.constant dense<0.000000e+00> : vector<64x128xf32>
    %404 = tpu.matmul %402, %403, %cst_179 {dimension_numbers = #tpu.dot_dimension_numbers<[1], [0], [0], [1], [0, 0, 1, 1], [], []>} : vector<64x128xf32>, vector<128x128xbf16>, vector<64x128xf32> -> vector<64x128xf32>
    %405 = arith.addf %401, %404 : vector<64x128xf32>
    %c0_180 = arith.constant 0 : index
    %c0_181 = arith.constant 0 : index
    %406 = vector.load %arg9[%c0_180, %c0_181] : memref<1x128xf32, #tpu.memory_space<vmem>>, vector<1x128xf32>
    %407 = vector.broadcast %406 : vector<1x128xf32> to vector<64x128xf32>
    %408 = arith.addf %405, %407 : vector<64x128xf32>
    %c0_182 = arith.constant 0 : index
    %c0_183 = arith.constant 0 : index
    %409 = vector.load %arg10[%c0_182, %c0_183] : memref<64x128xf32, #tpu.memory_space<vmem>>, vector<64x128xf32>
    tpu.vector_store %arg10[%c0_182, %c0_183], %408 {strides = array<i32>} : memref<64x128xf32, #tpu.memory_space<vmem>>, vector<64x128xf32>,
    return
  }
}

</mosaic_0001>

<llo_original>
// kernel: tpu_custom_call.1
$region0: #{tpu_custom_call.1}
  #allocation0 [shape = 'u32[]', space=smem, size = 0x4, offset = 0x4, fixed_abs, tag = 'smem constant byte address 0x4 - core index']
  #allocation1 [shape = 'u32[72,128]{1,0:T(1,128)}', space=vmem, size = 0x9000, scoped, tag = 'internal scratch']
  #allocation2 [shape = 'f32[64,512]{1,0:T(8,128)}', space=vmem, size = 0x20000, scoped, tag = 'scratch operand']
  #allocation3 [shape = 'f32[64,512]{1,0:T(8,128)}', space=vmem, size = 0x20000, scoped, tag = 'scratch operand']
  #allocation4 [shape = 'f32[64,128]{1,0:T(8,128)}', space=vmem, size = 0x8000, scoped, tag = 'scratch operand']
  #allocation5 [shape = 'f32[64,128]{1,0:T(8,128)}', space=vmem, size = 0x8000, scoped, tag = 'scratch operand']
  %s0 = inlined_call_operand.vmem [shape: bf16[64,16], index: 0, kind: input, shape index: {}]
  %s1 = inlined_call_operand.vmem [shape: bf16[16,512], index: 1, kind: input, shape index: {}]
  %s2 = inlined_call_operand.hbm [shape: bf16[16,512], index: 2, kind: input, shape index: {}]
  %s3 = inlined_call_operand.vmem [shape: f32[1,512], index: 3, kind: input, shape index: {}]
  %s4 = inlined_call_operand.vmem [shape: f32[1,512], index: 4, kind: input, shape index: {}]
  %s5 = inlined_call_operand.hbm [shape: bf16[128,512], index: 5, kind: input, shape index: {}]
  %s6 = inlined_call_operand.hbm [shape: bf16[128,512], index: 6, kind: input, shape index: {}]
  %s7 = inlined_call_operand.hbm [shape: bf16[128,128], index: 7, kind: input, shape index: {}]
  %s8 = inlined_call_operand.hbm [shape: bf16[128,128], index: 8, kind: input, shape index: {}]
  %s9 = inlined_call_operand.vmem [shape: f32[1,128], index: 9, kind: input, shape index: {}]
  %s10 = inlined_call_operand.hbm [shape: f32[64,128], index: 10, kind: output, shape index: {}]
  %s11 = sld [smem:[#allocation0]]
  $region70: #{tpu_custom_call.1} parent=0
    _
  %s13 = ssub.s32 1, %s11
  %s14 = scalar_select 0, %s13, %s11
  $region1: #{tpu_custom_call.1} parent=0
    #allocation6 [shape = 'u8[16384]{0}', space=vmem, size = 0x4000, scoped, tag = 'input window, operand 2, single buffered']
    #allocation7 [shape = 's32[1]{0}', space=sflag, size = 0x4, scoped, tag = 'scoped memory for tpu_custom_call.1']
    #allocation8 [shape = 's32[1]{0}', space=sflag, size = 0x4, scoped, tag = 'scoped memory for tpu_custom_call.1']
    #allocation9 [shape = 'u8[131072]{0}', space=vmem, size = 0x20000, scoped, tag = 'input window, operand 5, single buffered']
    #allocation10 [shape = 's32[1]{0}', space=sflag, size = 0x4, scoped, tag = 'scoped memory for tpu_custom_call.1']
    #allocation11 [shape = 'u8[131072]{0}', space=vmem, size = 0x20000, scoped, tag = 'input window, operand 6, single buffered']
    #allocation12 [shape = 'u8[32768]{0}', space=vmem, size = 0x8000, scoped, tag = 'input window, operand 7, single buffered']
    #allocation13 [shape = 's32[1]{0}', space=sflag, size = 0x4, scoped, tag = 'scoped memory for tpu_custom_call.1']
    #allocation14 [shape = 'u8[32768]{0}', space=vmem, size = 0x8000, scoped, tag = 'input window, operand 8, single buffered']
    #allocation15 [shape = 'u8[32768]{0}', space=vmem, size = 0x8000, scoped, tag = 'output window, operand 0, single buffered']
    %15 = vsyncpa [#allocation7], 0
    %16 = vsyncpa [#allocation10], 0
    %17 = vsyncpa [#allocation13], 0
    %18 = vsyncpa [#allocation8], 0
    // Predicated region
    $region2: #{tpu_custom_call.1} parent=1 // pred_check
      _
    $region3: #{tpu_custom_call.1} parent=1 // pred_check_branch
      %20 = sbr.rel (0) target = $region5
    $region4: #{tpu_custom_call.1} parent=1 // pred_region
      _
    $region5: #{tpu_custom_call.1} parent=1 // pred_fallthru
      _
    // Predicated region
    $region6: #{tpu_custom_call.1} parent=1 // pred_check
      _
    $region7: #{tpu_custom_call.1} parent=1 // pred_check_branch
      %22 = sbr.rel (0) target = $region9
    $region8: #{tpu_custom_call.1} parent=1 // pred_region
      _
    $region9: #{tpu_custom_call.1} parent=1 // pred_fallthru
      _
    // Predicated region
    $region10: #{tpu_custom_call.1} parent=1 // pred_check
      _
    $region11: #{tpu_custom_call.1} parent=1 // pred_check_branch
      %24 = sbr.rel (0) target = $region13
    $region12: #{tpu_custom_call.1} parent=1 // pred_region
      %26 = vsyncadd [#allocation7], 0
      %s27 = sshll.u32 %s2, 4
      %s28 = int_to_ptr.hbm [resolvable:$true] %s27
      %s29 = sshll.u32 [#allocation6], 4
      %s30 = int_to_ptr.vmem [resolvable:$true] %s29
      %35 = dma.hbm_to_vmem [thread:$0]  %s28, 512, %s30, [#allocation7], 256, 256, 16
    $region13: #{tpu_custom_call.1} parent=1 // pred_fallthru
      _
    // Predicated region
    $region14: #{tpu_custom_call.1} parent=1 // pred_check
      _
    $region15: #{tpu_custom_call.1} parent=1 // pred_check_branch
      %37 = sbr.rel (0) target = $region17
    $region16: #{tpu_custom_call.1} parent=1 // pred_region
      _
    $region17: #{tpu_custom_call.1} parent=1 // pred_fallthru
      _
    // Predicated region
    $region18: #{tpu_custom_call.1} parent=1 // pred_check
      _
    $region19: #{tpu_custom_call.1} parent=1 // pred_check_branch
      %39 = sbr.rel (0) target = $region21
    $region20: #{tpu_custom_call.1} parent=1 // pred_region
      _
    $region21: #{tpu_custom_call.1} parent=1 // pred_fallthru
      _
    // Predicated region
    $region22: #{tpu_custom_call.1} parent=1 // pred_check
      _
    $region23: #{tpu_custom_call.1} parent=1 // pred_check_branch
      %41 = sbr.rel (0) target = $region25
    $region24: #{tpu_custom_call.1} parent=1 // pred_region
      %43 = vsyncadd [#allocation10], 0
      %s44 = sshll.u32 %s5, 4
      %s45 = int_to_ptr.hbm [resolvable:$true] %s44
      %s46 = sshll.u32 [#allocation9], 4
      %s47 = int_to_ptr.vmem [resolvable:$true] %s46
      %52 = dma.hbm_to_vmem [thread:$0]  %s45, 4096, %s47, [#allocation10], 256, 256, 16
    $region25: #{tpu_custom_call.1} parent=1 // pred_fallthru
      _
    // Predicated region
    $region26: #{tpu_custom_call.1} parent=1 // pred_check
      _
    $region27: #{tpu_custom_call.1} parent=1 // pred_check_branch
      %54 = sbr.rel (0) target = $region29
    $region28: #{tpu_custom_call.1} parent=1 // pred_region
      %56 = vsyncadd [#allocation10], 0
      %s57 = sshll.u32 %s6, 4
      %s58 = int_to_ptr.hbm [resolvable:$true] %s57
      %s59 = sshll.u32 [#allocation11], 4
      %s60 = int_to_ptr.vmem [resolvable:$true] %s59
      %65 = dma.hbm_to_vmem [thread:$0]  %s58, 4096, %s60, [#allocation10], 256, 256, 16
    $region29: #{tpu_custom_call.1} parent=1 // pred_fallthru
      _
    // Predicated region
    $region30: #{tpu_custom_call.1} parent=1 // pred_check
      _
    $region31: #{tpu_custom_call.1} parent=1 // pred_check_branch
      %67 = sbr.rel (0) target = $region33
    $region32: #{tpu_custom_call.1} parent=1 // pred_region
      %69 = vsyncadd [#allocation13], 0
      %s70 = sshll.u32 %s7, 4
      %s71 = int_to_ptr.hbm [resolvable:$true] %s70
      %s72 = sshll.u32 [#allocation12], 4
      %s73 = int_to_ptr.vmem [resolvable:$true] %s72
      %78 = dma.hbm_to_vmem [thread:$0]  %s71, 1024, %s73, [#allocation13], 64, 64, 4
    $region33: #{tpu_custom_call.1} parent=1 // pred_fallthru
      _
    // Predicated region
    $region34: #{tpu_custom_call.1} parent=1 // pred_check
      _
    $region35: #{tpu_custom_call.1} parent=1 // pred_check_branch
      %80 = sbr.rel (0) target = $region37
    $region36: #{tpu_custom_call.1} parent=1 // pred_region
      %82 = vsyncadd [#allocation13], 0
      %s83 = sshll.u32 %s8, 4
      %s84 = int_to_ptr.hbm [resolvable:$true] %s83
      %s85 = sshll.u32 [#allocation14], 4
      %s86 = int_to_ptr.vmem [resolvable:$true] %s85
      %91 = dma.hbm_to_vmem [thread:$0]  %s84, 1024, %s86, [#allocation13], 64, 64, 4
    $region37: #{tpu_custom_call.1} parent=1 // pred_fallthru
      _
    // Predicated region
    $region38: #{tpu_custom_call.1} parent=1 // pred_check
      _
    $region39: #{tpu_custom_call.1} parent=1 // pred_check_branch
      %93 = sbr.rel (0) target = $region41
    $region40: #{tpu_custom_call.1} parent=1 // pred_region
      _
    $region41: #{tpu_custom_call.1} parent=1 // pred_fallthru
      _
    // Predicated region
    $region42: #{tpu_custom_call.1} parent=1 // pred_check
      _
    $region43: #{tpu_custom_call.1} parent=1 // pred_check_branch
      %95 = sbr.rel (0) target = $region45
    $region44: #{tpu_custom_call.1} parent=1 // pred_region
      %97 = dma.done [#allocation7], 512
    $region45: #{tpu_custom_call.1} parent=1 // pred_fallthru
      _
    // Predicated region
    $region46: #{tpu_custom_call.1} parent=1 // pred_check
      _
    $region47: #{tpu_custom_call.1} parent=1 // pred_check_branch
      %99 = sbr.rel (0) target = $region49
    $region48: #{tpu_custom_call.1} parent=1 // pred_region
      %101 = dma.done [#allocation10], 4096
    $region49: #{tpu_custom_call.1} parent=1 // pred_fallthru
      _
    // Predicated region
    $region50: #{tpu_custom_call.1} parent=1 // pred_check
      _
    $region51: #{tpu_custom_call.1} parent=1 // pred_check_branch
      %103 = sbr.rel (0) target = $region53
    $region52: #{tpu_custom_call.1} parent=1 // pred_region
      %105 = dma.done [#allocation10], 4096
    $region53: #{tpu_custom_call.1} parent=1 // pred_fallthru
      _
    // Predicated region
    $region54: #{tpu_custom_call.1} parent=1 // pred_check
      _
    $region55: #{tpu_custom_call.1} parent=1 // pred_check_branch
      %107 = sbr.rel (0) target = $region57
    $region56: #{tpu_custom_call.1} parent=1 // pred_region
      %109 = dma.done [#allocation13], 1024
    $region57: #{tpu_custom_call.1} parent=1 // pred_fallthru
      _
    // Predicated region
    $region58: #{tpu_custom_call.1} parent=1 // pred_check
      _
    $region59: #{tpu_custom_call.1} parent=1 // pred_check_branch
      %111 = sbr.rel (0) target = $region61
    $region60: #{tpu_custom_call.1} parent=1 // pred_region
      %113 = dma.done [#allocation13], 1024
    $region61: #{tpu_custom_call.1} parent=1 // pred_fallthru
      _
    %v115 = vld [vmem:[%s0] sm:$0xf]
    %v116 = vld [vmem:[%s0 + $0x4] sm:$0xf]
    %v117 = vld [vmem:[%s0 + $0x8] sm:$0xf]
    %v118 = vld [vmem:[%s0 + $0xc] sm:$0xf]
    %v119 = vld [vmem:[%s0 + $0x10] sm:$0xf]
    %v120 = vld [vmem:[%s0 + $0x14] sm:$0xf]
    %v121 = vld [vmem:[%s0 + $0x18] sm:$0xf]
    %v122 = vld [vmem:[%s0 + $0x1c] sm:$0xf]
    %v123 = vld [vmem:[%s1] sm:$0xff]
    %v124 = vld [vmem:[%s1 + $0x8] sm:$0xff]
    %v125 = vld [vmem:[%s1 + $0x10] sm:$0xff]
    %v126 = vld [vmem:[%s1 + $0x18] sm:$0xff]
    %v127 = vld [vmem:[%s3] sm:$0xf]
    %v129 = vperm.slane %v127, 0
    %v130 = vperm.slane %v127, 1
    %v131 = vperm.slane %v127, 2
    %v132 = vperm.slane %v127, 3
    %v145 = vunpack.c.l.b16 %v115
    %v146 = vunpack.c.l.b16 %v116
    %v147 = vunpack.c.l.b16 %v117
    %v148 = vunpack.c.l.b16 %v118
    %v149 = vunpack.c.l.b16 %v119
    %v150 = vunpack.c.l.b16 %v120
    %v151 = vunpack.c.l.b16 %v121
    %v152 = vunpack.c.l.b16 %v122
    %v153 = vpack.c.b16 %v146, %v145
    %v154 = vpack.c.b16 %v148, %v147
    %v155 = vpack.c.b16 %v150, %v149
    %v156 = vpack.c.b16 %v152, %v151
    %v161 = vunpack.c.l.b16 %v123
    %v162 = vunpack.c.h.b16 %v123
    %v163 = vunpack.c.l.b16 %v124
    %v164 = vunpack.c.h.b16 %v124
    %v165 = vunpack.c.l.b16 %v125
    %v166 = vunpack.c.h.b16 %v125
    %v167 = vunpack.c.l.b16 %v126
    %v168 = vunpack.c.h.b16 %v126
    %v169 = vpack.c.b16 %v165, %v161
    %v170 = vpack.c.b16 %v166, %v162
    %v171 = vpack.c.b16 %v167, %v163
    %v172 = vpack.c.b16 %v168, %v164
    %vm177 = vcmask 130048
    %v179 = vsel %vm177, %v153, 0
    %v182 = vsel %vm177, %v154, 0
    %v185 = vsel %vm177, %v155, 0
    %v188 = vsel %vm177, %v156, 0
    %190 = vmatpush.bf16.msra.mxu0 0
    %191 = vmatpush.bf16.msra.mxu0 0
    %192 = vmatpush.bf16.msra.mxu0 0
    %193 = vmatpush.bf16.msra.mxu0 0
    %194 = vmatpush.bf16.msra.mxu0 0
    %195 = vmatpush.bf16.msra.mxu0 0
    %196 = vmatpush.bf16.msra.mxu0 0
    %197 = vmatpush.bf16.msra.mxu0 %v169
    %198 = vmatmul.bf16.gmra.mxu0 %v179
    %v199 = vpop.f32.mrf.mxu0
    %v200 = vadd.f32 %v129, %v199
    %v201 = vpop.f32.mrf.mxu0
    %v202 = vadd.f32 %v129, %v201
    %203 = vmatmul.bf16.gmra.mxu0 %v182
    %v204 = vpop.f32.mrf.mxu0
    %v205 = vadd.f32 %v129, %v204
    %v206 = vpop.f32.mrf.mxu0
    %v207 = vadd.f32 %v129, %v206
    %208 = vmatmul.bf16.gmra.mxu0 %v185
    %v209 = vpop.f32.mrf.mxu0
    %v210 = vadd.f32 %v129, %v209
    %v211 = vpop.f32.mrf.mxu0
    %v212 = vadd.f32 %v129, %v211
    %213 = vmatmul.bf16.gmra.mxu0 %v188
    %v214 = vpop.f32.mrf.mxu0
    %v215 = vadd.f32 %v129, %v214
    %v216 = vpop.f32.mrf.mxu0
    %v217 = vadd.f32 %v129, %v216
    %218 = vdwg.mxu0
    %219 = vmatpush.bf16.msra.mxu0 0
    %220 = vmatpush.bf16.msra.mxu0 0
    %221 = vmatpush.bf16.msra.mxu0 0
    %222 = vmatpush.bf16.msra.mxu0 0
    %223 = vmatpush.bf16.msra.mxu0 0
    %224 = vmatpush.bf16.msra.mxu0 0
    %225 = vmatpush.bf16.msra.mxu0 0
    %226 = vmatpush.bf16.msra.mxu0 %v170
    %227 = vmatmul.bf16.gmra.mxu0 %v179
    %v228 = vpop.f32.mrf.mxu0
    %v229 = vadd.f32 %v130, %v228
    %v230 = vpop.f32.mrf.mxu0
    %v231 = vadd.f32 %v130, %v230
    %232 = vmatmul.bf16.gmra.mxu0 %v182
    %v233 = vpop.f32.mrf.mxu0
    %v234 = vadd.f32 %v130, %v233
    %v235 = vpop.f32.mrf.mxu0
    %v236 = vadd.f32 %v130, %v235
    %237 = vmatmul.bf16.gmra.mxu0 %v185
    %v238 = vpop.f32.mrf.mxu0
    %v239 = vadd.f32 %v130, %v238
    %v240 = vpop.f32.mrf.mxu0
    %v241 = vadd.f32 %v130, %v240
    %242 = vmatmul.bf16.gmra.mxu0 %v188
    %v243 = vpop.f32.mrf.mxu0
    %v244 = vadd.f32 %v130, %v243
    %v245 = vpop.f32.mrf.mxu0
    %v246 = vadd.f32 %v130, %v245
    %247 = vdwg.mxu0
    %248 = vmatpush.bf16.msra.mxu0 0
    %249 = vmatpush.bf16.msra.mxu0 0
    %250 = vmatpush.bf16.msra.mxu0 0
    %251 = vmatpush.bf16.msra.mxu0 0
    %252 = vmatpush.bf16.msra.mxu0 0
    %253 = vmatpush.bf16.msra.mxu0 0
    %254 = vmatpush.bf16.msra.mxu0 0
    %255 = vmatpush.bf16.msra.mxu0 %v171
    %256 = vmatmul.bf16.gmra.mxu0 %v179
    %v257 = vpop.f32.mrf.mxu0
    %v258 = vadd.f32 %v131, %v257
    %v259 = vpop.f32.mrf.mxu0
    %v260 = vadd.f32 %v131, %v259
    %261 = vmatmul.bf16.gmra.mxu0 %v182
    %v262 = vpop.f32.mrf.mxu0
    %v263 = vadd.f32 %v131, %v262
    %v264 = vpop.f32.mrf.mxu0
    %v265 = vadd.f32 %v131, %v264
    %266 = vmatmul.bf16.gmra.mxu0 %v185
    %v267 = vpop.f32.mrf.mxu0
    %v268 = vadd.f32 %v131, %v267
    %v269 = vpop.f32.mrf.mxu0
    %v270 = vadd.f32 %v131, %v269
    %271 = vmatmul.bf16.gmra.mxu0 %v188
    %v272 = vpop.f32.mrf.mxu0
    %v273 = vadd.f32 %v131, %v272
    %v274 = vpop.f32.mrf.mxu0
    %v275 = vadd.f32 %v131, %v274
    %276 = vdwg.mxu0
    %277 = vmatpush.bf16.msra.mxu0 0
    %278 = vmatpush.bf16.msra.mxu0 0
    %279 = vmatpush.bf16.msra.mxu0 0
    %280 = vmatpush.bf16.msra.mxu0 0
    %281 = vmatpush.bf16.msra.mxu0 0
    %282 = vmatpush.bf16.msra.mxu0 0
    %283 = vmatpush.bf16.msra.mxu0 0
    %284 = vmatpush.bf16.msra.mxu0 %v172
    %285 = vmatmul.bf16.gmra.mxu0 %v179
    %v286 = vpop.f32.mrf.mxu0
    %v287 = vadd.f32 %v132, %v286
    %v288 = vpop.f32.mrf.mxu0
    %v289 = vadd.f32 %v132, %v288
    %290 = vmatmul.bf16.gmra.mxu0 %v182
    %v291 = vpop.f32.mrf.mxu0
    %v292 = vadd.f32 %v132, %v291
    %v293 = vpop.f32.mrf.mxu0
    %v294 = vadd.f32 %v132, %v293
    %295 = vmatmul.bf16.gmra.mxu0 %v185
    %v296 = vpop.f32.mrf.mxu0
    %v297 = vadd.f32 %v132, %v296
    %v298 = vpop.f32.mrf.mxu0
    %v299 = vadd.f32 %v132, %v298
    %300 = vmatmul.bf16.gmra.mxu0 %v188
    %v301 = vpop.f32.mrf.mxu0
    %v302 = vadd.f32 %v132, %v301
    %v303 = vpop.f32.mrf.mxu0
    %v304 = vadd.f32 %v132, %v303
    %305 = vdwg.mxu0
    %306 = vst [vmem:[#allocation2] sm:$0xff] %v200
    %307 = vst [vmem:[#allocation2 + $0x8] sm:$0xff] %v229
    %308 = vst [vmem:[#allocation2 + $0x10] sm:$0xff] %v258
    %309 = vst [vmem:[#allocation2 + $0x18] sm:$0xff] %v287
    %310 = vst [vmem:[#allocation2 + $0x20] sm:$0xff] %v202
    %311 = vst [vmem:[#allocation2 + $0x28] sm:$0xff] %v231
    %312 = vst [vmem:[#allocation2 + $0x30] sm:$0xff] %v260
    %313 = vst [vmem:[#allocation2 + $0x38] sm:$0xff] %v289
    %314 = vst [vmem:[#allocation2 + $0x40] sm:$0xff] %v205
    %315 = vst [vmem:[#allocation2 + $0x48] sm:$0xff] %v234
    %316 = vst [vmem:[#allocation2 + $0x50] sm:$0xff] %v263
    %317 = vst [vmem:[#allocation2 + $0x58] sm:$0xff] %v292
    %318 = vst [vmem:[#allocation2 + $0x60] sm:$0xff] %v207
    %319 = vst [vmem:[#allocation2 + $0x68] sm:$0xff] %v236
    %320 = vst [vmem:[#allocation2 + $0x70] sm:$0xff] %v265
    %321 = vst [vmem:[#allocation2 + $0x78] sm:$0xff] %v294
    %322 = vst [vmem:[#allocation2 + $0x80] sm:$0xff] %v210
    %323 = vst [vmem:[#allocation2 + $0x88] sm:$0xff] %v239
    %324 = vst [vmem:[#allocation2 + $0x90] sm:$0xff] %v268
    %325 = vst [vmem:[#allocation2 + $0x98] sm:$0xff] %v297
    %326 = vst [vmem:[#allocation2 + $0xa0] sm:$0xff] %v212
    %327 = vst [vmem:[#allocation2 + $0xa8] sm:$0xff] %v241
    %328 = vst [vmem:[#allocation2 + $0xb0] sm:$0xff] %v270
    %329 = vst [vmem:[#allocation2 + $0xb8] sm:$0xff] %v299
    %330 = vst [vmem:[#allocation2 + $0xc0] sm:$0xff] %v215
    %331 = vst [vmem:[#allocation2 + $0xc8] sm:$0xff] %v244
    %332 = vst [vmem:[#allocation2 + $0xd0] sm:$0xff] %v273
    %333 = vst [vmem:[#allocation2 + $0xd8] sm:$0xff] %v302
    %334 = vst [vmem:[#allocation2 + $0xe0] sm:$0xff] %v217
    %335 = vst [vmem:[#allocation2 + $0xe8] sm:$0xff] %v246
    %336 = vst [vmem:[#allocation2 + $0xf0] sm:$0xff] %v275
    %337 = vst [vmem:[#allocation2 + $0xf8] sm:$0xff] %v304
    %v338 = vld [vmem:[%s0] sm:$0xf]
    %v339 = vld [vmem:[%s0 + $0x4] sm:$0xf]
    %v340 = vld [vmem:[%s0 + $0x8] sm:$0xf]
    %v341 = vld [vmem:[%s0 + $0xc] sm:$0xf]
    %v342 = vld [vmem:[%s0 + $0x10] sm:$0xf]
    %v343 = vld [vmem:[%s0 + $0x14] sm:$0xf]
    %v344 = vld [vmem:[%s0 + $0x18] sm:$0xf]
    %v345 = vld [vmem:[%s0 + $0x1c] sm:$0xf]
    %v346 = vld [vmem:[#allocation6] sm:$0xff]
    %v347 = vld [vmem:[#allocation6 + $0x8] sm:$0xff]
    %v348 = vld [vmem:[#allocation6 + $0x10] sm:$0xff]
    %v349 = vld [vmem:[#allocation6 + $0x18] sm:$0xff]
    %v350 = vld [vmem:[%s4] sm:$0xf]
    %v352 = vperm.slane %v350, 0
    %v353 = vperm.slane %v350, 1
    %v354 = vperm.slane %v350, 2
    %v355 = vperm.slane %v350, 3
    %v368 = vunpack.c.l.b16 %v338
    %v369 = vunpack.c.l.b16 %v339
    %v370 = vunpack.c.l.b16 %v340
    %v371 = vunpack.c.l.b16 %v341
    %v372 = vunpack.c.l.b16 %v342
    %v373 = vunpack.c.l.b16 %v343
    %v374 = vunpack.c.l.b16 %v344
    %v375 = vunpack.c.l.b16 %v345
    %v376 = vpack.c.b16 %v369, %v368
    %v377 = vpack.c.b16 %v371, %v370
    %v378 = vpack.c.b16 %v373, %v372
    %v379 = vpack.c.b16 %v375, %v374
    %v384 = vunpack.c.l.b16 %v346
    %v385 = vunpack.c.h.b16 %v346
    %v386 = vunpack.c.l.b16 %v347
    %v387 = vunpack.c.h.b16 %v347
    %v388 = vunpack.c.l.b16 %v348
    %v389 = vunpack.c.h.b16 %v348
    %v390 = vunpack.c.l.b16 %v349
    %v391 = vunpack.c.h.b16 %v349
    %v392 = vpack.c.b16 %v388, %v384
    %v393 = vpack.c.b16 %v389, %v385
    %v394 = vpack.c.b16 %v390, %v386
    %v395 = vpack.c.b16 %v391, %v387
    %v401 = vsel %vm177, %v376, 0
    %v404 = vsel %vm177, %v377, 0
    %v407 = vsel %vm177, %v378, 0
    %v410 = vsel %vm177, %v379, 0
    %412 = vmatpush.bf16.msra.mxu0 0
    %413 = vmatpush.bf16.msra.mxu0 0
    %414 = vmatpush.bf16.msra.mxu0 0
    %415 = vmatpush.bf16.msra.mxu0 0
    %416 = vmatpush.bf16.msra.mxu0 0
    %417 = vmatpush.bf16.msra.mxu0 0
    %418 = vmatpush.bf16.msra.mxu0 0
    %419 = vmatpush.bf16.msra.mxu0 %v392
    %420 = vmatmul.bf16.gmra.mxu0 %v401
    %v421 = vpop.f32.mrf.mxu0
    %v422 = vadd.f32 %v352, %v421
    %v423 = vpop.f32.mrf.mxu0
    %v424 = vadd.f32 %v352, %v423
    %425 = vmatmul.bf16.gmra.mxu0 %v404
    %v426 = vpop.f32.mrf.mxu0
    %v427 = vadd.f32 %v352, %v426
    %v428 = vpop.f32.mrf.mxu0
    %v429 = vadd.f32 %v352, %v428
    %430 = vmatmul.bf16.gmra.mxu0 %v407
    %v431 = vpop.f32.mrf.mxu0
    %v432 = vadd.f32 %v352, %v431
    %v433 = vpop.f32.mrf.mxu0
    %v434 = vadd.f32 %v352, %v433
    %435 = vmatmul.bf16.gmra.mxu0 %v410
    %v436 = vpop.f32.mrf.mxu0
    %v437 = vadd.f32 %v352, %v436
    %v438 = vpop.f32.mrf.mxu0
    %v439 = vadd.f32 %v352, %v438
    %440 = vdwg.mxu0
    %441 = vmatpush.bf16.msra.mxu0 0
    %442 = vmatpush.bf16.msra.mxu0 0
    %443 = vmatpush.bf16.msra.mxu0 0
    %444 = vmatpush.bf16.msra.mxu0 0
    %445 = vmatpush.bf16.msra.mxu0 0
    %446 = vmatpush.bf16.msra.mxu0 0
    %447 = vmatpush.bf16.msra.mxu0 0
    %448 = vmatpush.bf16.msra.mxu0 %v393
    %449 = vmatmul.bf16.gmra.mxu0 %v401
    %v450 = vpop.f32.mrf.mxu0
    %v451 = vadd.f32 %v353, %v450
    %v452 = vpop.f32.mrf.mxu0
    %v453 = vadd.f32 %v353, %v452
    %454 = vmatmul.bf16.gmra.mxu0 %v404
    %v455 = vpop.f32.mrf.mxu0
    %v456 = vadd.f32 %v353, %v455
    %v457 = vpop.f32.mrf.mxu0
    %v458 = vadd.f32 %v353, %v457
    %459 = vmatmul.bf16.gmra.mxu0 %v407
    %v460 = vpop.f32.mrf.mxu0
    %v461 = vadd.f32 %v353, %v460
    %v462 = vpop.f32.mrf.mxu0
    %v463 = vadd.f32 %v353, %v462
    %464 = vmatmul.bf16.gmra.mxu0 %v410
    %v465 = vpop.f32.mrf.mxu0
    %v466 = vadd.f32 %v353, %v465
    %v467 = vpop.f32.mrf.mxu0
    %v468 = vadd.f32 %v353, %v467
    %469 = vdwg.mxu0
    %470 = vmatpush.bf16.msra.mxu0 0
    %471 = vmatpush.bf16.msra.mxu0 0
    %472 = vmatpush.bf16.msra.mxu0 0
    %473 = vmatpush.bf16.msra.mxu0 0
    %474 = vmatpush.bf16.msra.mxu0 0
    %475 = vmatpush.bf16.msra.mxu0 0
    %476 = vmatpush.bf16.msra.mxu0 0
    %477 = vmatpush.bf16.msra.mxu0 %v394
    %478 = vmatmul.bf16.gmra.mxu0 %v401
    %v479 = vpop.f32.mrf.mxu0
    %v480 = vadd.f32 %v354, %v479
    %v481 = vpop.f32.mrf.mxu0
    %v482 = vadd.f32 %v354, %v481
    %483 = vmatmul.bf16.gmra.mxu0 %v404
    %v484 = vpop.f32.mrf.mxu0
    %v485 = vadd.f32 %v354, %v484
    %v486 = vpop.f32.mrf.mxu0
    %v487 = vadd.f32 %v354, %v486
    %488 = vmatmul.bf16.gmra.mxu0 %v407
    %v489 = vpop.f32.mrf.mxu0
    %v490 = vadd.f32 %v354, %v489
    %v491 = vpop.f32.mrf.mxu0
    %v492 = vadd.f32 %v354, %v491
    %493 = vmatmul.bf16.gmra.mxu0 %v410
    %v494 = vpop.f32.mrf.mxu0
    %v495 = vadd.f32 %v354, %v494
    %v496 = vpop.f32.mrf.mxu0
    %v497 = vadd.f32 %v354, %v496
    %498 = vdwg.mxu0
    %499 = vmatpush.bf16.msra.mxu0 0
    %500 = vmatpush.bf16.msra.mxu0 0
    %501 = vmatpush.bf16.msra.mxu0 0
    %502 = vmatpush.bf16.msra.mxu0 0
    %503 = vmatpush.bf16.msra.mxu0 0
    %504 = vmatpush.bf16.msra.mxu0 0
    %505 = vmatpush.bf16.msra.mxu0 0
    %506 = vmatpush.bf16.msra.mxu0 %v395
    %507 = vmatmul.bf16.gmra.mxu0 %v401
    %v508 = vpop.f32.mrf.mxu0
    %v509 = vadd.f32 %v355, %v508
    %v510 = vpop.f32.mrf.mxu0
    %v511 = vadd.f32 %v355, %v510
    %512 = vmatmul.bf16.gmra.mxu0 %v404
    %v513 = vpop.f32.mrf.mxu0
    %v514 = vadd.f32 %v355, %v513
    %v515 = vpop.f32.mrf.mxu0
    %v516 = vadd.f32 %v355, %v515
    %517 = vmatmul.bf16.gmra.mxu0 %v407
    %v518 = vpop.f32.mrf.mxu0
    %v519 = vadd.f32 %v355, %v518
    %v520 = vpop.f32.mrf.mxu0
    %v521 = vadd.f32 %v355, %v520
    %522 = vmatmul.bf16.gmra.mxu0 %v410
    %v523 = vpop.f32.mrf.mxu0
    %v524 = vadd.f32 %v355, %v523
    %v525 = vpop.f32.mrf.mxu0
    %v526 = vadd.f32 %v355, %v525
    %527 = vdwg.mxu0
    %528 = vst [vmem:[#allocation3] sm:$0xff] %v422
    %529 = vst [vmem:[#allocation3 + $0x8] sm:$0xff] %v451
    %530 = vst [vmem:[#allocation3 + $0x10] sm:$0xff] %v480
    %531 = vst [vmem:[#allocation3 + $0x18] sm:$0xff] %v509
    %532 = vst [vmem:[#allocation3 + $0x20] sm:$0xff] %v424
    %533 = vst [vmem:[#allocation3 + $0x28] sm:$0xff] %v453
    %534 = vst [vmem:[#allocation3 + $0x30] sm:$0xff] %v482
    %535 = vst [vmem:[#allocation3 + $0x38] sm:$0xff] %v511
    %536 = vst [vmem:[#allocation3 + $0x40] sm:$0xff] %v427
    %537 = vst [vmem:[#allocation3 + $0x48] sm:$0xff] %v456
    %538 = vst [vmem:[#allocation3 + $0x50] sm:$0xff] %v485
    %539 = vst [vmem:[#allocation3 + $0x58] sm:$0xff] %v514
    %540 = vst [vmem:[#allocation3 + $0x60] sm:$0xff] %v429
    %541 = vst [vmem:[#allocation3 + $0x68] sm:$0xff] %v458
    %542 = vst [vmem:[#allocation3 + $0x70] sm:$0xff] %v487
    %543 = vst [vmem:[#allocation3 + $0x78] sm:$0xff] %v516
    %544 = vst [vmem:[#allocation3 + $0x80] sm:$0xff] %v432
    %545 = vst [vmem:[#allocation3 + $0x88] sm:$0xff] %v461
    %546 = vst [vmem:[#allocation3 + $0x90] sm:$0xff] %v490
    %547 = vst [vmem:[#allocation3 + $0x98] sm:$0xff] %v519
    %548 = vst [vmem:[#allocation3 + $0xa0] sm:$0xff] %v434
    %549 = vst [vmem:[#allocation3 + $0xa8] sm:$0xff] %v463
    %550 = vst [vmem:[#allocation3 + $0xb0] sm:$0xff] %v492
    %551 = vst [vmem:[#allocation3 + $0xb8] sm:$0xff] %v521
    %552 = vst [vmem:[#allocation3 + $0xc0] sm:$0xff] %v437
    %553 = vst [vmem:[#allocation3 + $0xc8] sm:$0xff] %v466
    %554 = vst [vmem:[#allocation3 + $0xd0] sm:$0xff] %v495
    %555 = vst [vmem:[#allocation3 + $0xd8] sm:$0xff] %v524
    %556 = vst [vmem:[#allocation3 + $0xe0] sm:$0xff] %v439
    %557 = vst [vmem:[#allocation3 + $0xe8] sm:$0xff] %v468
    %558 = vst [vmem:[#allocation3 + $0xf0] sm:$0xff] %v497
    %559 = vst [vmem:[#allocation3 + $0xf8] sm:$0xff] %v526
    %v560 = vld [vmem:[#allocation2] sm:$0xff]
    %v561 = vld [vmem:[#allocation2 + $0x8] sm:$0xff]
    %v562 = vld [vmem:[#allocation2 + $0x10] sm:$0xff]
    %v563 = vld [vmem:[#allocation2 + $0x18] sm:$0xff]
    %v564 = vld [vmem:[#allocation9] sm:$0xff]
    %v565 = vld [vmem:[#allocation9 + $0x8] sm:$0xff]
    %v566 = vld [vmem:[#allocation9 + $0x10] sm:$0xff]
    %v567 = vld [vmem:[#allocation9 + $0x18] sm:$0xff]
    %v568 = vld [vmem:[#allocation9 + $0x20] sm:$0xff]
    %v569 = vld [vmem:[#allocation9 + $0x28] sm:$0xff]
    %v570 = vld [vmem:[#allocation9 + $0x30] sm:$0xff]
    %v571 = vld [vmem:[#allocation9 + $0x38] sm:$0xff]
    %v572 = vld [vmem:[#allocation9 + $0x40] sm:$0xff]
    %v573 = vld [vmem:[#allocation9 + $0x48] sm:$0xff]
    %v574 = vld [vmem:[#allocation9 + $0x50] sm:$0xff]
    %v575 = vld [vmem:[#allocation9 + $0x58] sm:$0xff]
    %v576 = vld [vmem:[#allocation9 + $0x60] sm:$0xff]
    %v577 = vld [vmem:[#allocation9 + $0x68] sm:$0xff]
    %v578 = vld [vmem:[#allocation9 + $0x70] sm:$0xff]
    %v579 = vld [vmem:[#allocation9 + $0x78] sm:$0xff]
    %v580 = vld [vmem:[#allocation9 + $0x80] sm:$0xff]
    %v581 = vld [vmem:[#allocation9 + $0x88] sm:$0xff]
    %v582 = vld [vmem:[#allocation9 + $0x90] sm:$0xff]
    %v583 = vld [vmem:[#allocation9 + $0x98] sm:$0xff]
    %v584 = vld [vmem:[#allocation9 + $0xa0] sm:$0xff]
    %v585 = vld [vmem:[#allocation9 + $0xa8] sm:$0xff]
    %v586 = vld [vmem:[#allocation9 + $0xb0] sm:$0xff]
    %v587 = vld [vmem:[#allocation9 + $0xb8] sm:$0xff]
    %v588 = vld [vmem:[#allocation9 + $0xc0] sm:$0xff]
    %v589 = vld [vmem:[#allocation9 + $0xc8] sm:$0xff]
    %v590 = vld [vmem:[#allocation9 + $0xd0] sm:$0xff]
    %v591 = vld [vmem:[#allocation9 + $0xd8] sm:$0xff]
    %v592 = vld [vmem:[#allocation9 + $0xe0] sm:$0xff]
    %v593 = vld [vmem:[#allocation9 + $0xe8] sm:$0xff]
    %v594 = vld [vmem:[#allocation9 + $0xf0] sm:$0xff]
    %v595 = vld [vmem:[#allocation9 + $0xf8] sm:$0xff]
    %v628 = vunpack.c.l.b16 %v564
    %v629 = vunpack.c.h.b16 %v564
    %v630 = vunpack.c.l.b16 %v565
    %v631 = vunpack.c.h.b16 %v565
    %v632 = vunpack.c.l.b16 %v566
    %v633 = vunpack.c.h.b16 %v566
    %v634 = vunpack.c.l.b16 %v567
    %v635 = vunpack.c.h.b16 %v567
    %v636 = vunpack.c.l.b16 %v568
    %v637 = vunpack.c.h.b16 %v568
    %v638 = vunpack.c.l.b16 %v569
    %v639 = vunpack.c.h.b16 %v569
    %v640 = vunpack.c.l.b16 %v570
    %v641 = vunpack.c.h.b16 %v570
    %v642 = vunpack.c.l.b16 %v571
    %v643 = vunpack.c.h.b16 %v571
    %v644 = vunpack.c.l.b16 %v572
    %v645 = vunpack.c.h.b16 %v572
    %v646 = vunpack.c.l.b16 %v573
    %v647 = vunpack.c.h.b16 %v573
    %v648 = vunpack.c.l.b16 %v574
    %v649 = vunpack.c.h.b16 %v574
    %v650 = vunpack.c.l.b16 %v575
    %v651 = vunpack.c.h.b16 %v575
    %v652 = vunpack.c.l.b16 %v576
    %v653 = vunpack.c.h.b16 %v576
    %v654 = vunpack.c.l.b16 %v577
    %v655 = vunpack.c.h.b16 %v577
    %v656 = vunpack.c.l.b16 %v578
    %v657 = vunpack.c.h.b16 %v578
    %v658 = vunpack.c.l.b16 %v579
    %v659 = vunpack.c.h.b16 %v579
    %v660 = vunpack.c.l.b16 %v580
    %v661 = vunpack.c.h.b16 %v580
    %v662 = vunpack.c.l.b16 %v581
    %v663 = vunpack.c.h.b16 %v581
    %v664 = vunpack.c.l.b16 %v582
    %v665 = vunpack.c.h.b16 %v582
    %v666 = vunpack.c.l.b16 %v583
    %v667 = vunpack.c.h.b16 %v583
    %v668 = vunpack.c.l.b16 %v584
    %v669 = vunpack.c.h.b16 %v584
    %v670 = vunpack.c.l.b16 %v585
    %v671 = vunpack.c.h.b16 %v585
    %v672 = vunpack.c.l.b16 %v586
    %v673 = vunpack.c.h.b16 %v586
    %v674 = vunpack.c.l.b16 %v587
    %v675 = vunpack.c.h.b16 %v587
    %v676 = vunpack.c.l.b16 %v588
    %v677 = vunpack.c.h.b16 %v588
    %v678 = vunpack.c.l.b16 %v589
    %v679 = vunpack.c.h.b16 %v589
    %v680 = vunpack.c.l.b16 %v590
    %v681 = vunpack.c.h.b16 %v590
    %v682 = vunpack.c.l.b16 %v591
    %v683 = vunpack.c.h.b16 %v591
    %v684 = vunpack.c.l.b16 %v592
    %v685 = vunpack.c.h.b16 %v592
    %v686 = vunpack.c.l.b16 %v593
    %v687 = vunpack.c.h.b16 %v593
    %v688 = vunpack.c.l.b16 %v594
    %v689 = vunpack.c.h.b16 %v594
    %v690 = vunpack.c.l.b16 %v595
    %v691 = vunpack.c.h.b16 %v595
    %v692 = vpack.c.b16 %v632, %v628
    %v693 = vpack.c.b16 %v633, %v629
    %v694 = vpack.c.b16 %v634, %v630
    %v695 = vpack.c.b16 %v635, %v631
    %v696 = vpack.c.b16 %v640, %v636
    %v697 = vpack.c.b16 %v641, %v637
    %v698 = vpack.c.b16 %v642, %v638
    %v699 = vpack.c.b16 %v643, %v639
    %v700 = vpack.c.b16 %v648, %v644
    %v701 = vpack.c.b16 %v649, %v645
    %v702 = vpack.c.b16 %v650, %v646
    %v703 = vpack.c.b16 %v651, %v647
    %v704 = vpack.c.b16 %v656, %v652
    %v705 = vpack.c.b16 %v657, %v653
    %v706 = vpack.c.b16 %v658, %v654
    %v707 = vpack.c.b16 %v659, %v655
    %v708 = vpack.c.b16 %v664, %v660
    %v709 = vpack.c.b16 %v665, %v661
    %v710 = vpack.c.b16 %v666, %v662
    %v711 = vpack.c.b16 %v667, %v663
    %v712 = vpack.c.b16 %v672, %v668
    %v713 = vpack.c.b16 %v673, %v669
    %v714 = vpack.c.b16 %v674, %v670
    %v715 = vpack.c.b16 %v675, %v671
    %v716 = vpack.c.b16 %v680, %v676
    %v717 = vpack.c.b16 %v681, %v677
    %v718 = vpack.c.b16 %v682, %v678
    %v719 = vpack.c.b16 %v683, %v679
    %v720 = vpack.c.b16 %v688, %v684
    %v721 = vpack.c.b16 %v689, %v685
    %v722 = vpack.c.b16 %v690, %v686
    %v723 = vpack.c.b16 %v691, %v687
    %756 = vmatpush.bf16.msra.mxu0 %v720
    %757 = vmatpush.bf16.msra.mxu0 %v716
    %758 = vmatpush.bf16.msra.mxu0 %v712
    %759 = vmatpush.bf16.msra.mxu0 %v708
    %760 = vmatpush.bf16.msra.mxu0 %v704
    %761 = vmatpush.bf16.msra.mxu0 %v700
    %762 = vmatpush.bf16.msra.mxu0 %v696
    %763 = vmatpush.bf16.msra.mxu0 %v692
    %764 = vmatmul.bf16.gmra.mxu0 0
    %v765 = vpop.f32.mrf.mxu0
    %v766 = vadd.f32 0.0, %v765
    %v767 = vpop.f32.mrf.mxu0
    %768 = vdwg.mxu0
    %769 = vmatpush.bf16.msra.mxu0 %v721
    %770 = vmatpush.bf16.msra.mxu0 %v717
    %771 = vmatpush.bf16.msra.mxu0 %v713
    %772 = vmatpush.bf16.msra.mxu0 %v709
    %773 = vmatpush.bf16.msra.mxu0 %v705
    %774 = vmatpush.bf16.msra.mxu0 %v701
    %775 = vmatpush.bf16.msra.mxu0 %v697
    %776 = vmatpush.bf16.msra.mxu0 %v693
    %777 = vmatmul.bf16.gmra.mxu0 0
    %v778 = vpop.f32.mrf.mxu0
    %v779 = vadd.f32 0.0, %v778
    %v780 = vpop.f32.mrf.mxu0
    %781 = vdwg.mxu0
    %782 = vmatpush.bf16.msra.mxu0 %v722
    %783 = vmatpush.bf16.msra.mxu0 %v718
    %784 = vmatpush.bf16.msra.mxu0 %v714
    %785 = vmatpush.bf16.msra.mxu0 %v710
    %786 = vmatpush.bf16.msra.mxu0 %v706
    %787 = vmatpush.bf16.msra.mxu0 %v702
    %788 = vmatpush.bf16.msra.mxu0 %v698
    %789 = vmatpush.bf16.msra.mxu0 %v694
    %790 = vmatmul.bf16.gmra.mxu0 0
    %v791 = vpop.f32.mrf.mxu0
    %v792 = vadd.f32 0.0, %v791
    %v793 = vpop.f32.mrf.mxu0
    %794 = vdwg.mxu0
    %795 = vmatpush.bf16.msra.mxu0 %v723
    %796 = vmatpush.bf16.msra.mxu0 %v719
    %797 = vmatpush.bf16.msra.mxu0 %v715
    %798 = vmatpush.bf16.msra.mxu0 %v711
    %799 = vmatpush.bf16.msra.mxu0 %v707
    %800 = vmatpush.bf16.msra.mxu0 %v703
    %801 = vmatpush.bf16.msra.mxu0 %v699
    %802 = vmatpush.bf16.msra.mxu0 %v695
    %803 = vmatmul.bf16.gmra.mxu0 0
    %v804 = vpop.f32.mrf.mxu0
    %v805 = vadd.f32 0.0, %v804
    %v806 = vpop.f32.mrf.mxu0
    %807 = vdwg.mxu0
    %v808 = vadd.f32 %v560, %v766
    %v809 = vadd.f32 %v561, %v779
    %v810 = vadd.f32 %v562, %v792
    %v811 = vadd.f32 %v563, %v805
    %v812 = vmul.f32 %v808, 0.5
    %v813 = vmul.f32 %v809, 0.5
    %v814 = vmul.f32 %v810, 0.5
    %v815 = vtanh.pop %v812
    %v816 = vtanh.pop %v813
    %v817 = vtanh.pop %v814
    %v818 = vmul.f32 %v815, 0.5
    %v819 = vmul.f32 %v816, 0.5
    %v820 = vmul.f32 %v817, 0.5
    %v821 = vadd.f32 %v818, 0.5
    %v822 = vadd.f32 %v819, 0.5
    %v823 = vadd.f32 %v820, 0.5
    %v824 = vtanh.pop %v811
    %v825 = vmul.f32 %v822, 0.0
    %v826 = vmul.f32 %v821, %v824
    %v827 = vadd.f32 %v825, %v826
    %v828 = vtanh.pop %v827
    %v829 = vmul.f32 %v823, %v828
    %830 = vst [vmem:[#allocation4] sm:$0xff] %v829
    %v831 = vld [vmem:[#allocation3 + $0xe0] sm:$0xff]
    %v832 = vld [vmem:[#allocation3 + $0xe8] sm:$0xff]
    %v833 = vld [vmem:[#allocation3 + $0xf0] sm:$0xff]
    %v834 = vld [vmem:[#allocation3 + $0xf8] sm:$0xff]
    %v835 = vld [vmem:[#allocation11] sm:$0xff]
    %v836 = vld [vmem:[#allocation11 + $0x8] sm:$0xff]
    %v837 = vld [vmem:[#allocation11 + $0x10] sm:$0xff]
    %v838 = vld [vmem:[#allocation11 + $0x18] sm:$0xff]
    %v839 = vld [vmem:[#allocation11 + $0x20] sm:$0xff]
    %v840 = vld [vmem:[#allocation11 + $0x28] sm:$0xff]
    %v841 = vld [vmem:[#allocation11 + $0x30] sm:$0xff]
    %v842 = vld [vmem:[#allocation11 + $0x38] sm:$0xff]
    %v843 = vld [vmem:[#allocation11 + $0x40] sm:$0xff]
    %v844 = vld [vmem:[#allocation11 + $0x48] sm:$0xff]
    %v845 = vld [vmem:[#allocation11 + $0x50] sm:$0xff]
    %v846 = vld [vmem:[#allocation11 + $0x58] sm:$0xff]
    %v847 = vld [vmem:[#allocation11 + $0x60] sm:$0xff]
    %v848 = vld [vmem:[#allocation11 + $0x68] sm:$0xff]
    %v849 = vld [vmem:[#allocation11 + $0x70] sm:$0xff]
    %v850 = vld [vmem:[#allocation11 + $0x78] sm:$0xff]
    %v851 = vld [vmem:[#allocation11 + $0x80] sm:$0xff]
    %v852 = vld [vmem:[#allocation11 + $0x88] sm:$0xff]
    %v853 = vld [vmem:[#allocation11 + $0x90] sm:$0xff]
    %v854 = vld [vmem:[#allocation11 + $0x98] sm:$0xff]
    %v855 = vld [vmem:[#allocation11 + $0xa0] sm:$0xff]
    %v856 = vld [vmem:[#allocation11 + $0xa8] sm:$0xff]
    %v857 = vld [vmem:[#allocation11 + $0xb0] sm:$0xff]
    %v858 = vld [vmem:[#allocation11 + $0xb8] sm:$0xff]
    %v859 = vld [vmem:[#allocation11 + $0xc0] sm:$0xff]
    %v860 = vld [vmem:[#allocation11 + $0xc8] sm:$0xff]
    %v861 = vld [vmem:[#allocation11 + $0xd0] sm:$0xff]
    %v862 = vld [vmem:[#allocation11 + $0xd8] sm:$0xff]
    %v863 = vld [vmem:[#allocation11 + $0xe0] sm:$0xff]
    %v864 = vld [vmem:[#allocation11 + $0xe8] sm:$0xff]
    %v865 = vld [vmem:[#allocation11 + $0xf0] sm:$0xff]
    %v866 = vld [vmem:[#allocation11 + $0xf8] sm:$0xff]
    %v899 = vunpack.c.l.b16 %v835
    %v900 = vunpack.c.h.b16 %v835
    %v901 = vunpack.c.l.b16 %v836
    %v902 = vunpack.c.h.b16 %v836
    %v903 = vunpack.c.l.b16 %v837
    %v904 = vunpack.c.h.b16 %v837
    %v905 = vunpack.c.l.b16 %v838
    %v906 = vunpack.c.h.b16 %v838
    %v907 = vunpack.c.l.b16 %v839
    %v908 = vunpack.c.h.b16 %v839
    %v909 = vunpack.c.l.b16 %v840
    %v910 = vunpack.c.h.b16 %v840
    %v911 = vunpack.c.l.b16 %v841
    %v912 = vunpack.c.h.b16 %v841
    %v913 = vunpack.c.l.b16 %v842
    %v914 = vunpack.c.h.b16 %v842
    %v915 = vunpack.c.l.b16 %v843
    %v916 = vunpack.c.h.b16 %v843
    %v917 = vunpack.c.l.b16 %v844
    %v918 = vunpack.c.h.b16 %v844
    %v919 = vunpack.c.l.b16 %v845
    %v920 = vunpack.c.h.b16 %v845
    %v921 = vunpack.c.l.b16 %v846
    %v922 = vunpack.c.h.b16 %v846
    %v923 = vunpack.c.l.b16 %v847
    %v924 = vunpack.c.h.b16 %v847
    %v925 = vunpack.c.l.b16 %v848
    %v926 = vunpack.c.h.b16 %v848
    %v927 = vunpack.c.l.b16 %v849
    %v928 = vunpack.c.h.b16 %v849
    %v929 = vunpack.c.l.b16 %v850
    %v930 = vunpack.c.h.b16 %v850
    %v931 = vunpack.c.l.b16 %v851
    %v932 = vunpack.c.h.b16 %v851
    %v933 = vunpack.c.l.b16 %v852
    %v934 = vunpack.c.h.b16 %v852
    %v935 = vunpack.c.l.b16 %v853
    %v936 = vunpack.c.h.b16 %v853
    %v937 = vunpack.c.l.b16 %v854
    %v938 = vunpack.c.h.b16 %v854
    %v939 = vunpack.c.l.b16 %v855
    %v940 = vunpack.c.h.b16 %v855
    %v941 = vunpack.c.l.b16 %v856
    %v942 = vunpack.c.h.b16 %v856
    %v943 = vunpack.c.l.b16 %v857
    %v944 = vunpack.c.h.b16 %v857
    %v945 = vunpack.c.l.b16 %v858
    %v946 = vunpack.c.h.b16 %v858
    %v947 = vunpack.c.l.b16 %v859
    %v948 = vunpack.c.h.b16 %v859
    %v949 = vunpack.c.l.b16 %v860
    %v950 = vunpack.c.h.b16 %v860
    %v951 = vunpack.c.l.b16 %v861
    %v952 = vunpack.c.h.b16 %v861
    %v953 = vunpack.c.l.b16 %v862
    %v954 = vunpack.c.h.b16 %v862
    %v955 = vunpack.c.l.b16 %v863
    %v956 = vunpack.c.h.b16 %v863
    %v957 = vunpack.c.l.b16 %v864
    %v958 = vunpack.c.h.b16 %v864
    %v959 = vunpack.c.l.b16 %v865
    %v960 = vunpack.c.h.b16 %v865
    %v961 = vunpack.c.l.b16 %v866
    %v962 = vunpack.c.h.b16 %v866
    %v963 = vpack.c.b16 %v903, %v899
    %v964 = vpack.c.b16 %v904, %v900
    %v965 = vpack.c.b16 %v905, %v901
    %v966 = vpack.c.b16 %v906, %v902
    %v967 = vpack.c.b16 %v911, %v907
    %v968 = vpack.c.b16 %v912, %v908
    %v969 = vpack.c.b16 %v913, %v909
    %v970 = vpack.c.b16 %v914, %v910
    %v971 = vpack.c.b16 %v919, %v915
    %v972 = vpack.c.b16 %v920, %v916
    %v973 = vpack.c.b16 %v921, %v917
    %v974 = vpack.c.b16 %v922, %v918
    %v975 = vpack.c.b16 %v927, %v923
    %v976 = vpack.c.b16 %v928, %v924
    %v977 = vpack.c.b16 %v929, %v925
    %v978 = vpack.c.b16 %v930, %v926
    %v979 = vpack.c.b16 %v935, %v931
    %v980 = vpack.c.b16 %v936, %v932
    %v981 = vpack.c.b16 %v937, %v933
    %v982 = vpack.c.b16 %v938, %v934
    %v983 = vpack.c.b16 %v943, %v939
    %v984 = vpack.c.b16 %v944, %v940
    %v985 = vpack.c.b16 %v945, %v941
    %v986 = vpack.c.b16 %v946, %v942
    %v987 = vpack.c.b16 %v951, %v947
    %v988 = vpack.c.b16 %v952, %v948
    %v989 = vpack.c.b16 %v953, %v949
    %v990 = vpack.c.b16 %v954, %v950
    %v991 = vpack.c.b16 %v959, %v955
    %v992 = vpack.c.b16 %v960, %v956
    %v993 = vpack.c.b16 %v961, %v957
    %v994 = vpack.c.b16 %v962, %v958
    %1027 = vmatpush.bf16.msra.mxu0 %v991
    %1028 = vmatpush.bf16.msra.mxu0 %v987
    %1029 = vmatpush.bf16.msra.mxu0 %v983
    %1030 = vmatpush.bf16.msra.mxu0 %v979
    %1031 = vmatpush.bf16.msra.mxu0 %v975
    %1032 = vmatpush.bf16.msra.mxu0 %v971
    %1033 = vmatpush.bf16.msra.mxu0 %v967
    %1034 = vmatpush.bf16.msra.mxu0 %v963
    %1035 = vmatmul.bf16.gmra.mxu0 0
    %v1036 = vpop.f32.mrf.mxu0
    %v1037 = vadd.f32 0.0, %v1036
    %v1038 = vpop.f32.mrf.mxu0
    %1039 = vdwg.mxu0
    %1040 = vmatpush.bf16.msra.mxu0 %v992
    %1041 = vmatpush.bf16.msra.mxu0 %v988
    %1042 = vmatpush.bf16.msra.mxu0 %v984
    %1043 = vmatpush.bf16.msra.mxu0 %v980
    %1044 = vmatpush.bf16.msra.mxu0 %v976
    %1045 = vmatpush.bf16.msra.mxu0 %v972
    %1046 = vmatpush.bf16.msra.mxu0 %v968
    %1047 = vmatpush.bf16.msra.mxu0 %v964
    %1048 = vmatmul.bf16.gmra.mxu0 0
    %v1049 = vpop.f32.mrf.mxu0
    %v1050 = vadd.f32 0.0, %v1049
    %v1051 = vpop.f32.mrf.mxu0
    %1052 = vdwg.mxu0
    %1053 = vmatpush.bf16.msra.mxu0 %v993
    %1054 = vmatpush.bf16.msra.mxu0 %v989
    %1055 = vmatpush.bf16.msra.mxu0 %v985
    %1056 = vmatpush.bf16.msra.mxu0 %v981
    %1057 = vmatpush.bf16.msra.mxu0 %v977
    %1058 = vmatpush.bf16.msra.mxu0 %v973
    %1059 = vmatpush.bf16.msra.mxu0 %v969
    %1060 = vmatpush.bf16.msra.mxu0 %v965
    %1061 = vmatmul.bf16.gmra.mxu0 0
    %v1062 = vpop.f32.mrf.mxu0
    %v1063 = vadd.f32 0.0, %v1062
    %v1064 = vpop.f32.mrf.mxu0
    %1065 = vdwg.mxu0
    %1066 = vmatpush.bf16.msra.mxu0 %v994
    %1067 = vmatpush.bf16.msra.mxu0 %v990
    %1068 = vmatpush.bf16.msra.mxu0 %v986
    %1069 = vmatpush.bf16.msra.mxu0 %v982
    %1070 = vmatpush.bf16.msra.mxu0 %v978
    %1071 = vmatpush.bf16.msra.mxu0 %v974
    %1072 = vmatpush.bf16.msra.mxu0 %v970
    %1073 = vmatpush.bf16.msra.mxu0 %v966
    %1074 = vmatmul.bf16.gmra.mxu0 0
    %v1075 = vpop.f32.mrf.mxu0
    %v1076 = vadd.f32 0.0, %v1075
    %v1077 = vpop.f32.mrf.mxu0
    %1078 = vdwg.mxu0
    %v1079 = vadd.f32 %v831, %v1037
    %v1080 = vadd.f32 %v832, %v1050
    %v1081 = vadd.f32 %v833, %v1063
    %v1082 = vadd.f32 %v834, %v1076
    %v1083 = vmul.f32 %v1079, 0.5
    %v1084 = vmul.f32 %v1080, 0.5
    %v1085 = vmul.f32 %v1081, 0.5
    %v1086 = vtanh.pop %v1083
    %v1087 = vtanh.pop %v1084
    %v1088 = vtanh.pop %v1085
    %v1089 = vmul.f32 %v1086, 0.5
    %v1090 = vmul.f32 %v1087, 0.5
    %v1091 = vmul.f32 %v1088, 0.5
    %v1092 = vadd.f32 %v1089, 0.5
    %v1093 = vadd.f32 %v1090, 0.5
    %v1094 = vadd.f32 %v1091, 0.5
    %v1095 = vtanh.pop %v1082
    %v1096 = vmul.f32 %v1093, 0.0
    %v1097 = vmul.f32 %v1092, %v1095
    %v1098 = vadd.f32 %v1096, %v1097
    %v1099 = vtanh.pop %v1098
    %v1100 = vmul.f32 %v1094, %v1099
    %1101 = vst [vmem:[#allocation5 + $0x38] sm:$0xff] %v1100
    %v1102 = vld [vmem:[#allocation2 + $0x20] sm:$0xff]
    %v1103 = vld [vmem:[#allocation2 + $0x28] sm:$0xff]
    %v1104 = vld [vmem:[#allocation2 + $0x30] sm:$0xff]
    %v1105 = vld [vmem:[#allocation2 + $0x38] sm:$0xff]
    %v1106 = vpack.c.bf16 %v829, %v829
    %v1107 = vld [vmem:[#allocation9] sm:$0xff]
    %v1108 = vld [vmem:[#allocation9 + $0x8] sm:$0xff]
    %v1109 = vld [vmem:[#allocation9 + $0x10] sm:$0xff]
    %v1110 = vld [vmem:[#allocation9 + $0x18] sm:$0xff]
    %v1111 = vld [vmem:[#allocation9 + $0x20] sm:$0xff]
    %v1112 = vld [vmem:[#allocation9 + $0x28] sm:$0xff]
    %v1113 = vld [vmem:[#allocation9 + $0x30] sm:$0xff]
    %v1114 = vld [vmem:[#allocation9 + $0x38] sm:$0xff]
    %v1115 = vld [vmem:[#allocation9 + $0x40] sm:$0xff]
    %v1116 = vld [vmem:[#allocation9 + $0x48] sm:$0xff]
    %v1117 = vld [vmem:[#allocation9 + $0x50] sm:$0xff]
    %v1118 = vld [vmem:[#allocation9 + $0x58] sm:$0xff]
    %v1119 = vld [vmem:[#allocation9 + $0x60] sm:$0xff]
    %v1120 = vld [vmem:[#allocation9 + $0x68] sm:$0xff]
    %v1121 = vld [vmem:[#allocation9 + $0x70] sm:$0xff]
    %v1122 = vld [vmem:[#allocation9 + $0x78] sm:$0xff]
    %v1123 = vld [vmem:[#allocation9 + $0x80] sm:$0xff]
    %v1124 = vld [vmem:[#allocation9 + $0x88] sm:$0xff]
    %v1125 = vld [vmem:[#allocation9 + $0x90] sm:$0xff]
    %v1126 = vld [vmem:[#allocation9 + $0x98] sm:$0xff]
    %v1127 = vld [vmem:[#allocation9 + $0xa0] sm:$0xff]
    %v1128 = vld [vmem:[#allocation9 + $0xa8] sm:$0xff]
    %v1129 = vld [vmem:[#allocation9 + $0xb0] sm:$0xff]
    %v1130 = vld [vmem:[#allocation9 + $0xb8] sm:$0xff]
    %v1131 = vld [vmem:[#allocation9 + $0xc0] sm:$0xff]
    %v1132 = vld [vmem:[#allocation9 + $0xc8] sm:$0xff]
    %v1133 = vld [vmem:[#allocation9 + $0xd0] sm:$0xff]
    %v1134 = vld [vmem:[#allocation9 + $0xd8] sm:$0xff]
    %v1135 = vld [vmem:[#allocation9 + $0xe0] sm:$0xff]
    %v1136 = vld [vmem:[#allocation9 + $0xe8] sm:$0xff]
    %v1137 = vld [vmem:[#allocation9 + $0xf0] sm:$0xff]
    %v1138 = vld [vmem:[#allocation9 + $0xf8] sm:$0xff]
    %v1171 = vunpack.c.l.b16 %v1107
    %v1172 = vunpack.c.h.b16 %v1107
    %v1173 = vunpack.c.l.b16 %v1108
    %v1174 = vunpack.c.h.b16 %v1108
    %v1175 = vunpack.c.l.b16 %v1109
    %v1176 = vunpack.c.h.b16 %v1109
    %v1177 = vunpack.c.l.b16 %v1110
    %v1178 = vunpack.c.h.b16 %v1110
    %v1179 = vunpack.c.l.b16 %v1111
    %v1180 = vunpack.c.h.b16 %v1111
    %v1181 = vunpack.c.l.b16 %v1112
    %v1182 = vunpack.c.h.b16 %v1112
    %v1183 = vunpack.c.l.b16 %v1113
    %v1184 = vunpack.c.h.b16 %v1113
    %v1185 = vunpack.c.l.b16 %v1114
    %v1186 = vunpack.c.h.b16 %v1114
    %v1187 = vunpack.c.l.b16 %v1115
    %v1188 = vunpack.c.h.b16 %v1115
    %v1189 = vunpack.c.l.b16 %v1116
    %v1190 = vunpack.c.h.b16 %v1116
    %v1191 = vunpack.c.l.b16 %v1117
    %v1192 = vunpack.c.h.b16 %v1117
    %v1193 = vunpack.c.l.b16 %v1118
    %v1194 = vunpack.c.h.b16 %v1118
    %v1195 = vunpack.c.l.b16 %v1119
    %v1196 = vunpack.c.h.b16 %v1119
    %v1197 = vunpack.c.l.b16 %v1120
    %v1198 = vunpack.c.h.b16 %v1120
    %v1199 = vunpack.c.l.b16 %v1121
    %v1200 = vunpack.c.h.b16 %v1121
    %v1201 = vunpack.c.l.b16 %v1122
    %v1202 = vunpack.c.h.b16 %v1122
    %v1203 = vunpack.c.l.b16 %v1123
    %v1204 = vunpack.c.h.b16 %v1123
    %v1205 = vunpack.c.l.b16 %v1124
    %v1206 = vunpack.c.h.b16 %v1124
    %v1207 = vunpack.c.l.b16 %v1125
    %v1208 = vunpack.c.h.b16 %v1125
    %v1209 = vunpack.c.l.b16 %v1126
    %v1210 = vunpack.c.h.b16 %v1126
    %v1211 = vunpack.c.l.b16 %v1127
    %v1212 = vunpack.c.h.b16 %v1127
    %v1213 = vunpack.c.l.b16 %v1128
    %v1214 = vunpack.c.h.b16 %v1128
    %v1215 = vunpack.c.l.b16 %v1129
    %v1216 = vunpack.c.h.b16 %v1129
    %v1217 = vunpack.c.l.b16 %v1130
    %v1218 = vunpack.c.h.b16 %v1130
    %v1219 = vunpack.c.l.b16 %v1131
    %v1220 = vunpack.c.h.b16 %v1131
    %v1221 = vunpack.c.l.b16 %v1132
    %v1222 = vunpack.c.h.b16 %v1132
    %v1223 = vunpack.c.l.b16 %v1133
    %v1224 = vunpack.c.h.b16 %v1133
    %v1225 = vunpack.c.l.b16 %v1134
    %v1226 = vunpack.c.h.b16 %v1134
    %v1227 = vunpack.c.l.b16 %v1135
    %v1228 = vunpack.c.h.b16 %v1135
    %v1229 = vunpack.c.l.b16 %v1136
    %v1230 = vunpack.c.h.b16 %v1136
    %v1231 = vunpack.c.l.b16 %v1137
    %v1232 = vunpack.c.h.b16 %v1137
    %v1233 = vunpack.c.l.b16 %v1138
    %v1234 = vunpack.c.h.b16 %v1138
    %v1235 = vpack.c.b16 %v1175, %v1171
    %v1236 = vpack.c.b16 %v1176, %v1172
    %v1237 = vpack.c.b16 %v1177, %v1173
    %v1238 = vpack.c.b16 %v1178, %v1174
    %v1239 = vpack.c.b16 %v1183, %v1179
    %v1240 = vpack.c.b16 %v1184, %v1180
    %v1241 = vpack.c.b16 %v1185, %v1181
    %v1242 = vpack.c.b16 %v1186, %v1182
    %v1243 = vpack.c.b16 %v1191, %v1187
    %v1244 = vpack.c.b16 %v1192, %v1188
    %v1245 = vpack.c.b16 %v1193, %v1189
    %v1246 = vpack.c.b16 %v1194, %v1190
    %v1247 = vpack.c.b16 %v1199, %v1195
    %v1248 = vpack.c.b16 %v1200, %v1196
    %v1249 = vpack.c.b16 %v1201, %v1197
    %v1250 = vpack.c.b16 %v1202, %v1198
    %v1251 = vpack.c.b16 %v1207, %v1203
    %v1252 = vpack.c.b16 %v1208, %v1204
    %v1253 = vpack.c.b16 %v1209, %v1205
    %v1254 = vpack.c.b16 %v1210, %v1206
    %v1255 = vpack.c.b16 %v1215, %v1211
    %v1256 = vpack.c.b16 %v1216, %v1212
    %v1257 = vpack.c.b16 %v1217, %v1213
    %v1258 = vpack.c.b16 %v1218, %v1214
    %v1259 = vpack.c.b16 %v1223, %v1219
    %v1260 = vpack.c.b16 %v1224, %v1220
    %v1261 = vpack.c.b16 %v1225, %v1221
    %v1262 = vpack.c.b16 %v1226, %v1222
    %v1263 = vpack.c.b16 %v1231, %v1227
    %v1264 = vpack.c.b16 %v1232, %v1228
    %v1265 = vpack.c.b16 %v1233, %v1229
    %v1266 = vpack.c.b16 %v1234, %v1230
    %1299 = vmatpush.bf16.msra.mxu0 %v1263
    %1300 = vmatpush.bf16.msra.mxu0 %v1259
    %1301 = vmatpush.bf16.msra.mxu0 %v1255
    %1302 = vmatpush.bf16.msra.mxu0 %v1251
    %1303 = vmatpush.bf16.msra.mxu0 %v1247
    %1304 = vmatpush.bf16.msra.mxu0 %v1243
    %1305 = vmatpush.bf16.msra.mxu0 %v1239
    %1306 = vmatpush.bf16.msra.mxu0 %v1235
    %1307 = vmatmul.bf16.gmra.mxu0 %v1106
    %v1308 = vpop.f32.mrf.mxu0
    %v1309 = vadd.f32 0.0, %v1308
    %v1310 = vpop.f32.mrf.mxu0
    %1311 = vdwg.mxu0
    %1312 = vmatpush.bf16.msra.mxu0 %v1264
    %1313 = vmatpush.bf16.msra.mxu0 %v1260
    %1314 = vmatpush.bf16.msra.mxu0 %v1256
    %1315 = vmatpush.bf16.msra.mxu0 %v1252
    %1316 = vmatpush.bf16.msra.mxu0 %v1248
    %1317 = vmatpush.bf16.msra.mxu0 %v1244
    %1318 = vmatpush.bf16.msra.mxu0 %v1240
    %1319 = vmatpush.bf16.msra.mxu0 %v1236
    %1320 = vmatmul.bf16.gmra.mxu0 %v1106
    %v1321 = vpop.f32.mrf.mxu0
    %v1322 = vadd.f32 0.0, %v1321
    %v1323 = vpop.f32.mrf.mxu0
    %1324 = vdwg.mxu0
    %1325 = vmatpush.bf16.msra.mxu0 %v1265
    %1326 = vmatpush.bf16.msra.mxu0 %v1261
    %1327 = vmatpush.bf16.msra.mxu0 %v1257
    %1328 = vmatpush.bf16.msra.mxu0 %v1253
    %1329 = vmatpush.bf16.msra.mxu0 %v1249
    %1330 = vmatpush.bf16.msra.mxu0 %v1245
    %1331 = vmatpush.bf16.msra.mxu0 %v1241
    %1332 = vmatpush.bf16.msra.mxu0 %v1237
    %1333 = vmatmul.bf16.gmra.mxu0 %v1106
    %v1334 = vpop.f32.mrf.mxu0
    %v1335 = vadd.f32 0.0, %v1334
    %v1336 = vpop.f32.mrf.mxu0
    %1337 = vdwg.mxu0
    %1338 = vmatpush.bf16.msra.mxu0 %v1266
    %1339 = vmatpush.bf16.msra.mxu0 %v1262
    %1340 = vmatpush.bf16.msra.mxu0 %v1258
    %1341 = vmatpush.bf16.msra.mxu0 %v1254
    %1342 = vmatpush.bf16.msra.mxu0 %v1250
    %1343 = vmatpush.bf16.msra.mxu0 %v1246
    %1344 = vmatpush.bf16.msra.mxu0 %v1242
    %1345 = vmatpush.bf16.msra.mxu0 %v1238
    %1346 = vmatmul.bf16.gmra.mxu0 %v1106
    %v1347 = vpop.f32.mrf.mxu0
    %v1348 = vadd.f32 0.0, %v1347
    %v1349 = vpop.f32.mrf.mxu0
    %1350 = vdwg.mxu0
    %v1351 = vadd.f32 %v1102, %v1309
    %v1352 = vadd.f32 %v1103, %v1322
    %v1353 = vadd.f32 %v1104, %v1335
    %v1354 = vadd.f32 %v1105, %v1348
    %v1355 = vmul.f32 %v1351, 0.5
    %v1356 = vmul.f32 %v1352, 0.5
    %v1357 = vmul.f32 %v1353, 0.5
    %v1358 = vtanh.pop %v1355
    %v1359 = vtanh.pop %v1356
    %v1360 = vtanh.pop %v1357
    %v1361 = vmul.f32 %v1358, 0.5
    %v1362 = vmul.f32 %v1359, 0.5
    %v1363 = vmul.f32 %v1360, 0.5
    %v1364 = vadd.f32 %v1361, 0.5
    %v1365 = vadd.f32 %v1362, 0.5
    %v1366 = vadd.f32 %v1363, 0.5
    %v1367 = vtanh.pop %v1354
    %v1368 = vmul.f32 %v1365, %v827
    %v1369 = vmul.f32 %v1364, %v1367
    %v1370 = vadd.f32 %v1368, %v1369
    %v1371 = vtanh.pop %v1370
    %v1372 = vmul.f32 %v1366, %v1371
    %1373 = vst [vmem:[#allocation4 + $0x8] sm:$0xff] %v1372
    %v1374 = vld [vmem:[#allocation3 + $0xc0] sm:$0xff]
    %v1375 = vld [vmem:[#allocation3 + $0xc8] sm:$0xff]
    %v1376 = vld [vmem:[#allocation3 + $0xd0] sm:$0xff]
    %v1377 = vld [vmem:[#allocation3 + $0xd8] sm:$0xff]
    %v1378 = vpack.c.bf16 %v1100, %v1100
    %v1379 = vld [vmem:[#allocation11] sm:$0xff]
    %v1380 = vld [vmem:[#allocation11 + $0x8] sm:$0xff]
    %v1381 = vld [vmem:[#allocation11 + $0x10] sm:$0xff]
    %v1382 = vld [vmem:[#allocation11 + $0x18] sm:$0xff]
    %v1383 = vld [vmem:[#allocation11 + $0x20] sm:$0xff]
    %v1384 = vld [vmem:[#allocation11 + $0x28] sm:$0xff]
    %v1385 = vld [vmem:[#allocation11 + $0x30] sm:$0xff]
    %v1386 = vld [vmem:[#allocation11 + $0x38] sm:$0xff]
    %v1387 = vld [vmem:[#allocation11 + $0x40] sm:$0xff]
    %v1388 = vld [vmem:[#allocation11 + $0x48] sm:$0xff]
    %v1389 = vld [vmem:[#allocation11 + $0x50] sm:$0xff]
    %v1390 = vld [vmem:[#allocation11 + $0x58] sm:$0xff]
    %v1391 = vld [vmem:[#allocation11 + $0x60] sm:$0xff]
    %v1392 = vld [vmem:[#allocation11 + $0x68] sm:$0xff]
    %v1393 = vld [vmem:[#allocation11 + $0x70] sm:$0xff]
    %v1394 = vld [vmem:[#allocation11 + $0x78] sm:$0xff]
    %v1395 = vld [vmem:[#allocation11 + $0x80] sm:$0xff]
    %v1396 = vld [vmem:[#allocation11 + $0x88] sm:$0xff]
    %v1397 = vld [vmem:[#allocation11 + $0x90] sm:$0xff]
    %v1398 = vld [vmem:[#allocation11 + $0x98] sm:$0xff]
    %v1399 = vld [vmem:[#allocation11 + $0xa0] sm:$0xff]
    %v1400 = vld [vmem:[#allocation11 + $0xa8] sm:$0xff]
    %v1401 = vld [vmem:[#allocation11 + $0xb0] sm:$0xff]
    %v1402 = vld [vmem:[#allocation11 + $0xb8] sm:$0xff]
    %v1403 = vld [vmem:[#allocation11 + $0xc0] sm:$0xff]
    %v1404 = vld [vmem:[#allocation11 + $0xc8] sm:$0xff]
    %v1405 = vld [vmem:[#allocation11 + $0xd0] sm:$0xff]
    %v1406 = vld [vmem:[#allocation11 + $0xd8] sm:$0xff]
    %v1407 = vld [vmem:[#allocation11 + $0xe0] sm:$0xff]
    %v1408 = vld [vmem:[#allocation11 + $0xe8] sm:$0xff]
    %v1409 = vld [vmem:[#allocation11 + $0xf0] sm:$0xff]
    %v1410 = vld [vmem:[#allocation11 + $0xf8] sm:$0xff]
    %v1443 = vunpack.c.l.b16 %v1379
    %v1444 = vunpack.c.h.b16 %v1379
    %v1445 = vunpack.c.l.b16 %v1380
    %v1446 = vunpack.c.h.b16 %v1380
    %v1447 = vunpack.c.l.b16 %v1381
    %v1448 = vunpack.c.h.b16 %v1381
    %v1449 = vunpack.c.l.b16 %v1382
    %v1450 = vunpack.c.h.b16 %v1382
    %v1451 = vunpack.c.l.b16 %v1383
    %v1452 = vunpack.c.h.b16 %v1383
    %v1453 = vunpack.c.l.b16 %v1384
    %v1454 = vunpack.c.h.b16 %v1384
    %v1455 = vunpack.c.l.b16 %v1385
    %v1456 = vunpack.c.h.b16 %v1385
    %v1457 = vunpack.c.l.b16 %v1386
    %v1458 = vunpack.c.h.b16 %v1386
    %v1459 = vunpack.c.l.b16 %v1387
    %v1460 = vunpack.c.h.b16 %v1387
    %v1461 = vunpack.c.l.b16 %v1388
    %v1462 = vunpack.c.h.b16 %v1388
    %v1463 = vunpack.c.l.b16 %v1389
    %v1464 = vunpack.c.h.b16 %v1389
    %v1465 = vunpack.c.l.b16 %v1390
    %v1466 = vunpack.c.h.b16 %v1390
    %v1467 = vunpack.c.l.b16 %v1391
    %v1468 = vunpack.c.h.b16 %v1391
    %v1469 = vunpack.c.l.b16 %v1392
    %v1470 = vunpack.c.h.b16 %v1392
    %v1471 = vunpack.c.l.b16 %v1393
    %v1472 = vunpack.c.h.b16 %v1393
    %v1473 = vunpack.c.l.b16 %v1394
    %v1474 = vunpack.c.h.b16 %v1394
    %v1475 = vunpack.c.l.b16 %v1395
    %v1476 = vunpack.c.h.b16 %v1395
    %v1477 = vunpack.c.l.b16 %v1396
    %v1478 = vunpack.c.h.b16 %v1396
    %v1479 = vunpack.c.l.b16 %v1397
    %v1480 = vunpack.c.h.b16 %v1397
    %v1481 = vunpack.c.l.b16 %v1398
    %v1482 = vunpack.c.h.b16 %v1398
    %v1483 = vunpack.c.l.b16 %v1399
    %v1484 = vunpack.c.h.b16 %v1399
    %v1485 = vunpack.c.l.b16 %v1400
    %v1486 = vunpack.c.h.b16 %v1400
    %v1487 = vunpack.c.l.b16 %v1401
    %v1488 = vunpack.c.h.b16 %v1401
    %v1489 = vunpack.c.l.b16 %v1402
    %v1490 = vunpack.c.h.b16 %v1402
    %v1491 = vunpack.c.l.b16 %v1403
    %v1492 = vunpack.c.h.b16 %v1403
    %v1493 = vunpack.c.l.b16 %v1404
    %v1494 = vunpack.c.h.b16 %v1404
    %v1495 = vunpack.c.l.b16 %v1405
    %v1496 = vunpack.c.h.b16 %v1405
    %v1497 = vunpack.c.l.b16 %v1406
    %v1498 = vunpack.c.h.b16 %v1406
    %v1499 = vunpack.c.l.b16 %v1407
    %v1500 = vunpack.c.h.b16 %v1407
    %v1501 = vunpack.c.l.b16 %v1408
    %v1502 = vunpack.c.h.b16 %v1408
    %v1503 = vunpack.c.l.b16 %v1409
    %v1504 = vunpack.c.h.b16 %v1409
    %v1505 = vunpack.c.l.b16 %v1410
    %v1506 = vunpack.c.h.b16 %v1410
    %v1507 = vpack.c.b16 %v1447, %v1443
    %v1508 = vpack.c.b16 %v1448, %v1444
    %v1509 = vpack.c.b16 %v1449, %v1445
    %v1510 = vpack.c.b16 %v1450, %v1446
    %v1511 = vpack.c.b16 %v1455, %v1451
    %v1512 = vpack.c.b16 %v1456, %v1452
    %v1513 = vpack.c.b16 %v1457, %v1453
    %v1514 = vpack.c.b16 %v1458, %v1454
    %v1515 = vpack.c.b16 %v1463, %v1459
    %v1516 = vpack.c.b16 %v1464, %v1460
    %v1517 = vpack.c.b16 %v1465, %v1461
    %v1518 = vpack.c.b16 %v1466, %v1462
    %v1519 = vpack.c.b16 %v1471, %v1467
    %v1520 = vpack.c.b16 %v1472, %v1468
    %v1521 = vpack.c.b16 %v1473, %v1469
    %v1522 = vpack.c.b16 %v1474, %v1470
    %v1523 = vpack.c.b16 %v1479, %v1475
    %v1524 = vpack.c.b16 %v1480, %v1476
    %v1525 = vpack.c.b16 %v1481, %v1477
    %v1526 = vpack.c.b16 %v1482, %v1478
    %v1527 = vpack.c.b16 %v1487, %v1483
    %v1528 = vpack.c.b16 %v1488, %v1484
    %v1529 = vpack.c.b16 %v1489, %v1485
    %v1530 = vpack.c.b16 %v1490, %v1486
    %v1531 = vpack.c.b16 %v1495, %v1491
    %v1532 = vpack.c.b16 %v1496, %v1492
    %v1533 = vpack.c.b16 %v1497, %v1493
    %v1534 = vpack.c.b16 %v1498, %v1494
    %v1535 = vpack.c.b16 %v1503, %v1499
    %v1536 = vpack.c.b16 %v1504, %v1500
    %v1537 = vpack.c.b16 %v1505, %v1501
    %v1538 = vpack.c.b16 %v1506, %v1502
    %1571 = vmatpush.bf16.msra.mxu0 %v1535
    %1572 = vmatpush.bf16.msra.mxu0 %v1531
    %1573 = vmatpush.bf16.msra.mxu0 %v1527
    %1574 = vmatpush.bf16.msra.mxu0 %v1523
    %1575 = vmatpush.bf16.msra.mxu0 %v1519
    %1576 = vmatpush.bf16.msra.mxu0 %v1515
    %1577 = vmatpush.bf16.msra.mxu0 %v1511
    %1578 = vmatpush.bf16.msra.mxu0 %v1507
    %1579 = vmatmul.bf16.gmra.mxu0 %v1378
    %v1580 = vpop.f32.mrf.mxu0
    %v1581 = vadd.f32 0.0, %v1580
    %v1582 = vpop.f32.mrf.mxu0
    %1583 = vdwg.mxu0
    %1584 = vmatpush.bf16.msra.mxu0 %v1536
    %1585 = vmatpush.bf16.msra.mxu0 %v1532
    %1586 = vmatpush.bf16.msra.mxu0 %v1528
    %1587 = vmatpush.bf16.msra.mxu0 %v1524
    %1588 = vmatpush.bf16.msra.mxu0 %v1520
    %1589 = vmatpush.bf16.msra.mxu0 %v1516
    %1590 = vmatpush.bf16.msra.mxu0 %v1512
    %1591 = vmatpush.bf16.msra.mxu0 %v1508
    %1592 = vmatmul.bf16.gmra.mxu0 %v1378
    %v1593 = vpop.f32.mrf.mxu0
    %v1594 = vadd.f32 0.0, %v1593
    %v1595 = vpop.f32.mrf.mxu0
    %1596 = vdwg.mxu0
    %1597 = vmatpush.bf16.msra.mxu0 %v1537
    %1598 = vmatpush.bf16.msra.mxu0 %v1533
    %1599 = vmatpush.bf16.msra.mxu0 %v1529
    %1600 = vmatpush.bf16.msra.mxu0 %v1525
    %1601 = vmatpush.bf16.msra.mxu0 %v1521
    %1602 = vmatpush.bf16.msra.mxu0 %v1517
    %1603 = vmatpush.bf16.msra.mxu0 %v1513
    %1604 = vmatpush.bf16.msra.mxu0 %v1509
    %1605 = vmatmul.bf16.gmra.mxu0 %v1378
    %v1606 = vpop.f32.mrf.mxu0
    %v1607 = vadd.f32 0.0, %v1606
    %v1608 = vpop.f32.mrf.mxu0
    %1609 = vdwg.mxu0
    %1610 = vmatpush.bf16.msra.mxu0 %v1538
    %1611 = vmatpush.bf16.msra.mxu0 %v1534
    %1612 = vmatpush.bf16.msra.mxu0 %v1530
    %1613 = vmatpush.bf16.msra.mxu0 %v1526
    %1614 = vmatpush.bf16.msra.mxu0 %v1522
    %1615 = vmatpush.bf16.msra.mxu0 %v1518
    %1616 = vmatpush.bf16.msra.mxu0 %v1514
    %1617 = vmatpush.bf16.msra.mxu0 %v1510
    %1618 = vmatmul.bf16.gmra.mxu0 %v1378
    %v1619 = vpop.f32.mrf.mxu0
    %v1620 = vadd.f32 0.0, %v1619
    %v1621 = vpop.f32.mrf.mxu0
    %1622 = vdwg.mxu0
    %v1623 = vadd.f32 %v1374, %v1581
    %v1624 = vadd.f32 %v1375, %v1594
    %v1625 = vadd.f32 %v1376, %v1607
    %v1626 = vadd.f32 %v1377, %v1620
    %v1627 = vmul.f32 %v1623, 0.5
    %v1628 = vmul.f32 %v1624, 0.5
    %v1629 = vmul.f32 %v1625, 0.5
    %v1630 = vtanh.pop %v1627
    %v1631 = vtanh.pop %v1628
    %v1632 = vtanh.pop %v1629
    %v1633 = vmul.f32 %v1630, 0.5
    %v1634 = vmul.f32 %v1631, 0.5
    %v1635 = vmul.f32 %v1632, 0.5
    %v1636 = vadd.f32 %v1633, 0.5
    %v1637 = vadd.f32 %v1634, 0.5
    %v1638 = vadd.f32 %v1635, 0.5
    %v1639 = vtanh.pop %v1626
    %v1640 = vmul.f32 %v1637, %v1098
    %v1641 = vmul.f32 %v1636, %v1639
    %v1642 = vadd.f32 %v1640, %v1641
    %v1643 = vtanh.pop %v1642
    %v1644 = vmul.f32 %v1638, %v1643
    %1645 = vst [vmem:[#allocation5 + $0x30] sm:$0xff] %v1644
    %v1646 = vld [vmem:[#allocation2 + $0x40] sm:$0xff]
    %v1647 = vld [vmem:[#allocation2 + $0x48] sm:$0xff]
    %v1648 = vld [vmem:[#allocation2 + $0x50] sm:$0xff]
    %v1649 = vld [vmem:[#allocation2 + $0x58] sm:$0xff]
    %v1650 = vpack.c.bf16 %v1372, %v1372
    %v1651 = vld [vmem:[#allocation9] sm:$0xff]
    %v1652 = vld [vmem:[#allocation9 + $0x8] sm:$0xff]
    %v1653 = vld [vmem:[#allocation9 + $0x10] sm:$0xff]
    %v1654 = vld [vmem:[#allocation9 + $0x18] sm:$0xff]
    %v1655 = vld [vmem:[#allocation9 + $0x20] sm:$0xff]
    %v1656 = vld [vmem:[#allocation9 + $0x28] sm:$0xff]
    %v1657 = vld [vmem:[#allocation9 + $0x30] sm:$0xff]
    %v1658 = vld [vmem:[#allocation9 + $0x38] sm:$0xff]
    %v1659 = vld [vmem:[#allocation9 + $0x40] sm:$0xff]
    %v1660 = vld [vmem:[#allocation9 + $0x48] sm:$0xff]
    %v1661 = vld [vmem:[#allocation9 + $0x50] sm:$0xff]
    %v1662 = vld [vmem:[#allocation9 + $0x58] sm:$0xff]
    %v1663 = vld [vmem:[#allocation9 + $0x60] sm:$0xff]
    %v1664 = vld [vmem:[#allocation9 + $0x68] sm:$0xff]
    %v1665 = vld [vmem:[#allocation9 + $0x70] sm:$0xff]
    %v1666 = vld [vmem:[#allocation9 + $0x78] sm:$0xff]
    %v1667 = vld [vmem:[#allocation9 + $0x80] sm:$0xff]
    %v1668 = vld [vmem:[#allocation9 + $0x88] sm:$0xff]
    %v1669 = vld [vmem:[#allocation9 + $0x90] sm:$0xff]
    %v1670 = vld [vmem:[#allocation9 + $0x98] sm:$0xff]
    %v1671 = vld [vmem:[#allocation9 + $0xa0] sm:$0xff]
    %v1672 = vld [vmem:[#allocation9 + $0xa8] sm:$0xff]
    %v1673 = vld [vmem:[#allocation9 + $0xb0] sm:$0xff]
    %v1674 = vld [vmem:[#allocation9 + $0xb8] sm:$0xff]
    %v1675 = vld [vmem:[#allocation9 + $0xc0] sm:$0xff]
    %v1676 = vld [vmem:[#allocation9 + $0xc8] sm:$0xff]
    %v1677 = vld [vmem:[#allocation9 + $0xd0] sm:$0xff]
    %v1678 = vld [vmem:[#allocation9 + $0xd8] sm:$0xff]
    %v1679 = vld [vmem:[#allocation9 + $0xe0] sm:$0xff]
    %v1680 = vld [vmem:[#allocation9 + $0xe8] sm:$0xff]
    %v1681 = vld [vmem:[#allocation9 + $0xf0] sm:$0xff]
    %v1682 = vld [vmem:[#allocation9 + $0xf8] sm:$0xff]
    %v1715 = vunpack.c.l.b16 %v1651
    %v1716 = vunpack.c.h.b16 %v1651
    %v1717 = vunpack.c.l.b16 %v1652
    %v1718 = vunpack.c.h.b16 %v1652
    %v1719 = vunpack.c.l.b16 %v1653
    %v1720 = vunpack.c.h.b16 %v1653
    %v1721 = vunpack.c.l.b16 %v1654
    %v1722 = vunpack.c.h.b16 %v1654
    %v1723 = vunpack.c.l.b16 %v1655
    %v1724 = vunpack.c.h.b16 %v1655
    %v1725 = vunpack.c.l.b16 %v1656
    %v1726 = vunpack.c.h.b16 %v1656
    %v1727 = vunpack.c.l.b16 %v1657
    %v1728 = vunpack.c.h.b16 %v1657
    %v1729 = vunpack.c.l.b16 %v1658
    %v1730 = vunpack.c.h.b16 %v1658
    %v1731 = vunpack.c.l.b16 %v1659
    %v1732 = vunpack.c.h.b16 %v1659
    %v1733 = vunpack.c.l.b16 %v1660
    %v1734 = vunpack.c.h.b16 %v1660
    %v1735 = vunpack.c.l.b16 %v1661
    %v1736 = vunpack.c.h.b16 %v1661
    %v1737 = vunpack.c.l.b16 %v1662
    %v1738 = vunpack.c.h.b16 %v1662
    %v1739 = vunpack.c.l.b16 %v1663
    %v1740 = vunpack.c.h.b16 %v1663
    %v1741 = vunpack.c.l.b16 %v1664
    %v1742 = vunpack.c.h.b16 %v1664
    %v1743 = vunpack.c.l.b16 %v1665
    %v1744 = vunpack.c.h.b16 %v1665
    %v1745 = vunpack.c.l.b16 %v1666
    %v1746 = vunpack.c.h.b16 %v1666
    %v1747 = vunpack.c.l.b16 %v1667
    %v1748 = vunpack.c.h.b16 %v1667
    %v1749 = vunpack.c.l.b16 %v1668
    %v1750 = vunpack.c.h.b16 %v1668
    %v1751 = vunpack.c.l.b16 %v1669
    %v1752 = vunpack.c.h.b16 %v1669
    %v1753 = vunpack.c.l.b16 %v1670
    %v1754 = vunpack.c.h.b16 %v1670
    %v1755 = vunpack.c.l.b16 %v1671
    %v1756 = vunpack.c.h.b16 %v1671
    %v1757 = vunpack.c.l.b16 %v1672
    %v1758 = vunpack.c.h.b16 %v1672
    %v1759 = vunpack.c.l.b16 %v1673
    %v1760 = vunpack.c.h.b16 %v1673
    %v1761 = vunpack.c.l.b16 %v1674
    %v1762 = vunpack.c.h.b16 %v1674
    %v1763 = vunpack.c.l.b16 %v1675
    %v1764 = vunpack.c.h.b16 %v1675
    %v1765 = vunpack.c.l.b16 %v1676
    %v1766 = vunpack.c.h.b16 %v1676
    %v1767 = vunpack.c.l.b16 %v1677
    %v1768 = vunpack.c.h.b16 %v1677
    %v1769 = vunpack.c.l.b16 %v1678
    %v1770 = vunpack.c.h.b16 %v1678
    %v1771 = vunpack.c.l.b16 %v1679
    %v1772 = vunpack.c.h.b16 %v1679
    %v1773 = vunpack.c.l.b16 %v1680
    %v1774 = vunpack.c.h.b16 %v1680
    %v1775 = vunpack.c.l.b16 %v1681
    %v1776 = vunpack.c.h.b16 %v1681
    %v1777 = vunpack.c.l.b16 %v1682
    %v1778 = vunpack.c.h.b16 %v1682
    %v1779 = vpack.c.b16 %v1719, %v1715
    %v1780 = vpack.c.b16 %v1720, %v1716
    %v1781 = vpack.c.b16 %v1721, %v1717
    %v1782 = vpack.c.b16 %v1722, %v1718
    %v1783 = vpack.c.b16 %v1727, %v1723
    %v1784 = vpack.c.b16 %v1728, %v1724
    %v1785 = vpack.c.b16 %v1729, %v1725
    %v1786 = vpack.c.b16 %v1730, %v1726
    %v1787 = vpack.c.b16 %v1735, %v1731
    %v1788 = vpack.c.b16 %v1736, %v1732
    %v1789 = vpack.c.b16 %v1737, %v1733
    %v1790 = vpack.c.b16 %v1738, %v1734
    %v1791 = vpack.c.b16 %v1743, %v1739
    %v1792 = vpack.c.b16 %v1744, %v1740
    %v1793 = vpack.c.b16 %v1745, %v1741
    %v1794 = vpack.c.b16 %v1746, %v1742
    %v1795 = vpack.c.b16 %v1751, %v1747
    %v1796 = vpack.c.b16 %v1752, %v1748
    %v1797 = vpack.c.b16 %v1753, %v1749
    %v1798 = vpack.c.b16 %v1754, %v1750
    %v1799 = vpack.c.b16 %v1759, %v1755
    %v1800 = vpack.c.b16 %v1760, %v1756
    %v1801 = vpack.c.b16 %v1761, %v1757
    %v1802 = vpack.c.b16 %v1762, %v1758
    %v1803 = vpack.c.b16 %v1767, %v1763
    %v1804 = vpack.c.b16 %v1768, %v1764
    %v1805 = vpack.c.b16 %v1769, %v1765
    %v1806 = vpack.c.b16 %v1770, %v1766
    %v1807 = vpack.c.b16 %v1775, %v1771
    %v1808 = vpack.c.b16 %v1776, %v1772
    %v1809 = vpack.c.b16 %v1777, %v1773
    %v1810 = vpack.c.b16 %v1778, %v1774
    %1843 = vmatpush.bf16.msra.mxu0 %v1807
    %1844 = vmatpush.bf16.msra.mxu0 %v1803
    %1845 = vmatpush.bf16.msra.mxu0 %v1799
    %1846 = vmatpush.bf16.msra.mxu0 %v1795
    %1847 = vmatpush.bf16.msra.mxu0 %v1791
    %1848 = vmatpush.bf16.msra.mxu0 %v1787
    %1849 = vmatpush.bf16.msra.mxu0 %v1783
    %1850 = vmatpush.bf16.msra.mxu0 %v1779
    %1851 = vmatmul.bf16.gmra.mxu0 %v1650
    %v1852 = vpop.f32.mrf.mxu0
    %v1853 = vadd.f32 0.0, %v1852
    %v1854 = vpop.f32.mrf.mxu0
    %1855 = vdwg.mxu0
    %1856 = vmatpush.bf16.msra.mxu0 %v1808
    %1857 = vmatpush.bf16.msra.mxu0 %v1804
    %1858 = vmatpush.bf16.msra.mxu0 %v1800
    %1859 = vmatpush.bf16.msra.mxu0 %v1796
    %1860 = vmatpush.bf16.msra.mxu0 %v1792
    %1861 = vmatpush.bf16.msra.mxu0 %v1788
    %1862 = vmatpush.bf16.msra.mxu0 %v1784
    %1863 = vmatpush.bf16.msra.mxu0 %v1780
    %1864 = vmatmul.bf16.gmra.mxu0 %v1650
    %v1865 = vpop.f32.mrf.mxu0
    %v1866 = vadd.f32 0.0, %v1865
    %v1867 = vpop.f32.mrf.mxu0
    %1868 = vdwg.mxu0
    %1869 = vmatpush.bf16.msra.mxu0 %v1809
    %1870 = vmatpush.bf16.msra.mxu0 %v1805
    %1871 = vmatpush.bf16.msra.mxu0 %v1801
    %1872 = vmatpush.bf16.msra.mxu0 %v1797
    %1873 = vmatpush.bf16.msra.mxu0 %v1793
    %1874 = vmatpush.bf16.msra.mxu0 %v1789
    %1875 = vmatpush.bf16.msra.mxu0 %v1785
    %1876 = vmatpush.bf16.msra.mxu0 %v1781
    %1877 = vmatmul.bf16.gmra.mxu0 %v1650
    %v1878 = vpop.f32.mrf.mxu0
    %v1879 = vadd.f32 0.0, %v1878
    %v1880 = vpop.f32.mrf.mxu0
    %1881 = vdwg.mxu0
    %1882 = vmatpush.bf16.msra.mxu0 %v1810
    %1883 = vmatpush.bf16.msra.mxu0 %v1806
    %1884 = vmatpush.bf16.msra.mxu0 %v1802
    %1885 = vmatpush.bf16.msra.mxu0 %v1798
    %1886 = vmatpush.bf16.msra.mxu0 %v1794
    %1887 = vmatpush.bf16.msra.mxu0 %v1790
    %1888 = vmatpush.bf16.msra.mxu0 %v1786
    %1889 = vmatpush.bf16.msra.mxu0 %v1782
    %1890 = vmatmul.bf16.gmra.mxu0 %v1650
    %v1891 = vpop.f32.mrf.mxu0
    %v1892 = vadd.f32 0.0, %v1891
    %v1893 = vpop.f32.mrf.mxu0
    %1894 = vdwg.mxu0
    %v1895 = vadd.f32 %v1646, %v1853
    %v1896 = vadd.f32 %v1647, %v1866
    %v1897 = vadd.f32 %v1648, %v1879
    %v1898 = vadd.f32 %v1649, %v1892
    %v1899 = vmul.f32 %v1895, 0.5
    %v1900 = vmul.f32 %v1896, 0.5
    %v1901 = vmul.f32 %v1897, 0.5
    %v1902 = vtanh.pop %v1899
    %v1903 = vtanh.pop %v1900
    %v1904 = vtanh.pop %v1901
    %v1905 = vmul.f32 %v1902, 0.5
    %v1906 = vmul.f32 %v1903, 0.5
    %v1907 = vmul.f32 %v1904, 0.5
    %v1908 = vadd.f32 %v1905, 0.5
    %v1909 = vadd.f32 %v1906, 0.5
    %v1910 = vadd.f32 %v1907, 0.5
    %v1911 = vtanh.pop %v1898
    %v1912 = vmul.f32 %v1909, %v1370
    %v1913 = vmul.f32 %v1908, %v1911
    %v1914 = vadd.f32 %v1912, %v1913
    %v1915 = vtanh.pop %v1914
    %v1916 = vmul.f32 %v1910, %v1915
    %1917 = vst [vmem:[#allocation4 + $0x10] sm:$0xff] %v1916
    %v1918 = vld [vmem:[#allocation3 + $0xa0] sm:$0xff]
    %v1919 = vld [vmem:[#allocation3 + $0xa8] sm:$0xff]
    %v1920 = vld [vmem:[#allocation3 + $0xb0] sm:$0xff]
    %v1921 = vld [vmem:[#allocation3 + $0xb8] sm:$0xff]
    %v1922 = vpack.c.bf16 %v1644, %v1644
    %v1923 = vld [vmem:[#allocation11] sm:$0xff]
    %v1924 = vld [vmem:[#allocation11 + $0x8] sm:$0xff]
    %v1925 = vld [vmem:[#allocation11 + $0x10] sm:$0xff]
    %v1926 = vld [vmem:[#allocation11 + $0x18] sm:$0xff]
    %v1927 = vld [vmem:[#allocation11 + $0x20] sm:$0xff]
    %v1928 = vld [vmem:[#allocation11 + $0x28] sm:$0xff]
    %v1929 = vld [vmem:[#allocation11 + $0x30] sm:$0xff]
    %v1930 = vld [vmem:[#allocation11 + $0x38] sm:$0xff]
    %v1931 = vld [vmem:[#allocation11 + $0x40] sm:$0xff]
    %v1932 = vld [vmem:[#allocation11 + $0x48] sm:$0xff]
    %v1933 = vld [vmem:[#allocation11 + $0x50] sm:$0xff]
    %v1934 = vld [vmem:[#allocation11 + $0x58] sm:$0xff]
    %v1935 = vld [vmem:[#allocation11 + $0x60] sm:$0xff]
    %v1936 = vld [vmem:[#allocation11 + $0x68] sm:$0xff]
    %v1937 = vld [vmem:[#allocation11 + $0x70] sm:$0xff]
    %v1938 = vld [vmem:[#allocation11 + $0x78] sm:$0xff]
    %v1939 = vld [vmem:[#allocation11 + $0x80] sm:$0xff]
    %v1940 = vld [vmem:[#allocation11 + $0x88] sm:$0xff]
    %v1941 = vld [vmem:[#allocation11 + $0x90] sm:$0xff]
    %v1942 = vld [vmem:[#allocation11 + $0x98] sm:$0xff]
    %v1943 = vld [vmem:[#allocation11 + $0xa0] sm:$0xff]
    %v1944 = vld [vmem:[#allocation11 + $0xa8] sm:$0xff]
    %v1945 = vld [vmem:[#allocation11 + $0xb0] sm:$0xff]
    %v1946 = vld [vmem:[#allocation11 + $0xb8] sm:$0xff]
    %v1947 = vld [vmem:[#allocation11 + $0xc0] sm:$0xff]
    %v1948 = vld [vmem:[#allocation11 + $0xc8] sm:$0xff]
    %v1949 = vld [vmem:[#allocation11 + $0xd0] sm:$0xff]
    %v1950 = vld [vmem:[#allocation11 + $0xd8] sm:$0xff]
    %v1951 = vld [vmem:[#allocation11 + $0xe0] sm:$0xff]
    %v1952 = vld [vmem:[#allocation11 + $0xe8] sm:$0xff]
    %v1953 = vld [vmem:[#allocation11 + $0xf0] sm:$0xff]
    %v1954 = vld [vmem:[#allocation11 + $0xf8] sm:$0xff]
    %v1987 = vunpack.c.l.b16 %v1923
    %v1988 = vunpack.c.h.b16 %v1923
    %v1989 = vunpack.c.l.b16 %v1924
    %v1990 = vunpack.c.h.b16 %v1924
    %v1991 = vunpack.c.l.b16 %v1925
    %v1992 = vunpack.c.h.b16 %v1925
    %v1993 = vunpack.c.l.b16 %v1926
    %v1994 = vunpack.c.h.b16 %v1926
    %v1995 = vunpack.c.l.b16 %v1927
    %v1996 = vunpack.c.h.b16 %v1927
    %v1997 = vunpack.c.l.b16 %v1928
    %v1998 = vunpack.c.h.b16 %v1928
    %v1999 = vunpack.c.l.b16 %v1929
    %v2000 = vunpack.c.h.b16 %v1929
    %v2001 = vunpack.c.l.b16 %v1930
    %v2002 = vunpack.c.h.b16 %v1930
    %v2003 = vunpack.c.l.b16 %v1931
    %v2004 = vunpack.c.h.b16 %v1931
    %v2005 = vunpack.c.l.b16 %v1932
    %v2006 = vunpack.c.h.b16 %v1932
    %v2007 = vunpack.c.l.b16 %v1933
    %v2008 = vunpack.c.h.b16 %v1933
    %v2009 = vunpack.c.l.b16 %v1934
    %v2010 = vunpack.c.h.b16 %v1934
    %v2011 = vunpack.c.l.b16 %v1935
    %v2012 = vunpack.c.h.b16 %v1935
    %v2013 = vunpack.c.l.b16 %v1936
    %v2014 = vunpack.c.h.b16 %v1936
    %v2015 = vunpack.c.l.b16 %v1937
    %v2016 = vunpack.c.h.b16 %v1937
    %v2017 = vunpack.c.l.b16 %v1938
    %v2018 = vunpack.c.h.b16 %v1938
    %v2019 = vunpack.c.l.b16 %v1939
    %v2020 = vunpack.c.h.b16 %v1939
    %v2021 = vunpack.c.l.b16 %v1940
    %v2022 = vunpack.c.h.b16 %v1940
    %v2023 = vunpack.c.l.b16 %v1941
    %v2024 = vunpack.c.h.b16 %v1941
    %v2025 = vunpack.c.l.b16 %v1942
    %v2026 = vunpack.c.h.b16 %v1942
    %v2027 = vunpack.c.l.b16 %v1943
    %v2028 = vunpack.c.h.b16 %v1943
    %v2029 = vunpack.c.l.b16 %v1944
    %v2030 = vunpack.c.h.b16 %v1944
    %v2031 = vunpack.c.l.b16 %v1945
    %v2032 = vunpack.c.h.b16 %v1945
    %v2033 = vunpack.c.l.b16 %v1946
    %v2034 = vunpack.c.h.b16 %v1946
    %v2035 = vunpack.c.l.b16 %v1947
    %v2036 = vunpack.c.h.b16 %v1947
    %v2037 = vunpack.c.l.b16 %v1948
    %v2038 = vunpack.c.h.b16 %v1948
    %v2039 = vunpack.c.l.b16 %v1949
    %v2040 = vunpack.c.h.b16 %v1949
    %v2041 = vunpack.c.l.b16 %v1950
    %v2042 = vunpack.c.h.b16 %v1950
    %v2043 = vunpack.c.l.b16 %v1951
    %v2044 = vunpack.c.h.b16 %v1951
    %v2045 = vunpack.c.l.b16 %v1952
    %v2046 = vunpack.c.h.b16 %v1952
    %v2047 = vunpack.c.l.b16 %v1953
    %v2048 = vunpack.c.h.b16 %v1953
    %v2049 = vunpack.c.l.b16 %v1954
    %v2050 = vunpack.c.h.b16 %v1954
    %v2051 = vpack.c.b16 %v1991, %v1987
    %v2052 = vpack.c.b16 %v1992, %v1988
    %v2053 = vpack.c.b16 %v1993, %v1989
    %v2054 = vpack.c.b16 %v1994, %v1990
    %v2055 = vpack.c.b16 %v1999, %v1995
    %v2056 = vpack.c.b16 %v2000, %v1996
    %v2057 = vpack.c.b16 %v2001, %v1997
    %v2058 = vpack.c.b16 %v2002, %v1998
    %v2059 = vpack.c.b16 %v2007, %v2003
    %v2060 = vpack.c.b16 %v2008, %v2004
    %v2061 = vpack.c.b16 %v2009, %v2005
    %v2062 = vpack.c.b16 %v2010, %v2006
    %v2063 = vpack.c.b16 %v2015, %v2011
    %v2064 = vpack.c.b16 %v2016, %v2012
    %v2065 = vpack.c.b16 %v2017, %v2013
    %v2066 = vpack.c.b16 %v2018, %v2014
    %v2067 = vpack.c.b16 %v2023, %v2019
    %v2068 = vpack.c.b16 %v2024, %v2020
    %v2069 = vpack.c.b16 %v2025, %v2021
    %v2070 = vpack.c.b16 %v2026, %v2022
    %v2071 = vpack.c.b16 %v2031, %v2027
    %v2072 = vpack.c.b16 %v2032, %v2028
    %v2073 = vpack.c.b16 %v2033, %v2029
    %v2074 = vpack.c.b16 %v2034, %v2030
    %v2075 = vpack.c.b16 %v2039, %v2035
    %v2076 = vpack.c.b16 %v2040, %v2036
    %v2077 = vpack.c.b16 %v2041, %v2037
    %v2078 = vpack.c.b16 %v2042, %v2038
    %v2079 = vpack.c.b16 %v2047, %v2043
    %v2080 = vpack.c.b16 %v2048, %v2044
    %v2081 = vpack.c.b16 %v2049, %v2045
    %v2082 = vpack.c.b16 %v2050, %v2046
    %2115 = vmatpush.bf16.msra.mxu0 %v2079
    %2116 = vmatpush.bf16.msra.mxu0 %v2075
    %2117 = vmatpush.bf16.msra.mxu0 %v2071
    %2118 = vmatpush.bf16.msra.mxu0 %v2067
    %2119 = vmatpush.bf16.msra.mxu0 %v2063
    %2120 = vmatpush.bf16.msra.mxu0 %v2059
    %2121 = vmatpush.bf16.msra.mxu0 %v2055
    %2122 = vmatpush.bf16.msra.mxu0 %v2051
    %2123 = vmatmul.bf16.gmra.mxu0 %v1922
    %v2124 = vpop.f32.mrf.mxu0
    %v2125 = vadd.f32 0.0, %v2124
    %v2126 = vpop.f32.mrf.mxu0
    %2127 = vdwg.mxu0
    %2128 = vmatpush.bf16.msra.mxu0 %v2080
    %2129 = vmatpush.bf16.msra.mxu0 %v2076
    %2130 = vmatpush.bf16.msra.mxu0 %v2072
    %2131 = vmatpush.bf16.msra.mxu0 %v2068
    %2132 = vmatpush.bf16.msra.mxu0 %v2064
    %2133 = vmatpush.bf16.msra.mxu0 %v2060
    %2134 = vmatpush.bf16.msra.mxu0 %v2056
    %2135 = vmatpush.bf16.msra.mxu0 %v2052
    %2136 = vmatmul.bf16.gmra.mxu0 %v1922
    %v2137 = vpop.f32.mrf.mxu0
    %v2138 = vadd.f32 0.0, %v2137
    %v2139 = vpop.f32.mrf.mxu0
    %2140 = vdwg.mxu0
    %2141 = vmatpush.bf16.msra.mxu0 %v2081
    %2142 = vmatpush.bf16.msra.mxu0 %v2077
    %2143 = vmatpush.bf16.msra.mxu0 %v2073
    %2144 = vmatpush.bf16.msra.mxu0 %v2069
    %2145 = vmatpush.bf16.msra.mxu0 %v2065
    %2146 = vmatpush.bf16.msra.mxu0 %v2061
    %2147 = vmatpush.bf16.msra.mxu0 %v2057
    %2148 = vmatpush.bf16.msra.mxu0 %v2053
    %2149 = vmatmul.bf16.gmra.mxu0 %v1922
    %v2150 = vpop.f32.mrf.mxu0
    %v2151 = vadd.f32 0.0, %v2150
    %v2152 = vpop.f32.mrf.mxu0
    %2153 = vdwg.mxu0
    %2154 = vmatpush.bf16.msra.mxu0 %v2082
    %2155 = vmatpush.bf16.msra.mxu0 %v2078
    %2156 = vmatpush.bf16.msra.mxu0 %v2074
    %2157 = vmatpush.bf16.msra.mxu0 %v2070
    %2158 = vmatpush.bf16.msra.mxu0 %v2066
    %2159 = vmatpush.bf16.msra.mxu0 %v2062
    %2160 = vmatpush.bf16.msra.mxu0 %v2058
    %2161 = vmatpush.bf16.msra.mxu0 %v2054
    %2162 = vmatmul.bf16.gmra.mxu0 %v1922
    %v2163 = vpop.f32.mrf.mxu0
    %v2164 = vadd.f32 0.0, %v2163
    %v2165 = vpop.f32.mrf.mxu0
    %2166 = vdwg.mxu0
    %v2167 = vadd.f32 %v1918, %v2125
    %v2168 = vadd.f32 %v1919, %v2138
    %v2169 = vadd.f32 %v1920, %v2151
    %v2170 = vadd.f32 %v1921, %v2164
    %v2171 = vmul.f32 %v2167, 0.5
    %v2172 = vmul.f32 %v2168, 0.5
    %v2173 = vmul.f32 %v2169, 0.5
    %v2174 = vtanh.pop %v2171
    %v2175 = vtanh.pop %v2172
    %v2176 = vtanh.pop %v2173
    %v2177 = vmul.f32 %v2174, 0.5
    %v2178 = vmul.f32 %v2175, 0.5
    %v2179 = vmul.f32 %v2176, 0.5
    %v2180 = vadd.f32 %v2177, 0.5
    %v2181 = vadd.f32 %v2178, 0.5
    %v2182 = vadd.f32 %v2179, 0.5
    %v2183 = vtanh.pop %v2170
    %v2184 = vmul.f32 %v2181, %v1642
    %v2185 = vmul.f32 %v2180, %v2183
    %v2186 = vadd.f32 %v2184, %v2185
    %v2187 = vtanh.pop %v2186
    %v2188 = vmul.f32 %v2182, %v2187
    %2189 = vst [vmem:[#allocation5 + $0x28] sm:$0xff] %v2188
    %v2190 = vld [vmem:[#allocation2 + $0x60] sm:$0xff]
    %v2191 = vld [vmem:[#allocation2 + $0x68] sm:$0xff]
    %v2192 = vld [vmem:[#allocation2 + $0x70] sm:$0xff]
    %v2193 = vld [vmem:[#allocation2 + $0x78] sm:$0xff]
    %v2194 = vpack.c.bf16 %v1916, %v1916
    %v2195 = vld [vmem:[#allocation9] sm:$0xff]
    %v2196 = vld [vmem:[#allocation9 + $0x8] sm:$0xff]
    %v2197 = vld [vmem:[#allocation9 + $0x10] sm:$0xff]
    %v2198 = vld [vmem:[#allocation9 + $0x18] sm:$0xff]
    %v2199 = vld [vmem:[#allocation9 + $0x20] sm:$0xff]
    %v2200 = vld [vmem:[#allocation9 + $0x28] sm:$0xff]
    %v2201 = vld [vmem:[#allocation9 + $0x30] sm:$0xff]
    %v2202 = vld [vmem:[#allocation9 + $0x38] sm:$0xff]
    %v2203 = vld [vmem:[#allocation9 + $0x40] sm:$0xff]
    %v2204 = vld [vmem:[#allocation9 + $0x48] sm:$0xff]
    %v2205 = vld [vmem:[#allocation9 + $0x50] sm:$0xff]
    %v2206 = vld [vmem:[#allocation9 + $0x58] sm:$0xff]
    %v2207 = vld [vmem:[#allocation9 + $0x60] sm:$0xff]
    %v2208 = vld [vmem:[#allocation9 + $0x68] sm:$0xff]
    %v2209 = vld [vmem:[#allocation9 + $0x70] sm:$0xff]
    %v2210 = vld [vmem:[#allocation9 + $0x78] sm:$0xff]
    %v2211 = vld [vmem:[#allocation9 + $0x80] sm:$0xff]
    %v2212 = vld [vmem:[#allocation9 + $0x88] sm:$0xff]
    %v2213 = vld [vmem:[#allocation9 + $0x90] sm:$0xff]
    %v2214 = vld [vmem:[#allocation9 + $0x98] sm:$0xff]
    %v2215 = vld [vmem:[#allocation9 + $0xa0] sm:$0xff]
    %v2216 = vld [vmem:[#allocation9 + $0xa8] sm:$0xff]
    %v2217 = vld [vmem:[#allocation9 + $0xb0] sm:$0xff]
    %v2218 = vld [vmem:[#allocation9 + $0xb8] sm:$0xff]
    %v2219 = vld [vmem:[#allocation9 + $0xc0] sm:$0xff]
    %v2220 = vld [vmem:[#allocation9 + $0xc8] sm:$0xff]
    %v2221 = vld [vmem:[#allocation9 + $0xd0] sm:$0xff]
    %v2222 = vld [vmem:[#allocation9 + $0xd8] sm:$0xff]
    %v2223 = vld [vmem:[#allocation9 + $0xe0] sm:$0xff]
    %v2224 = vld [vmem:[#allocation9 + $0xe8] sm:$0xff]
    %v2225 = vld [vmem:[#allocation9 + $0xf0] sm:$0xff]
    %v2226 = vld [vmem:[#allocation9 + $0xf8] sm:$0xff]
    %v2259 = vunpack.c.l.b16 %v2195
    %v2260 = vunpack.c.h.b16 %v2195
    %v2261 = vunpack.c.l.b16 %v2196
    %v2262 = vunpack.c.h.b16 %v2196
    %v2263 = vunpack.c.l.b16 %v2197
    %v2264 = vunpack.c.h.b16 %v2197
    %v2265 = vunpack.c.l.b16 %v2198
    %v2266 = vunpack.c.h.b16 %v2198
    %v2267 = vunpack.c.l.b16 %v2199
    %v2268 = vunpack.c.h.b16 %v2199
    %v2269 = vunpack.c.l.b16 %v2200
    %v2270 = vunpack.c.h.b16 %v2200
    %v2271 = vunpack.c.l.b16 %v2201
    %v2272 = vunpack.c.h.b16 %v2201
    %v2273 = vunpack.c.l.b16 %v2202
    %v2274 = vunpack.c.h.b16 %v2202
    %v2275 = vunpack.c.l.b16 %v2203
    %v2276 = vunpack.c.h.b16 %v2203
    %v2277 = vunpack.c.l.b16 %v2204
    %v2278 = vunpack.c.h.b16 %v2204
    %v2279 = vunpack.c.l.b16 %v2205
    %v2280 = vunpack.c.h.b16 %v2205
    %v2281 = vunpack.c.l.b16 %v2206
    %v2282 = vunpack.c.h.b16 %v2206
    %v2283 = vunpack.c.l.b16 %v2207
    %v2284 = vunpack.c.h.b16 %v2207
    %v2285 = vunpack.c.l.b16 %v2208
    %v2286 = vunpack.c.h.b16 %v2208
    %v2287 = vunpack.c.l.b16 %v2209
    %v2288 = vunpack.c.h.b16 %v2209
    %v2289 = vunpack.c.l.b16 %v2210
    %v2290 = vunpack.c.h.b16 %v2210
    %v2291 = vunpack.c.l.b16 %v2211
    %v2292 = vunpack.c.h.b16 %v2211
    %v2293 = vunpack.c.l.b16 %v2212
    %v2294 = vunpack.c.h.b16 %v2212
    %v2295 = vunpack.c.l.b16 %v2213
    %v2296 = vunpack.c.h.b16 %v2213
    %v2297 = vunpack.c.l.b16 %v2214
    %v2298 = vunpack.c.h.b16 %v2214
    %v2299 = vunpack.c.l.b16 %v2215
    %v2300 = vunpack.c.h.b16 %v2215
    %v2301 = vunpack.c.l.b16 %v2216
    %v2302 = vunpack.c.h.b16 %v2216
    %v2303 = vunpack.c.l.b16 %v2217
    %v2304 = vunpack.c.h.b16 %v2217
    %v2305 = vunpack.c.l.b16 %v2218
    %v2306 = vunpack.c.h.b16 %v2218
    %v2307 = vunpack.c.l.b16 %v2219
    %v2308 = vunpack.c.h.b16 %v2219
    %v2309 = vunpack.c.l.b16 %v2220
    %v2310 = vunpack.c.h.b16 %v2220
    %v2311 = vunpack.c.l.b16 %v2221
    %v2312 = vunpack.c.h.b16 %v2221
    %v2313 = vunpack.c.l.b16 %v2222
    %v2314 = vunpack.c.h.b16 %v2222
    %v2315 = vunpack.c.l.b16 %v2223
    %v2316 = vunpack.c.h.b16 %v2223
    %v2317 = vunpack.c.l.b16 %v2224
    %v2318 = vunpack.c.h.b16 %v2224
    %v2319 = vunpack.c.l.b16 %v2225
    %v2320 = vunpack.c.h.b16 %v2225
    %v2321 = vunpack.c.l.b16 %v2226
    %v2322 = vunpack.c.h.b16 %v2226
    %v2323 = vpack.c.b16 %v2263, %v2259
    %v2324 = vpack.c.b16 %v2264, %v2260
    %v2325 = vpack.c.b16 %v2265, %v2261
    %v2326 = vpack.c.b16 %v2266, %v2262
    %v2327 = vpack.c.b16 %v2271, %v2267
    %v2328 = vpack.c.b16 %v2272, %v2268
    %v2329 = vpack.c.b16 %v2273, %v2269
    %v2330 = vpack.c.b16 %v2274, %v2270
    %v2331 = vpack.c.b16 %v2279, %v2275
    %v2332 = vpack.c.b16 %v2280, %v2276
    %v2333 = vpack.c.b16 %v2281, %v2277
    %v2334 = vpack.c.b16 %v2282, %v2278
    %v2335 = vpack.c.b16 %v2287, %v2283
    %v2336 = vpack.c.b16 %v2288, %v2284
    %v2337 = vpack.c.b16 %v2289, %v2285
    %v2338 = vpack.c.b16 %v2290, %v2286
    %v2339 = vpack.c.b16 %v2295, %v2291
    %v2340 = vpack.c.b16 %v2296, %v2292
    %v2341 = vpack.c.b16 %v2297, %v2293
    %v2342 = vpack.c.b16 %v2298, %v2294
    %v2343 = vpack.c.b16 %v2303, %v2299
    %v2344 = vpack.c.b16 %v2304, %v2300
    %v2345 = vpack.c.b16 %v2305, %v2301
    %v2346 = vpack.c.b16 %v2306, %v2302
    %v2347 = vpack.c.b16 %v2311, %v2307
    %v2348 = vpack.c.b16 %v2312, %v2308
    %v2349 = vpack.c.b16 %v2313, %v2309
    %v2350 = vpack.c.b16 %v2314, %v2310
    %v2351 = vpack.c.b16 %v2319, %v2315
    %v2352 = vpack.c.b16 %v2320, %v2316
    %v2353 = vpack.c.b16 %v2321, %v2317
    %v2354 = vpack.c.b16 %v2322, %v2318
    %2387 = vmatpush.bf16.msra.mxu0 %v2351
    %2388 = vmatpush.bf16.msra.mxu0 %v2347
    %2389 = vmatpush.bf16.msra.mxu0 %v2343
    %2390 = vmatpush.bf16.msra.mxu0 %v2339
    %2391 = vmatpush.bf16.msra.mxu0 %v2335
    %2392 = vmatpush.bf16.msra.mxu0 %v2331
    %2393 = vmatpush.bf16.msra.mxu0 %v2327
    %2394 = vmatpush.bf16.msra.mxu0 %v2323
    %2395 = vmatmul.bf16.gmra.mxu0 %v2194
    %v2396 = vpop.f32.mrf.mxu0
    %v2397 = vadd.f32 0.0, %v2396
    %v2398 = vpop.f32.mrf.mxu0
    %2399 = vdwg.mxu0
    %2400 = vmatpush.bf16.msra.mxu0 %v2352
    %2401 = vmatpush.bf16.msra.mxu0 %v2348
    %2402 = vmatpush.bf16.msra.mxu0 %v2344
    %2403 = vmatpush.bf16.msra.mxu0 %v2340
    %2404 = vmatpush.bf16.msra.mxu0 %v2336
    %2405 = vmatpush.bf16.msra.mxu0 %v2332
    %2406 = vmatpush.bf16.msra.mxu0 %v2328
    %2407 = vmatpush.bf16.msra.mxu0 %v2324
    %2408 = vmatmul.bf16.gmra.mxu0 %v2194
    %v2409 = vpop.f32.mrf.mxu0
    %v2410 = vadd.f32 0.0, %v2409
    %v2411 = vpop.f32.mrf.mxu0
    %2412 = vdwg.mxu0
    %2413 = vmatpush.bf16.msra.mxu0 %v2353
    %2414 = vmatpush.bf16.msra.mxu0 %v2349
    %2415 = vmatpush.bf16.msra.mxu0 %v2345
    %2416 = vmatpush.bf16.msra.mxu0 %v2341
    %2417 = vmatpush.bf16.msra.mxu0 %v2337
    %2418 = vmatpush.bf16.msra.mxu0 %v2333
    %2419 = vmatpush.bf16.msra.mxu0 %v2329
    %2420 = vmatpush.bf16.msra.mxu0 %v2325
    %2421 = vmatmul.bf16.gmra.mxu0 %v2194
    %v2422 = vpop.f32.mrf.mxu0
    %v2423 = vadd.f32 0.0, %v2422
    %v2424 = vpop.f32.mrf.mxu0
    %2425 = vdwg.mxu0
    %2426 = vmatpush.bf16.msra.mxu0 %v2354
    %2427 = vmatpush.bf16.msra.mxu0 %v2350
    %2428 = vmatpush.bf16.msra.mxu0 %v2346
    %2429 = vmatpush.bf16.msra.mxu0 %v2342
    %2430 = vmatpush.bf16.msra.mxu0 %v2338
    %2431 = vmatpush.bf16.msra.mxu0 %v2334
    %2432 = vmatpush.bf16.msra.mxu0 %v2330
    %2433 = vmatpush.bf16.msra.mxu0 %v2326
    %2434 = vmatmul.bf16.gmra.mxu0 %v2194
    %v2435 = vpop.f32.mrf.mxu0
    %v2436 = vadd.f32 0.0, %v2435
    %v2437 = vpop.f32.mrf.mxu0
    %2438 = vdwg.mxu0
    %v2439 = vadd.f32 %v2190, %v2397
    %v2440 = vadd.f32 %v2191, %v2410
    %v2441 = vadd.f32 %v2192, %v2423
    %v2442 = vadd.f32 %v2193, %v2436
    %v2443 = vmul.f32 %v2439, 0.5
    %v2444 = vmul.f32 %v2440, 0.5
    %v2445 = vmul.f32 %v2441, 0.5
    %v2446 = vtanh.pop %v2443
    %v2447 = vtanh.pop %v2444
    %v2448 = vtanh.pop %v2445
    %v2449 = vmul.f32 %v2446, 0.5
    %v2450 = vmul.f32 %v2447, 0.5
    %v2451 = vmul.f32 %v2448, 0.5
    %v2452 = vadd.f32 %v2449, 0.5
    %v2453 = vadd.f32 %v2450, 0.5
    %v2454 = vadd.f32 %v2451, 0.5
    %v2455 = vtanh.pop %v2442
    %v2456 = vmul.f32 %v2453, %v1914
    %v2457 = vmul.f32 %v2452, %v2455
    %v2458 = vadd.f32 %v2456, %v2457
    %v2459 = vtanh.pop %v2458
    %v2460 = vmul.f32 %v2454, %v2459
    %2461 = vst [vmem:[#allocation4 + $0x18] sm:$0xff] %v2460
    %v2462 = vld [vmem:[#allocation3 + $0x80] sm:$0xff]
    %v2463 = vld [vmem:[#allocation3 + $0x88] sm:$0xff]
    %v2464 = vld [vmem:[#allocation3 + $0x90] sm:$0xff]
    %v2465 = vld [vmem:[#allocation3 + $0x98] sm:$0xff]
    %v2466 = vpack.c.bf16 %v2188, %v2188
    %v2467 = vld [vmem:[#allocation11] sm:$0xff]
    %v2468 = vld [vmem:[#allocation11 + $0x8] sm:$0xff]
    %v2469 = vld [vmem:[#allocation11 + $0x10] sm:$0xff]
    %v2470 = vld [vmem:[#allocation11 + $0x18] sm:$0xff]
    %v2471 = vld [vmem:[#allocation11 + $0x20] sm:$0xff]
    %v2472 = vld [vmem:[#allocation11 + $0x28] sm:$0xff]
    %v2473 = vld [vmem:[#allocation11 + $0x30] sm:$0xff]
    %v2474 = vld [vmem:[#allocation11 + $0x38] sm:$0xff]
    %v2475 = vld [vmem:[#allocation11 + $0x40] sm:$0xff]
    %v2476 = vld [vmem:[#allocation11 + $0x48] sm:$0xff]
    %v2477 = vld [vmem:[#allocation11 + $0x50] sm:$0xff]
    %v2478 = vld [vmem:[#allocation11 + $0x58] sm:$0xff]
    %v2479 = vld [vmem:[#allocation11 + $0x60] sm:$0xff]
    %v2480 = vld [vmem:[#allocation11 + $0x68] sm:$0xff]
    %v2481 = vld [vmem:[#allocation11 + $0x70] sm:$0xff]
    %v2482 = vld [vmem:[#allocation11 + $0x78] sm:$0xff]
    %v2483 = vld [vmem:[#allocation11 + $0x80] sm:$0xff]
    %v2484 = vld [vmem:[#allocation11 + $0x88] sm:$0xff]
    %v2485 = vld [vmem:[#allocation11 + $0x90] sm:$0xff]
    %v2486 = vld [vmem:[#allocation11 + $0x98] sm:$0xff]
    %v2487 = vld [vmem:[#allocation11 + $0xa0] sm:$0xff]
    %v2488 = vld [vmem:[#allocation11 + $0xa8] sm:$0xff]
    %v2489 = vld [vmem:[#allocation11 + $0xb0] sm:$0xff]
    %v2490 = vld [vmem:[#allocation11 + $0xb8] sm:$0xff]
    %v2491 = vld [vmem:[#allocation11 + $0xc0] sm:$0xff]
    %v2492 = vld [vmem:[#allocation11 + $0xc8] sm:$0xff]
    %v2493 = vld [vmem:[#allocation11 + $0xd0] sm:$0xff]
    %v2494 = vld [vmem:[#allocation11 + $0xd8] sm:$0xff]
    %v2495 = vld [vmem:[#allocation11 + $0xe0] sm:$0xff]
    %v2496 = vld [vmem:[#allocation11 + $0xe8] sm:$0xff]
    %v2497 = vld [vmem:[#allocation11 + $0xf0] sm:$0xff]
    %v2498 = vld [vmem:[#allocation11 + $0xf8] sm:$0xff]
    %v2531 = vunpack.c.l.b16 %v2467
    %v2532 = vunpack.c.h.b16 %v2467
    %v2533 = vunpack.c.l.b16 %v2468
    %v2534 = vunpack.c.h.b16 %v2468
    %v2535 = vunpack.c.l.b16 %v2469
    %v2536 = vunpack.c.h.b16 %v2469
    %v2537 = vunpack.c.l.b16 %v2470
    %v2538 = vunpack.c.h.b16 %v2470
    %v2539 = vunpack.c.l.b16 %v2471
    %v2540 = vunpack.c.h.b16 %v2471
    %v2541 = vunpack.c.l.b16 %v2472
    %v2542 = vunpack.c.h.b16 %v2472
    %v2543 = vunpack.c.l.b16 %v2473
    %v2544 = vunpack.c.h.b16 %v2473
    %v2545 = vunpack.c.l.b16 %v2474
    %v2546 = vunpack.c.h.b16 %v2474
    %v2547 = vunpack.c.l.b16 %v2475
    %v2548 = vunpack.c.h.b16 %v2475
    %v2549 = vunpack.c.l.b16 %v2476
    %v2550 = vunpack.c.h.b16 %v2476
    %v2551 = vunpack.c.l.b16 %v2477
    %v2552 = vunpack.c.h.b16 %v2477
    %v2553 = vunpack.c.l.b16 %v2478
    %v2554 = vunpack.c.h.b16 %v2478
    %v2555 = vunpack.c.l.b16 %v2479
    %v2556 = vunpack.c.h.b16 %v2479
    %v2557 = vunpack.c.l.b16 %v2480
    %v2558 = vunpack.c.h.b16 %v2480
    %v2559 = vunpack.c.l.b16 %v2481
    %v2560 = vunpack.c.h.b16 %v2481
    %v2561 = vunpack.c.l.b16 %v2482
    %v2562 = vunpack.c.h.b16 %v2482
    %v2563 = vunpack.c.l.b16 %v2483
    %v2564 = vunpack.c.h.b16 %v2483
    %v2565 = vunpack.c.l.b16 %v2484
    %v2566 = vunpack.c.h.b16 %v2484
    %v2567 = vunpack.c.l.b16 %v2485
    %v2568 = vunpack.c.h.b16 %v2485
    %v2569 = vunpack.c.l.b16 %v2486
    %v2570 = vunpack.c.h.b16 %v2486
    %v2571 = vunpack.c.l.b16 %v2487
    %v2572 = vunpack.c.h.b16 %v2487
    %v2573 = vunpack.c.l.b16 %v2488
    %v2574 = vunpack.c.h.b16 %v2488
    %v2575 = vunpack.c.l.b16 %v2489
    %v2576 = vunpack.c.h.b16 %v2489
    %v2577 = vunpack.c.l.b16 %v2490
    %v2578 = vunpack.c.h.b16 %v2490
    %v2579 = vunpack.c.l.b16 %v2491
    %v2580 = vunpack.c.h.b16 %v2491
    %v2581 = vunpack.c.l.b16 %v2492
    %v2582 = vunpack.c.h.b16 %v2492
    %v2583 = vunpack.c.l.b16 %v2493
    %v2584 = vunpack.c.h.b16 %v2493
    %v2585 = vunpack.c.l.b16 %v2494
    %v2586 = vunpack.c.h.b16 %v2494
    %v2587 = vunpack.c.l.b16 %v2495
    %v2588 = vunpack.c.h.b16 %v2495
    %v2589 = vunpack.c.l.b16 %v2496
    %v2590 = vunpack.c.h.b16 %v2496
    %v2591 = vunpack.c.l.b16 %v2497
    %v2592 = vunpack.c.h.b16 %v2497
    %v2593 = vunpack.c.l.b16 %v2498
    %v2594 = vunpack.c.h.b16 %v2498
    %v2595 = vpack.c.b16 %v2535, %v2531
    %v2596 = vpack.c.b16 %v2536, %v2532
    %v2597 = vpack.c.b16 %v2537, %v2533
    %v2598 = vpack.c.b16 %v2538, %v2534
    %v2599 = vpack.c.b16 %v2543, %v2539
    %v2600 = vpack.c.b16 %v2544, %v2540
    %v2601 = vpack.c.b16 %v2545, %v2541
    %v2602 = vpack.c.b16 %v2546, %v2542
    %v2603 = vpack.c.b16 %v2551, %v2547
    %v2604 = vpack.c.b16 %v2552, %v2548
    %v2605 = vpack.c.b16 %v2553, %v2549
    %v2606 = vpack.c.b16 %v2554, %v2550
    %v2607 = vpack.c.b16 %v2559, %v2555
    %v2608 = vpack.c.b16 %v2560, %v2556
    %v2609 = vpack.c.b16 %v2561, %v2557
    %v2610 = vpack.c.b16 %v2562, %v2558
    %v2611 = vpack.c.b16 %v2567, %v2563
    %v2612 = vpack.c.b16 %v2568, %v2564
    %v2613 = vpack.c.b16 %v2569, %v2565
    %v2614 = vpack.c.b16 %v2570, %v2566
    %v2615 = vpack.c.b16 %v2575, %v2571
    %v2616 = vpack.c.b16 %v2576, %v2572
    %v2617 = vpack.c.b16 %v2577, %v2573
    %v2618 = vpack.c.b16 %v2578, %v2574
    %v2619 = vpack.c.b16 %v2583, %v2579
    %v2620 = vpack.c.b16 %v2584, %v2580
    %v2621 = vpack.c.b16 %v2585, %v2581
    %v2622 = vpack.c.b16 %v2586, %v2582
    %v2623 = vpack.c.b16 %v2591, %v2587
    %v2624 = vpack.c.b16 %v2592, %v2588
    %v2625 = vpack.c.b16 %v2593, %v2589
    %v2626 = vpack.c.b16 %v2594, %v2590
    %2659 = vmatpush.bf16.msra.mxu0 %v2623
    %2660 = vmatpush.bf16.msra.mxu0 %v2619
    %2661 = vmatpush.bf16.msra.mxu0 %v2615
    %2662 = vmatpush.bf16.msra.mxu0 %v2611
    %2663 = vmatpush.bf16.msra.mxu0 %v2607
    %2664 = vmatpush.bf16.msra.mxu0 %v2603
    %2665 = vmatpush.bf16.msra.mxu0 %v2599
    %2666 = vmatpush.bf16.msra.mxu0 %v2595
    %2667 = vmatmul.bf16.gmra.mxu0 %v2466
    %v2668 = vpop.f32.mrf.mxu0
    %v2669 = vadd.f32 0.0, %v2668
    %v2670 = vpop.f32.mrf.mxu0
    %2671 = vdwg.mxu0
    %2672 = vmatpush.bf16.msra.mxu0 %v2624
    %2673 = vmatpush.bf16.msra.mxu0 %v2620
    %2674 = vmatpush.bf16.msra.mxu0 %v2616
    %2675 = vmatpush.bf16.msra.mxu0 %v2612
    %2676 = vmatpush.bf16.msra.mxu0 %v2608
    %2677 = vmatpush.bf16.msra.mxu0 %v2604
    %2678 = vmatpush.bf16.msra.mxu0 %v2600
    %2679 = vmatpush.bf16.msra.mxu0 %v2596
    %2680 = vmatmul.bf16.gmra.mxu0 %v2466
    %v2681 = vpop.f32.mrf.mxu0
    %v2682 = vadd.f32 0.0, %v2681
    %v2683 = vpop.f32.mrf.mxu0
    %2684 = vdwg.mxu0
    %2685 = vmatpush.bf16.msra.mxu0 %v2625
    %2686 = vmatpush.bf16.msra.mxu0 %v2621
    %2687 = vmatpush.bf16.msra.mxu0 %v2617
    %2688 = vmatpush.bf16.msra.mxu0 %v2613
    %2689 = vmatpush.bf16.msra.mxu0 %v2609
    %2690 = vmatpush.bf16.msra.mxu0 %v2605
    %2691 = vmatpush.bf16.msra.mxu0 %v2601
    %2692 = vmatpush.bf16.msra.mxu0 %v2597
    %2693 = vmatmul.bf16.gmra.mxu0 %v2466
    %v2694 = vpop.f32.mrf.mxu0
    %v2695 = vadd.f32 0.0, %v2694
    %v2696 = vpop.f32.mrf.mxu0
    %2697 = vdwg.mxu0
    %2698 = vmatpush.bf16.msra.mxu0 %v2626
    %2699 = vmatpush.bf16.msra.mxu0 %v2622
    %2700 = vmatpush.bf16.msra.mxu0 %v2618
    %2701 = vmatpush.bf16.msra.mxu0 %v2614
    %2702 = vmatpush.bf16.msra.mxu0 %v2610
    %2703 = vmatpush.bf16.msra.mxu0 %v2606
    %2704 = vmatpush.bf16.msra.mxu0 %v2602
    %2705 = vmatpush.bf16.msra.mxu0 %v2598
    %2706 = vmatmul.bf16.gmra.mxu0 %v2466
    %v2707 = vpop.f32.mrf.mxu0
    %v2708 = vadd.f32 0.0, %v2707
    %v2709 = vpop.f32.mrf.mxu0
    %2710 = vdwg.mxu0
    %v2711 = vadd.f32 %v2462, %v2669
    %v2712 = vadd.f32 %v2463, %v2682
    %v2713 = vadd.f32 %v2464, %v2695
    %v2714 = vadd.f32 %v2465, %v2708
    %v2715 = vmul.f32 %v2711, 0.5
    %v2716 = vmul.f32 %v2712, 0.5
    %v2717 = vmul.f32 %v2713, 0.5
    %v2718 = vtanh.pop %v2715
    %v2719 = vtanh.pop %v2716
    %v2720 = vtanh.pop %v2717
    %v2721 = vmul.f32 %v2718, 0.5
    %v2722 = vmul.f32 %v2719, 0.5
    %v2723 = vmul.f32 %v2720, 0.5
    %v2724 = vadd.f32 %v2721, 0.5
    %v2725 = vadd.f32 %v2722, 0.5
    %v2726 = vadd.f32 %v2723, 0.5
    %v2727 = vtanh.pop %v2714
    %v2728 = vmul.f32 %v2725, %v2186
    %v2729 = vmul.f32 %v2724, %v2727
    %v2730 = vadd.f32 %v2728, %v2729
    %v2731 = vtanh.pop %v2730
    %v2732 = vmul.f32 %v2726, %v2731
    %2733 = vst [vmem:[#allocation5 + $0x20] sm:$0xff] %v2732
    %v2734 = vld [vmem:[#allocation2 + $0x80] sm:$0xff]
    %v2735 = vld [vmem:[#allocation2 + $0x88] sm:$0xff]
    %v2736 = vld [vmem:[#allocation2 + $0x90] sm:$0xff]
    %v2737 = vld [vmem:[#allocation2 + $0x98] sm:$0xff]
    %v2738 = vpack.c.bf16 %v2460, %v2460
    %v2739 = vld [vmem:[#allocation9] sm:$0xff]
    %v2740 = vld [vmem:[#allocation9 + $0x8] sm:$0xff]
    %v2741 = vld [vmem:[#allocation9 + $0x10] sm:$0xff]
    %v2742 = vld [vmem:[#allocation9 + $0x18] sm:$0xff]
    %v2743 = vld [vmem:[#allocation9 + $0x20] sm:$0xff]
    %v2744 = vld [vmem:[#allocation9 + $0x28] sm:$0xff]
    %v2745 = vld [vmem:[#allocation9 + $0x30] sm:$0xff]
    %v2746 = vld [vmem:[#allocation9 + $0x38] sm:$0xff]
    %v2747 = vld [vmem:[#allocation9 + $0x40] sm:$0xff]
    %v2748 = vld [vmem:[#allocation9 + $0x48] sm:$0xff]
    %v2749 = vld [vmem:[#allocation9 + $0x50] sm:$0xff]
    %v2750 = vld [vmem:[#allocation9 + $0x58] sm:$0xff]
    %v2751 = vld [vmem:[#allocation9 + $0x60] sm:$0xff]
    %v2752 = vld [vmem:[#allocation9 + $0x68] sm:$0xff]
    %v2753 = vld [vmem:[#allocation9 + $0x70] sm:$0xff]
    %v2754 = vld [vmem:[#allocation9 + $0x78] sm:$0xff]
    %v2755 = vld [vmem:[#allocation9 + $0x80] sm:$0xff]
    %v2756 = vld [vmem:[#allocation9 + $0x88] sm:$0xff]
    %v2757 = vld [vmem:[#allocation9 + $0x90] sm:$0xff]
    %v2758 = vld [vmem:[#allocation9 + $0x98] sm:$0xff]
    %v2759 = vld [vmem:[#allocation9 + $0xa0] sm:$0xff]
    %v2760 = vld [vmem:[#allocation9 + $0xa8] sm:$0xff]
    %v2761 = vld [vmem:[#allocation9 + $0xb0] sm:$0xff]
    %v2762 = vld [vmem:[#allocation9 + $0xb8] sm:$0xff]
    %v2763 = vld [vmem:[#allocation9 + $0xc0] sm:$0xff]
    %v2764 = vld [vmem:[#allocation9 + $0xc8] sm:$0xff]
    %v2765 = vld [vmem:[#allocation9 + $0xd0] sm:$0xff]
    %v2766 = vld [vmem:[#allocation9 + $0xd8] sm:$0xff]
    %v2767 = vld [vmem:[#allocation9 + $0xe0] sm:$0xff]
    %v2768 = vld [vmem:[#allocation9 + $0xe8] sm:$0xff]
    %v2769 = vld [vmem:[#allocation9 + $0xf0] sm:$0xff]
    %v2770 = vld [vmem:[#allocation9 + $0xf8] sm:$0xff]
    %v2803 = vunpack.c.l.b16 %v2739
    %v2804 = vunpack.c.h.b16 %v2739
    %v2805 = vunpack.c.l.b16 %v2740
    %v2806 = vunpack.c.h.b16 %v2740
    %v2807 = vunpack.c.l.b16 %v2741
    %v2808 = vunpack.c.h.b16 %v2741
    %v2809 = vunpack.c.l.b16 %v2742
    %v2810 = vunpack.c.h.b16 %v2742
    %v2811 = vunpack.c.l.b16 %v2743
    %v2812 = vunpack.c.h.b16 %v2743
    %v2813 = vunpack.c.l.b16 %v2744
    %v2814 = vunpack.c.h.b16 %v2744
    %v2815 = vunpack.c.l.b16 %v2745
    %v2816 = vunpack.c.h.b16 %v2745
    %v2817 = vunpack.c.l.b16 %v2746
    %v2818 = vunpack.c.h.b16 %v2746
    %v2819 = vunpack.c.l.b16 %v2747
    %v2820 = vunpack.c.h.b16 %v2747
    %v2821 = vunpack.c.l.b16 %v2748
    %v2822 = vunpack.c.h.b16 %v2748
    %v2823 = vunpack.c.l.b16 %v2749
    %v2824 = vunpack.c.h.b16 %v2749
    %v2825 = vunpack.c.l.b16 %v2750
    %v2826 = vunpack.c.h.b16 %v2750
    %v2827 = vunpack.c.l.b16 %v2751
    %v2828 = vunpack.c.h.b16 %v2751
    %v2829 = vunpack.c.l.b16 %v2752
    %v2830 = vunpack.c.h.b16 %v2752
    %v2831 = vunpack.c.l.b16 %v2753
    %v2832 = vunpack.c.h.b16 %v2753
    %v2833 = vunpack.c.l.b16 %v2754
    %v2834 = vunpack.c.h.b16 %v2754
    %v2835 = vunpack.c.l.b16 %v2755
    %v2836 = vunpack.c.h.b16 %v2755
    %v2837 = vunpack.c.l.b16 %v2756
    %v2838 = vunpack.c.h.b16 %v2756
    %v2839 = vunpack.c.l.b16 %v2757
    %v2840 = vunpack.c.h.b16 %v2757
    %v2841 = vunpack.c.l.b16 %v2758
    %v2842 = vunpack.c.h.b16 %v2758
    %v2843 = vunpack.c.l.b16 %v2759
    %v2844 = vunpack.c.h.b16 %v2759
    %v2845 = vunpack.c.l.b16 %v2760
    %v2846 = vunpack.c.h.b16 %v2760
    %v2847 = vunpack.c.l.b16 %v2761
    %v2848 = vunpack.c.h.b16 %v2761
    %v2849 = vunpack.c.l.b16 %v2762
    %v2850 = vunpack.c.h.b16 %v2762
    %v2851 = vunpack.c.l.b16 %v2763
    %v2852 = vunpack.c.h.b16 %v2763
    %v2853 = vunpack.c.l.b16 %v2764
    %v2854 = vunpack.c.h.b16 %v2764
    %v2855 = vunpack.c.l.b16 %v2765
    %v2856 = vunpack.c.h.b16 %v2765
    %v2857 = vunpack.c.l.b16 %v2766
    %v2858 = vunpack.c.h.b16 %v2766
    %v2859 = vunpack.c.l.b16 %v2767
    %v2860 = vunpack.c.h.b16 %v2767
    %v2861 = vunpack.c.l.b16 %v2768
    %v2862 = vunpack.c.h.b16 %v2768
    %v2863 = vunpack.c.l.b16 %v2769
    %v2864 = vunpack.c.h.b16 %v2769
    %v2865 = vunpack.c.l.b16 %v2770
    %v2866 = vunpack.c.h.b16 %v2770
    %v2867 = vpack.c.b16 %v2807, %v2803
    %v2868 = vpack.c.b16 %v2808, %v2804
    %v2869 = vpack.c.b16 %v2809, %v2805
    %v2870 = vpack.c.b16 %v2810, %v2806
    %v2871 = vpack.c.b16 %v2815, %v2811
    %v2872 = vpack.c.b16 %v2816, %v2812
    %v2873 = vpack.c.b16 %v2817, %v2813
    %v2874 = vpack.c.b16 %v2818, %v2814
    %v2875 = vpack.c.b16 %v2823, %v2819
    %v2876 = vpack.c.b16 %v2824, %v2820
    %v2877 = vpack.c.b16 %v2825, %v2821
    %v2878 = vpack.c.b16 %v2826, %v2822
    %v2879 = vpack.c.b16 %v2831, %v2827
    %v2880 = vpack.c.b16 %v2832, %v2828
    %v2881 = vpack.c.b16 %v2833, %v2829
    %v2882 = vpack.c.b16 %v2834, %v2830
    %v2883 = vpack.c.b16 %v2839, %v2835
    %v2884 = vpack.c.b16 %v2840, %v2836
    %v2885 = vpack.c.b16 %v2841, %v2837
    %v2886 = vpack.c.b16 %v2842, %v2838
    %v2887 = vpack.c.b16 %v2847, %v2843
    %v2888 = vpack.c.b16 %v2848, %v2844
    %v2889 = vpack.c.b16 %v2849, %v2845
    %v2890 = vpack.c.b16 %v2850, %v2846
    %v2891 = vpack.c.b16 %v2855, %v2851
    %v2892 = vpack.c.b16 %v2856, %v2852
    %v2893 = vpack.c.b16 %v2857, %v2853
    %v2894 = vpack.c.b16 %v2858, %v2854
    %v2895 = vpack.c.b16 %v2863, %v2859
    %v2896 = vpack.c.b16 %v2864, %v2860
    %v2897 = vpack.c.b16 %v2865, %v2861
    %v2898 = vpack.c.b16 %v2866, %v2862
    %2931 = vmatpush.bf16.msra.mxu0 %v2895
    %2932 = vmatpush.bf16.msra.mxu0 %v2891
    %2933 = vmatpush.bf16.msra.mxu0 %v2887
    %2934 = vmatpush.bf16.msra.mxu0 %v2883
    %2935 = vmatpush.bf16.msra.mxu0 %v2879
    %2936 = vmatpush.bf16.msra.mxu0 %v2875
    %2937 = vmatpush.bf16.msra.mxu0 %v2871
    %2938 = vmatpush.bf16.msra.mxu0 %v2867
    %2939 = vmatmul.bf16.gmra.mxu0 %v2738
    %v2940 = vpop.f32.mrf.mxu0
    %v2941 = vadd.f32 0.0, %v2940
    %v2942 = vpop.f32.mrf.mxu0
    %2943 = vdwg.mxu0
    %2944 = vmatpush.bf16.msra.mxu0 %v2896
    %2945 = vmatpush.bf16.msra.mxu0 %v2892
    %2946 = vmatpush.bf16.msra.mxu0 %v2888
    %2947 = vmatpush.bf16.msra.mxu0 %v2884
    %2948 = vmatpush.bf16.msra.mxu0 %v2880
    %2949 = vmatpush.bf16.msra.mxu0 %v2876
    %2950 = vmatpush.bf16.msra.mxu0 %v2872
    %2951 = vmatpush.bf16.msra.mxu0 %v2868
    %2952 = vmatmul.bf16.gmra.mxu0 %v2738
    %v2953 = vpop.f32.mrf.mxu0
    %v2954 = vadd.f32 0.0, %v2953
    %v2955 = vpop.f32.mrf.mxu0
    %2956 = vdwg.mxu0
    %2957 = vmatpush.bf16.msra.mxu0 %v2897
    %2958 = vmatpush.bf16.msra.mxu0 %v2893
    %2959 = vmatpush.bf16.msra.mxu0 %v2889
    %2960 = vmatpush.bf16.msra.mxu0 %v2885
    %2961 = vmatpush.bf16.msra.mxu0 %v2881
    %2962 = vmatpush.bf16.msra.mxu0 %v2877
    %2963 = vmatpush.bf16.msra.mxu0 %v2873
    %2964 = vmatpush.bf16.msra.mxu0 %v2869
    %2965 = vmatmul.bf16.gmra.mxu0 %v2738
    %v2966 = vpop.f32.mrf.mxu0
    %v2967 = vadd.f32 0.0, %v2966
    %v2968 = vpop.f32.mrf.mxu0
    %2969 = vdwg.mxu0
    %2970 = vmatpush.bf16.msra.mxu0 %v2898
    %2971 = vmatpush.bf16.msra.mxu0 %v2894
    %2972 = vmatpush.bf16.msra.mxu0 %v2890
    %2973 = vmatpush.bf16.msra.mxu0 %v2886
    %2974 = vmatpush.bf16.msra.mxu0 %v2882
    %2975 = vmatpush.bf16.msra.mxu0 %v2878
    %2976 = vmatpush.bf16.msra.mxu0 %v2874
    %2977 = vmatpush.bf16.msra.mxu0 %v2870
    %2978 = vmatmul.bf16.gmra.mxu0 %v2738
    %v2979 = vpop.f32.mrf.mxu0
    %v2980 = vadd.f32 0.0, %v2979
    %v2981 = vpop.f32.mrf.mxu0
    %2982 = vdwg.mxu0
    %v2983 = vadd.f32 %v2734, %v2941
    %v2984 = vadd.f32 %v2735, %v2954
    %v2985 = vadd.f32 %v2736, %v2967
    %v2986 = vadd.f32 %v2737, %v2980
    %v2987 = vmul.f32 %v2983, 0.5
    %v2988 = vmul.f32 %v2984, 0.5
    %v2989 = vmul.f32 %v2985, 0.5
    %v2990 = vtanh.pop %v2987
    %v2991 = vtanh.pop %v2988
    %v2992 = vtanh.pop %v2989
    %v2993 = vmul.f32 %v2990, 0.5
    %v2994 = vmul.f32 %v2991, 0.5
    %v2995 = vmul.f32 %v2992, 0.5
    %v2996 = vadd.f32 %v2993, 0.5
    %v2997 = vadd.f32 %v2994, 0.5
    %v2998 = vadd.f32 %v2995, 0.5
    %v2999 = vtanh.pop %v2986
    %v3000 = vmul.f32 %v2997, %v2458
    %v3001 = vmul.f32 %v2996, %v2999
    %v3002 = vadd.f32 %v3000, %v3001
    %v3003 = vtanh.pop %v3002
    %v3004 = vmul.f32 %v2998, %v3003
    %3005 = vst [vmem:[#allocation4 + $0x20] sm:$0xff] %v3004
    %v3006 = vld [vmem:[#allocation3 + $0x60] sm:$0xff]
    %v3007 = vld [vmem:[#allocation3 + $0x68] sm:$0xff]
    %v3008 = vld [vmem:[#allocation3 + $0x70] sm:$0xff]
    %v3009 = vld [vmem:[#allocation3 + $0x78] sm:$0xff]
    %v3010 = vpack.c.bf16 %v2732, %v2732
    %v3011 = vld [vmem:[#allocation11] sm:$0xff]
    %v3012 = vld [vmem:[#allocation11 + $0x8] sm:$0xff]
    %v3013 = vld [vmem:[#allocation11 + $0x10] sm:$0xff]
    %v3014 = vld [vmem:[#allocation11 + $0x18] sm:$0xff]
    %v3015 = vld [vmem:[#allocation11 + $0x20] sm:$0xff]
    %v3016 = vld [vmem:[#allocation11 + $0x28] sm:$0xff]
    %v3017 = vld [vmem:[#allocation11 + $0x30] sm:$0xff]
    %v3018 = vld [vmem:[#allocation11 + $0x38] sm:$0xff]
    %v3019 = vld [vmem:[#allocation11 + $0x40] sm:$0xff]
    %v3020 = vld [vmem:[#allocation11 + $0x48] sm:$0xff]
    %v3021 = vld [vmem:[#allocation11 + $0x50] sm:$0xff]
    %v3022 = vld [vmem:[#allocation11 + $0x58] sm:$0xff]
    %v3023 = vld [vmem:[#allocation11 + $0x60] sm:$0xff]
    %v3024 = vld [vmem:[#allocation11 + $0x68] sm:$0xff]
    %v3025 = vld [vmem:[#allocation11 + $0x70] sm:$0xff]
    %v3026 = vld [vmem:[#allocation11 + $0x78] sm:$0xff]
    %v3027 = vld [vmem:[#allocation11 + $0x80] sm:$0xff]
    %v3028 = vld [vmem:[#allocation11 + $0x88] sm:$0xff]
    %v3029 = vld [vmem:[#allocation11 + $0x90] sm:$0xff]
    %v3030 = vld [vmem:[#allocation11 + $0x98] sm:$0xff]
    %v3031 = vld [vmem:[#allocation11 + $0xa0] sm:$0xff]
    %v3032 = vld [vmem:[#allocation11 + $0xa8] sm:$0xff]
    %v3033 = vld [vmem:[#allocation11 + $0xb0] sm:$0xff]
    %v3034 = vld [vmem:[#allocation11 + $0xb8] sm:$0xff]
    %v3035 = vld [vmem:[#allocation11 + $0xc0] sm:$0xff]
    %v3036 = vld [vmem:[#allocation11 + $0xc8] sm:$0xff]
    %v3037 = vld [vmem:[#allocation11 + $0xd0] sm:$0xff]
    %v3038 = vld [vmem:[#allocation11 + $0xd8] sm:$0xff]
    %v3039 = vld [vmem:[#allocation11 + $0xe0] sm:$0xff]
    %v3040 = vld [vmem:[#allocation11 + $0xe8] sm:$0xff]
    %v3041 = vld [vmem:[#allocation11 + $0xf0] sm:$0xff]
    %v3042 = vld [vmem:[#allocation11 + $0xf8] sm:$0xff]
    %v3075 = vunpack.c.l.b16 %v3011
    %v3076 = vunpack.c.h.b16 %v3011
    %v3077 = vunpack.c.l.b16 %v3012
    %v3078 = vunpack.c.h.b16 %v3012
    %v3079 = vunpack.c.l.b16 %v3013
    %v3080 = vunpack.c.h.b16 %v3013
    %v3081 = vunpack.c.l.b16 %v3014
    %v3082 = vunpack.c.h.b16 %v3014
    %v3083 = vunpack.c.l.b16 %v3015
    %v3084 = vunpack.c.h.b16 %v3015
    %v3085 = vunpack.c.l.b16 %v3016
    %v3086 = vunpack.c.h.b16 %v3016
    %v3087 = vunpack.c.l.b16 %v3017
    %v3088 = vunpack.c.h.b16 %v3017
    %v3089 = vunpack.c.l.b16 %v3018
    %v3090 = vunpack.c.h.b16 %v3018
    %v3091 = vunpack.c.l.b16 %v3019
    %v3092 = vunpack.c.h.b16 %v3019
    %v3093 = vunpack.c.l.b16 %v3020
    %v3094 = vunpack.c.h.b16 %v3020
    %v3095 = vunpack.c.l.b16 %v3021
    %v3096 = vunpack.c.h.b16 %v3021
    %v3097 = vunpack.c.l.b16 %v3022
    %v3098 = vunpack.c.h.b16 %v3022
    %v3099 = vunpack.c.l.b16 %v3023
    %v3100 = vunpack.c.h.b16 %v3023
    %v3101 = vunpack.c.l.b16 %v3024
    %v3102 = vunpack.c.h.b16 %v3024
    %v3103 = vunpack.c.l.b16 %v3025
    %v3104 = vunpack.c.h.b16 %v3025
    %v3105 = vunpack.c.l.b16 %v3026
    %v3106 = vunpack.c.h.b16 %v3026
    %v3107 = vunpack.c.l.b16 %v3027
    %v3108 = vunpack.c.h.b16 %v3027
    %v3109 = vunpack.c.l.b16 %v3028
    %v3110 = vunpack.c.h.b16 %v3028
    %v3111 = vunpack.c.l.b16 %v3029
    %v3112 = vunpack.c.h.b16 %v3029
    %v3113 = vunpack.c.l.b16 %v3030
    %v3114 = vunpack.c.h.b16 %v3030
    %v3115 = vunpack.c.l.b16 %v3031
    %v3116 = vunpack.c.h.b16 %v3031
    %v3117 = vunpack.c.l.b16 %v3032
    %v3118 = vunpack.c.h.b16 %v3032
    %v3119 = vunpack.c.l.b16 %v3033
    %v3120 = vunpack.c.h.b16 %v3033
    %v3121 = vunpack.c.l.b16 %v3034
    %v3122 = vunpack.c.h.b16 %v3034
    %v3123 = vunpack.c.l.b16 %v3035
    %v3124 = vunpack.c.h.b16 %v3035
    %v3125 = vunpack.c.l.b16 %v3036
    %v3126 = vunpack.c.h.b16 %v3036
    %v3127 = vunpack.c.l.b16 %v3037
    %v3128 = vunpack.c.h.b16 %v3037
    %v3129 = vunpack.c.l.b16 %v3038
    %v3130 = vunpack.c.h.b16 %v3038
    %v3131 = vunpack.c.l.b16 %v3039
    %v3132 = vunpack.c.h.b16 %v3039
    %v3133 = vunpack.c.l.b16 %v3040
    %v3134 = vunpack.c.h.b16 %v3040
    %v3135 = vunpack.c.l.b16 %v3041
    %v3136 = vunpack.c.h.b16 %v3041
    %v3137 = vunpack.c.l.b16 %v3042
    %v3138 = vunpack.c.h.b16 %v3042
    %v3139 = vpack.c.b16 %v3079, %v3075
    %v3140 = vpack.c.b16 %v3080, %v3076
    %v3141 = vpack.c.b16 %v3081, %v3077
    %v3142 = vpack.c.b16 %v3082, %v3078
    %v3143 = vpack.c.b16 %v3087, %v3083
    %v3144 = vpack.c.b16 %v3088, %v3084
    %v3145 = vpack.c.b16 %v3089, %v3085
    %v3146 = vpack.c.b16 %v3090, %v3086
    %v3147 = vpack.c.b16 %v3095, %v3091
    %v3148 = vpack.c.b16 %v3096, %v3092
    %v3149 = vpack.c.b16 %v3097, %v3093
    %v3150 = vpack.c.b16 %v3098, %v3094
    %v3151 = vpack.c.b16 %v3103, %v3099
    %v3152 = vpack.c.b16 %v3104, %v3100
    %v3153 = vpack.c.b16 %v3105, %v3101
    %v3154 = vpack.c.b16 %v3106, %v3102
    %v3155 = vpack.c.b16 %v3111, %v3107
    %v3156 = vpack.c.b16 %v3112, %v3108
    %v3157 = vpack.c.b16 %v3113, %v3109
    %v3158 = vpack.c.b16 %v3114, %v3110
    %v3159 = vpack.c.b16 %v3119, %v3115
    %v3160 = vpack.c.b16 %v3120, %v3116
    %v3161 = vpack.c.b16 %v3121, %v3117
    %v3162 = vpack.c.b16 %v3122, %v3118
    %v3163 = vpack.c.b16 %v3127, %v3123
    %v3164 = vpack.c.b16 %v3128, %v3124
    %v3165 = vpack.c.b16 %v3129, %v3125
    %v3166 = vpack.c.b16 %v3130, %v3126
    %v3167 = vpack.c.b16 %v3135, %v3131
    %v3168 = vpack.c.b16 %v3136, %v3132
    %v3169 = vpack.c.b16 %v3137, %v3133
    %v3170 = vpack.c.b16 %v3138, %v3134
    %3203 = vmatpush.bf16.msra.mxu0 %v3167
    %3204 = vmatpush.bf16.msra.mxu0 %v3163
    %3205 = vmatpush.bf16.msra.mxu0 %v3159
    %3206 = vmatpush.bf16.msra.mxu0 %v3155
    %3207 = vmatpush.bf16.msra.mxu0 %v3151
    %3208 = vmatpush.bf16.msra.mxu0 %v3147
    %3209 = vmatpush.bf16.msra.mxu0 %v3143
    %3210 = vmatpush.bf16.msra.mxu0 %v3139
    %3211 = vmatmul.bf16.gmra.mxu0 %v3010
    %v3212 = vpop.f32.mrf.mxu0
    %v3213 = vadd.f32 0.0, %v3212
    %v3214 = vpop.f32.mrf.mxu0
    %3215 = vdwg.mxu0
    %3216 = vmatpush.bf16.msra.mxu0 %v3168
    %3217 = vmatpush.bf16.msra.mxu0 %v3164
    %3218 = vmatpush.bf16.msra.mxu0 %v3160
    %3219 = vmatpush.bf16.msra.mxu0 %v3156
    %3220 = vmatpush.bf16.msra.mxu0 %v3152
    %3221 = vmatpush.bf16.msra.mxu0 %v3148
    %3222 = vmatpush.bf16.msra.mxu0 %v3144
    %3223 = vmatpush.bf16.msra.mxu0 %v3140
    %3224 = vmatmul.bf16.gmra.mxu0 %v3010
    %v3225 = vpop.f32.mrf.mxu0
    %v3226 = vadd.f32 0.0, %v3225
    %v3227 = vpop.f32.mrf.mxu0
    %3228 = vdwg.mxu0
    %3229 = vmatpush.bf16.msra.mxu0 %v3169
    %3230 = vmatpush.bf16.msra.mxu0 %v3165
    %3231 = vmatpush.bf16.msra.mxu0 %v3161
    %3232 = vmatpush.bf16.msra.mxu0 %v3157
    %3233 = vmatpush.bf16.msra.mxu0 %v3153
    %3234 = vmatpush.bf16.msra.mxu0 %v3149
    %3235 = vmatpush.bf16.msra.mxu0 %v3145
    %3236 = vmatpush.bf16.msra.mxu0 %v3141
    %3237 = vmatmul.bf16.gmra.mxu0 %v3010
    %v3238 = vpop.f32.mrf.mxu0
    %v3239 = vadd.f32 0.0, %v3238
    %v3240 = vpop.f32.mrf.mxu0
    %3241 = vdwg.mxu0
    %3242 = vmatpush.bf16.msra.mxu0 %v3170
    %3243 = vmatpush.bf16.msra.mxu0 %v3166
    %3244 = vmatpush.bf16.msra.mxu0 %v3162
    %3245 = vmatpush.bf16.msra.mxu0 %v3158
    %3246 = vmatpush.bf16.msra.mxu0 %v3154
    %3247 = vmatpush.bf16.msra.mxu0 %v3150
    %3248 = vmatpush.bf16.msra.mxu0 %v3146
    %3249 = vmatpush.bf16.msra.mxu0 %v3142
    %3250 = vmatmul.bf16.gmra.mxu0 %v3010
    %v3251 = vpop.f32.mrf.mxu0
    %v3252 = vadd.f32 0.0, %v3251
    %v3253 = vpop.f32.mrf.mxu0
    %3254 = vdwg.mxu0
    %v3255 = vadd.f32 %v3006, %v3213
    %v3256 = vadd.f32 %v3007, %v3226
    %v3257 = vadd.f32 %v3008, %v3239
    %v3258 = vadd.f32 %v3009, %v3252
    %v3259 = vmul.f32 %v3255, 0.5
    %v3260 = vmul.f32 %v3256, 0.5
    %v3261 = vmul.f32 %v3257, 0.5
    %v3262 = vtanh.pop %v3259
    %v3263 = vtanh.pop %v3260
    %v3264 = vtanh.pop %v3261
    %v3265 = vmul.f32 %v3262, 0.5
    %v3266 = vmul.f32 %v3263, 0.5
    %v3267 = vmul.f32 %v3264, 0.5
    %v3268 = vadd.f32 %v3265, 0.5
    %v3269 = vadd.f32 %v3266, 0.5
    %v3270 = vadd.f32 %v3267, 0.5
    %v3271 = vtanh.pop %v3258
    %v3272 = vmul.f32 %v3269, %v2730
    %v3273 = vmul.f32 %v3268, %v3271
    %v3274 = vadd.f32 %v3272, %v3273
    %v3275 = vtanh.pop %v3274
    %v3276 = vmul.f32 %v3270, %v3275
    %3277 = vst [vmem:[#allocation5 + $0x18] sm:$0xff] %v3276
    %v3278 = vld [vmem:[#allocation2 + $0xa0] sm:$0xff]
    %v3279 = vld [vmem:[#allocation2 + $0xa8] sm:$0xff]
    %v3280 = vld [vmem:[#allocation2 + $0xb0] sm:$0xff]
    %v3281 = vld [vmem:[#allocation2 + $0xb8] sm:$0xff]
    %v3282 = vpack.c.bf16 %v3004, %v3004
    %v3283 = vld [vmem:[#allocation9] sm:$0xff]
    %v3284 = vld [vmem:[#allocation9 + $0x8] sm:$0xff]
    %v3285 = vld [vmem:[#allocation9 + $0x10] sm:$0xff]
    %v3286 = vld [vmem:[#allocation9 + $0x18] sm:$0xff]
    %v3287 = vld [vmem:[#allocation9 + $0x20] sm:$0xff]
    %v3288 = vld [vmem:[#allocation9 + $0x28] sm:$0xff]
    %v3289 = vld [vmem:[#allocation9 + $0x30] sm:$0xff]
    %v3290 = vld [vmem:[#allocation9 + $0x38] sm:$0xff]
    %v3291 = vld [vmem:[#allocation9 + $0x40] sm:$0xff]
    %v3292 = vld [vmem:[#allocation9 + $0x48] sm:$0xff]
    %v3293 = vld [vmem:[#allocation9 + $0x50] sm:$0xff]
    %v3294 = vld [vmem:[#allocation9 + $0x58] sm:$0xff]
    %v3295 = vld [vmem:[#allocation9 + $0x60] sm:$0xff]
    %v3296 = vld [vmem:[#allocation9 + $0x68] sm:$0xff]
    %v3297 = vld [vmem:[#allocation9 + $0x70] sm:$0xff]
    %v3298 = vld [vmem:[#allocation9 + $0x78] sm:$0xff]
    %v3299 = vld [vmem:[#allocation9 + $0x80] sm:$0xff]
    %v3300 = vld [vmem:[#allocation9 + $0x88] sm:$0xff]
    %v3301 = vld [vmem:[#allocation9 + $0x90] sm:$0xff]
    %v3302 = vld [vmem:[#allocation9 + $0x98] sm:$0xff]
    %v3303 = vld [vmem:[#allocation9 + $0xa0] sm:$0xff]
    %v3304 = vld [vmem:[#allocation9 + $0xa8] sm:$0xff]
    %v3305 = vld [vmem:[#allocation9 + $0xb0] sm:$0xff]
    %v3306 = vld [vmem:[#allocation9 + $0xb8] sm:$0xff]
    %v3307 = vld [vmem:[#allocation9 + $0xc0] sm:$0xff]
    %v3308 = vld [vmem:[#allocation9 + $0xc8] sm:$0xff]
    %v3309 = vld [vmem:[#allocation9 + $0xd0] sm:$0xff]
    %v3310 = vld [vmem:[#allocation9 + $0xd8] sm:$0xff]
    %v3311 = vld [vmem:[#allocation9 + $0xe0] sm:$0xff]
    %v3312 = vld [vmem:[#allocation9 + $0xe8] sm:$0xff]
    %v3313 = vld [vmem:[#allocation9 + $0xf0] sm:$0xff]
    %v3314 = vld [vmem:[#allocation9 + $0xf8] sm:$0xff]
    %v3347 = vunpack.c.l.b16 %v3283
    %v3348 = vunpack.c.h.b16 %v3283
    %v3349 = vunpack.c.l.b16 %v3284
    %v3350 = vunpack.c.h.b16 %v3284
    %v3351 = vunpack.c.l.b16 %v3285
    %v3352 = vunpack.c.h.b16 %v3285
    %v3353 = vunpack.c.l.b16 %v3286
    %v3354 = vunpack.c.h.b16 %v3286
    %v3355 = vunpack.c.l.b16 %v3287
    %v3356 = vunpack.c.h.b16 %v3287
    %v3357 = vunpack.c.l.b16 %v3288
    %v3358 = vunpack.c.h.b16 %v3288
    %v3359 = vunpack.c.l.b16 %v3289
    %v3360 = vunpack.c.h.b16 %v3289
    %v3361 = vunpack.c.l.b16 %v3290
    %v3362 = vunpack.c.h.b16 %v3290
    %v3363 = vunpack.c.l.b16 %v3291
    %v3364 = vunpack.c.h.b16 %v3291
    %v3365 = vunpack.c.l.b16 %v3292
    %v3366 = vunpack.c.h.b16 %v3292
    %v3367 = vunpack.c.l.b16 %v3293
    %v3368 = vunpack.c.h.b16 %v3293
    %v3369 = vunpack.c.l.b16 %v3294
    %v3370 = vunpack.c.h.b16 %v3294
    %v3371 = vunpack.c.l.b16 %v3295
    %v3372 = vunpack.c.h.b16 %v3295
    %v3373 = vunpack.c.l.b16 %v3296
    %v3374 = vunpack.c.h.b16 %v3296
    %v3375 = vunpack.c.l.b16 %v3297
    %v3376 = vunpack.c.h.b16 %v3297
    %v3377 = vunpack.c.l.b16 %v3298
    %v3378 = vunpack.c.h.b16 %v3298
    %v3379 = vunpack.c.l.b16 %v3299
    %v3380 = vunpack.c.h.b16 %v3299
    %v3381 = vunpack.c.l.b16 %v3300
    %v3382 = vunpack.c.h.b16 %v3300
    %v3383 = vunpack.c.l.b16 %v3301
    %v3384 = vunpack.c.h.b16 %v3301
    %v3385 = vunpack.c.l.b16 %v3302
    %v3386 = vunpack.c.h.b16 %v3302
    %v3387 = vunpack.c.l.b16 %v3303
    %v3388 = vunpack.c.h.b16 %v3303
    %v3389 = vunpack.c.l.b16 %v3304
    %v3390 = vunpack.c.h.b16 %v3304
    %v3391 = vunpack.c.l.b16 %v3305
    %v3392 = vunpack.c.h.b16 %v3305
    %v3393 = vunpack.c.l.b16 %v3306
    %v3394 = vunpack.c.h.b16 %v3306
    %v3395 = vunpack.c.l.b16 %v3307
    %v3396 = vunpack.c.h.b16 %v3307
    %v3397 = vunpack.c.l.b16 %v3308
    %v3398 = vunpack.c.h.b16 %v3308
    %v3399 = vunpack.c.l.b16 %v3309
    %v3400 = vunpack.c.h.b16 %v3309
    %v3401 = vunpack.c.l.b16 %v3310
    %v3402 = vunpack.c.h.b16 %v3310
    %v3403 = vunpack.c.l.b16 %v3311
    %v3404 = vunpack.c.h.b16 %v3311
    %v3405 = vunpack.c.l.b16 %v3312
    %v3406 = vunpack.c.h.b16 %v3312
    %v3407 = vunpack.c.l.b16 %v3313
    %v3408 = vunpack.c.h.b16 %v3313
    %v3409 = vunpack.c.l.b16 %v3314
    %v3410 = vunpack.c.h.b16 %v3314
    %v3411 = vpack.c.b16 %v3351, %v3347
    %v3412 = vpack.c.b16 %v3352, %v3348
    %v3413 = vpack.c.b16 %v3353, %v3349
    %v3414 = vpack.c.b16 %v3354, %v3350
    %v3415 = vpack.c.b16 %v3359, %v3355
    %v3416 = vpack.c.b16 %v3360, %v3356
    %v3417 = vpack.c.b16 %v3361, %v3357
    %v3418 = vpack.c.b16 %v3362, %v3358
    %v3419 = vpack.c.b16 %v3367, %v3363
    %v3420 = vpack.c.b16 %v3368, %v3364
    %v3421 = vpack.c.b16 %v3369, %v3365
    %v3422 = vpack.c.b16 %v3370, %v3366
    %v3423 = vpack.c.b16 %v3375, %v3371
    %v3424 = vpack.c.b16 %v3376, %v3372
    %v3425 = vpack.c.b16 %v3377, %v3373
    %v3426 = vpack.c.b16 %v3378, %v3374
    %v3427 = vpack.c.b16 %v3383, %v3379
    %v3428 = vpack.c.b16 %v3384, %v3380
    %v3429 = vpack.c.b16 %v3385, %v3381
    %v3430 = vpack.c.b16 %v3386, %v3382
    %v3431 = vpack.c.b16 %v3391, %v3387
    %v3432 = vpack.c.b16 %v3392, %v3388
    %v3433 = vpack.c.b16 %v3393, %v3389
    %v3434 = vpack.c.b16 %v3394, %v3390
    %v3435 = vpack.c.b16 %v3399, %v3395
    %v3436 = vpack.c.b16 %v3400, %v3396
    %v3437 = vpack.c.b16 %v3401, %v3397
    %v3438 = vpack.c.b16 %v3402, %v3398
    %v3439 = vpack.c.b16 %v3407, %v3403
    %v3440 = vpack.c.b16 %v3408, %v3404
    %v3441 = vpack.c.b16 %v3409, %v3405
    %v3442 = vpack.c.b16 %v3410, %v3406
    %3475 = vmatpush.bf16.msra.mxu0 %v3439
    %3476 = vmatpush.bf16.msra.mxu0 %v3435
    %3477 = vmatpush.bf16.msra.mxu0 %v3431
    %3478 = vmatpush.bf16.msra.mxu0 %v3427
    %3479 = vmatpush.bf16.msra.mxu0 %v3423
    %3480 = vmatpush.bf16.msra.mxu0 %v3419
    %3481 = vmatpush.bf16.msra.mxu0 %v3415
    %3482 = vmatpush.bf16.msra.mxu0 %v3411
    %3483 = vmatmul.bf16.gmra.mxu0 %v3282
    %v3484 = vpop.f32.mrf.mxu0
    %v3485 = vadd.f32 0.0, %v3484
    %v3486 = vpop.f32.mrf.mxu0
    %3487 = vdwg.mxu0
    %3488 = vmatpush.bf16.msra.mxu0 %v3440
    %3489 = vmatpush.bf16.msra.mxu0 %v3436
    %3490 = vmatpush.bf16.msra.mxu0 %v3432
    %3491 = vmatpush.bf16.msra.mxu0 %v3428
    %3492 = vmatpush.bf16.msra.mxu0 %v3424
    %3493 = vmatpush.bf16.msra.mxu0 %v3420
    %3494 = vmatpush.bf16.msra.mxu0 %v3416
    %3495 = vmatpush.bf16.msra.mxu0 %v3412
    %3496 = vmatmul.bf16.gmra.mxu0 %v3282
    %v3497 = vpop.f32.mrf.mxu0
    %v3498 = vadd.f32 0.0, %v3497
    %v3499 = vpop.f32.mrf.mxu0
    %3500 = vdwg.mxu0
    %3501 = vmatpush.bf16.msra.mxu0 %v3441
    %3502 = vmatpush.bf16.msra.mxu0 %v3437
    %3503 = vmatpush.bf16.msra.mxu0 %v3433
    %3504 = vmatpush.bf16.msra.mxu0 %v3429
    %3505 = vmatpush.bf16.msra.mxu0 %v3425
    %3506 = vmatpush.bf16.msra.mxu0 %v3421
    %3507 = vmatpush.bf16.msra.mxu0 %v3417
    %3508 = vmatpush.bf16.msra.mxu0 %v3413
    %3509 = vmatmul.bf16.gmra.mxu0 %v3282
    %v3510 = vpop.f32.mrf.mxu0
    %v3511 = vadd.f32 0.0, %v3510
    %v3512 = vpop.f32.mrf.mxu0
    %3513 = vdwg.mxu0
    %3514 = vmatpush.bf16.msra.mxu0 %v3442
    %3515 = vmatpush.bf16.msra.mxu0 %v3438
    %3516 = vmatpush.bf16.msra.mxu0 %v3434
    %3517 = vmatpush.bf16.msra.mxu0 %v3430
    %3518 = vmatpush.bf16.msra.mxu0 %v3426
    %3519 = vmatpush.bf16.msra.mxu0 %v3422
    %3520 = vmatpush.bf16.msra.mxu0 %v3418
    %3521 = vmatpush.bf16.msra.mxu0 %v3414
    %3522 = vmatmul.bf16.gmra.mxu0 %v3282
    %v3523 = vpop.f32.mrf.mxu0
    %v3524 = vadd.f32 0.0, %v3523
    %v3525 = vpop.f32.mrf.mxu0
    %3526 = vdwg.mxu0
    %v3527 = vadd.f32 %v3278, %v3485
    %v3528 = vadd.f32 %v3279, %v3498
    %v3529 = vadd.f32 %v3280, %v3511
    %v3530 = vadd.f32 %v3281, %v3524
    %v3531 = vmul.f32 %v3527, 0.5
    %v3532 = vmul.f32 %v3528, 0.5
    %v3533 = vmul.f32 %v3529, 0.5
    %v3534 = vtanh.pop %v3531
    %v3535 = vtanh.pop %v3532
    %v3536 = vtanh.pop %v3533
    %v3537 = vmul.f32 %v3534, 0.5
    %v3538 = vmul.f32 %v3535, 0.5
    %v3539 = vmul.f32 %v3536, 0.5
    %v3540 = vadd.f32 %v3537, 0.5
    %v3541 = vadd.f32 %v3538, 0.5
    %v3542 = vadd.f32 %v3539, 0.5
    %v3543 = vtanh.pop %v3530
    %v3544 = vmul.f32 %v3541, %v3002
    %v3545 = vmul.f32 %v3540, %v3543
    %v3546 = vadd.f32 %v3544, %v3545
    %v3547 = vtanh.pop %v3546
    %v3548 = vmul.f32 %v3542, %v3547
    %3549 = vst [vmem:[#allocation4 + $0x28] sm:$0xff] %v3548
    %v3550 = vld [vmem:[#allocation3 + $0x40] sm:$0xff]
    %v3551 = vld [vmem:[#allocation3 + $0x48] sm:$0xff]
    %v3552 = vld [vmem:[#allocation3 + $0x50] sm:$0xff]
    %v3553 = vld [vmem:[#allocation3 + $0x58] sm:$0xff]
    %v3554 = vpack.c.bf16 %v3276, %v3276
    %v3555 = vld [vmem:[#allocation11] sm:$0xff]
    %v3556 = vld [vmem:[#allocation11 + $0x8] sm:$0xff]
    %v3557 = vld [vmem:[#allocation11 + $0x10] sm:$0xff]
    %v3558 = vld [vmem:[#allocation11 + $0x18] sm:$0xff]
    %v3559 = vld [vmem:[#allocation11 + $0x20] sm:$0xff]
    %v3560 = vld [vmem:[#allocation11 + $0x28] sm:$0xff]
    %v3561 = vld [vmem:[#allocation11 + $0x30] sm:$0xff]
    %v3562 = vld [vmem:[#allocation11 + $0x38] sm:$0xff]
    %v3563 = vld [vmem:[#allocation11 + $0x40] sm:$0xff]
    %v3564 = vld [vmem:[#allocation11 + $0x48] sm:$0xff]
    %v3565 = vld [vmem:[#allocation11 + $0x50] sm:$0xff]
    %v3566 = vld [vmem:[#allocation11 + $0x58] sm:$0xff]
    %v3567 = vld [vmem:[#allocation11 + $0x60] sm:$0xff]
    %v3568 = vld [vmem:[#allocation11 + $0x68] sm:$0xff]
    %v3569 = vld [vmem:[#allocation11 + $0x70] sm:$0xff]
    %v3570 = vld [vmem:[#allocation11 + $0x78] sm:$0xff]
    %v3571 = vld [vmem:[#allocation11 + $0x80] sm:$0xff]
    %v3572 = vld [vmem:[#allocation11 + $0x88] sm:$0xff]
    %v3573 = vld [vmem:[#allocation11 + $0x90] sm:$0xff]
    %v3574 = vld [vmem:[#allocation11 + $0x98] sm:$0xff]
    %v3575 = vld [vmem:[#allocation11 + $0xa0] sm:$0xff]
    %v3576 = vld [vmem:[#allocation11 + $0xa8] sm:$0xff]
    %v3577 = vld [vmem:[#allocation11 + $0xb0] sm:$0xff]
    %v3578 = vld [vmem:[#allocation11 + $0xb8] sm:$0xff]
    %v3579 = vld [vmem:[#allocation11 + $0xc0] sm:$0xff]
    %v3580 = vld [vmem:[#allocation11 + $0xc8] sm:$0xff]
    %v3581 = vld [vmem:[#allocation11 + $0xd0] sm:$0xff]
    %v3582 = vld [vmem:[#allocation11 + $0xd8] sm:$0xff]
    %v3583 = vld [vmem:[#allocation11 + $0xe0] sm:$0xff]
    %v3584 = vld [vmem:[#allocation11 + $0xe8] sm:$0xff]
    %v3585 = vld [vmem:[#allocation11 + $0xf0] sm:$0xff]
    %v3586 = vld [vmem:[#allocation11 + $0xf8] sm:$0xff]
    %v3619 = vunpack.c.l.b16 %v3555
    %v3620 = vunpack.c.h.b16 %v3555
    %v3621 = vunpack.c.l.b16 %v3556
    %v3622 = vunpack.c.h.b16 %v3556
    %v3623 = vunpack.c.l.b16 %v3557
    %v3624 = vunpack.c.h.b16 %v3557
    %v3625 = vunpack.c.l.b16 %v3558
    %v3626 = vunpack.c.h.b16 %v3558
    %v3627 = vunpack.c.l.b16 %v3559
    %v3628 = vunpack.c.h.b16 %v3559
    %v3629 = vunpack.c.l.b16 %v3560
    %v3630 = vunpack.c.h.b16 %v3560
    %v3631 = vunpack.c.l.b16 %v3561
    %v3632 = vunpack.c.h.b16 %v3561
    %v3633 = vunpack.c.l.b16 %v3562
    %v3634 = vunpack.c.h.b16 %v3562
    %v3635 = vunpack.c.l.b16 %v3563
    %v3636 = vunpack.c.h.b16 %v3563
    %v3637 = vunpack.c.l.b16 %v3564
    %v3638 = vunpack.c.h.b16 %v3564
    %v3639 = vunpack.c.l.b16 %v3565
    %v3640 = vunpack.c.h.b16 %v3565
    %v3641 = vunpack.c.l.b16 %v3566
    %v3642 = vunpack.c.h.b16 %v3566
    %v3643 = vunpack.c.l.b16 %v3567
    %v3644 = vunpack.c.h.b16 %v3567
    %v3645 = vunpack.c.l.b16 %v3568
    %v3646 = vunpack.c.h.b16 %v3568
    %v3647 = vunpack.c.l.b16 %v3569
    %v3648 = vunpack.c.h.b16 %v3569
    %v3649 = vunpack.c.l.b16 %v3570
    %v3650 = vunpack.c.h.b16 %v3570
    %v3651 = vunpack.c.l.b16 %v3571
    %v3652 = vunpack.c.h.b16 %v3571
    %v3653 = vunpack.c.l.b16 %v3572
    %v3654 = vunpack.c.h.b16 %v3572
    %v3655 = vunpack.c.l.b16 %v3573
    %v3656 = vunpack.c.h.b16 %v3573
    %v3657 = vunpack.c.l.b16 %v3574
    %v3658 = vunpack.c.h.b16 %v3574
    %v3659 = vunpack.c.l.b16 %v3575
    %v3660 = vunpack.c.h.b16 %v3575
    %v3661 = vunpack.c.l.b16 %v3576
    %v3662 = vunpack.c.h.b16 %v3576
    %v3663 = vunpack.c.l.b16 %v3577
    %v3664 = vunpack.c.h.b16 %v3577
    %v3665 = vunpack.c.l.b16 %v3578
    %v3666 = vunpack.c.h.b16 %v3578
    %v3667 = vunpack.c.l.b16 %v3579
    %v3668 = vunpack.c.h.b16 %v3579
    %v3669 = vunpack.c.l.b16 %v3580
    %v3670 = vunpack.c.h.b16 %v3580
    %v3671 = vunpack.c.l.b16 %v3581
    %v3672 = vunpack.c.h.b16 %v3581
    %v3673 = vunpack.c.l.b16 %v3582
    %v3674 = vunpack.c.h.b16 %v3582
    %v3675 = vunpack.c.l.b16 %v3583
    %v3676 = vunpack.c.h.b16 %v3583
    %v3677 = vunpack.c.l.b16 %v3584
    %v3678 = vunpack.c.h.b16 %v3584
    %v3679 = vunpack.c.l.b16 %v3585
    %v3680 = vunpack.c.h.b16 %v3585
    %v3681 = vunpack.c.l.b16 %v3586
    %v3682 = vunpack.c.h.b16 %v3586
    %v3683 = vpack.c.b16 %v3623, %v3619
    %v3684 = vpack.c.b16 %v3624, %v3620
    %v3685 = vpack.c.b16 %v3625, %v3621
    %v3686 = vpack.c.b16 %v3626, %v3622
    %v3687 = vpack.c.b16 %v3631, %v3627
    %v3688 = vpack.c.b16 %v3632, %v3628
    %v3689 = vpack.c.b16 %v3633, %v3629
    %v3690 = vpack.c.b16 %v3634, %v3630
    %v3691 = vpack.c.b16 %v3639, %v3635
    %v3692 = vpack.c.b16 %v3640, %v3636
    %v3693 = vpack.c.b16 %v3641, %v3637
    %v3694 = vpack.c.b16 %v3642, %v3638
    %v3695 = vpack.c.b16 %v3647, %v3643
    %v3696 = vpack.c.b16 %v3648, %v3644
    %v3697 = vpack.c.b16 %v3649, %v3645
    %v3698 = vpack.c.b16 %v3650, %v3646
    %v3699 = vpack.c.b16 %v3655, %v3651
    %v3700 = vpack.c.b16 %v3656, %v3652
    %v3701 = vpack.c.b16 %v3657, %v3653
    %v3702 = vpack.c.b16 %v3658, %v3654
    %v3703 = vpack.c.b16 %v3663, %v3659
    %v3704 = vpack.c.b16 %v3664, %v3660
    %v3705 = vpack.c.b16 %v3665, %v3661
    %v3706 = vpack.c.b16 %v3666, %v3662
    %v3707 = vpack.c.b16 %v3671, %v3667
    %v3708 = vpack.c.b16 %v3672, %v3668
    %v3709 = vpack.c.b16 %v3673, %v3669
    %v3710 = vpack.c.b16 %v3674, %v3670
    %v3711 = vpack.c.b16 %v3679, %v3675
    %v3712 = vpack.c.b16 %v3680, %v3676
    %v3713 = vpack.c.b16 %v3681, %v3677
    %v3714 = vpack.c.b16 %v3682, %v3678
    %3747 = vmatpush.bf16.msra.mxu0 %v3711
    %3748 = vmatpush.bf16.msra.mxu0 %v3707
    %3749 = vmatpush.bf16.msra.mxu0 %v3703
    %3750 = vmatpush.bf16.msra.mxu0 %v3699
    %3751 = vmatpush.bf16.msra.mxu0 %v3695
    %3752 = vmatpush.bf16.msra.mxu0 %v3691
    %3753 = vmatpush.bf16.msra.mxu0 %v3687
    %3754 = vmatpush.bf16.msra.mxu0 %v3683
    %3755 = vmatmul.bf16.gmra.mxu0 %v3554
    %v3756 = vpop.f32.mrf.mxu0
    %v3757 = vadd.f32 0.0, %v3756
    %v3758 = vpop.f32.mrf.mxu0
    %3759 = vdwg.mxu0
    %3760 = vmatpush.bf16.msra.mxu0 %v3712
    %3761 = vmatpush.bf16.msra.mxu0 %v3708
    %3762 = vmatpush.bf16.msra.mxu0 %v3704
    %3763 = vmatpush.bf16.msra.mxu0 %v3700
    %3764 = vmatpush.bf16.msra.mxu0 %v3696
    %3765 = vmatpush.bf16.msra.mxu0 %v3692
    %3766 = vmatpush.bf16.msra.mxu0 %v3688
    %3767 = vmatpush.bf16.msra.mxu0 %v3684
    %3768 = vmatmul.bf16.gmra.mxu0 %v3554
    %v3769 = vpop.f32.mrf.mxu0
    %v3770 = vadd.f32 0.0, %v3769
    %v3771 = vpop.f32.mrf.mxu0
    %3772 = vdwg.mxu0
    %3773 = vmatpush.bf16.msra.mxu0 %v3713
    %3774 = vmatpush.bf16.msra.mxu0 %v3709
    %3775 = vmatpush.bf16.msra.mxu0 %v3705
    %3776 = vmatpush.bf16.msra.mxu0 %v3701
    %3777 = vmatpush.bf16.msra.mxu0 %v3697
    %3778 = vmatpush.bf16.msra.mxu0 %v3693
    %3779 = vmatpush.bf16.msra.mxu0 %v3689
    %3780 = vmatpush.bf16.msra.mxu0 %v3685
    %3781 = vmatmul.bf16.gmra.mxu0 %v3554
    %v3782 = vpop.f32.mrf.mxu0
    %v3783 = vadd.f32 0.0, %v3782
    %v3784 = vpop.f32.mrf.mxu0
    %3785 = vdwg.mxu0
    %3786 = vmatpush.bf16.msra.mxu0 %v3714
    %3787 = vmatpush.bf16.msra.mxu0 %v3710
    %3788 = vmatpush.bf16.msra.mxu0 %v3706
    %3789 = vmatpush.bf16.msra.mxu0 %v3702
    %3790 = vmatpush.bf16.msra.mxu0 %v3698
    %3791 = vmatpush.bf16.msra.mxu0 %v3694
    %3792 = vmatpush.bf16.msra.mxu0 %v3690
    %3793 = vmatpush.bf16.msra.mxu0 %v3686
    %3794 = vmatmul.bf16.gmra.mxu0 %v3554
    %v3795 = vpop.f32.mrf.mxu0
    %v3796 = vadd.f32 0.0, %v3795
    %v3797 = vpop.f32.mrf.mxu0
    %3798 = vdwg.mxu0
    %v3799 = vadd.f32 %v3550, %v3757
    %v3800 = vadd.f32 %v3551, %v3770
    %v3801 = vadd.f32 %v3552, %v3783
    %v3802 = vadd.f32 %v3553, %v3796
    %v3803 = vmul.f32 %v3799, 0.5
    %v3804 = vmul.f32 %v3800, 0.5
    %v3805 = vmul.f32 %v3801, 0.5
    %v3806 = vtanh.pop %v3803
    %v3807 = vtanh.pop %v3804
    %v3808 = vtanh.pop %v3805
    %v3809 = vmul.f32 %v3806, 0.5
    %v3810 = vmul.f32 %v3807, 0.5
    %v3811 = vmul.f32 %v3808, 0.5
    %v3812 = vadd.f32 %v3809, 0.5
    %v3813 = vadd.f32 %v3810, 0.5
    %v3814 = vadd.f32 %v3811, 0.5
    %v3815 = vtanh.pop %v3802
    %v3816 = vmul.f32 %v3813, %v3274
    %v3817 = vmul.f32 %v3812, %v3815
    %v3818 = vadd.f32 %v3816, %v3817
    %v3819 = vtanh.pop %v3818
    %v3820 = vmul.f32 %v3814, %v3819
    %3821 = vst [vmem:[#allocation5 + $0x10] sm:$0xff] %v3820
    %v3822 = vld [vmem:[#allocation2 + $0xc0] sm:$0xff]
    %v3823 = vld [vmem:[#allocation2 + $0xc8] sm:$0xff]
    %v3824 = vld [vmem:[#allocation2 + $0xd0] sm:$0xff]
    %v3825 = vld [vmem:[#allocation2 + $0xd8] sm:$0xff]
    %v3826 = vpack.c.bf16 %v3548, %v3548
    %v3827 = vld [vmem:[#allocation9] sm:$0xff]
    %v3828 = vld [vmem:[#allocation9 + $0x8] sm:$0xff]
    %v3829 = vld [vmem:[#allocation9 + $0x10] sm:$0xff]
    %v3830 = vld [vmem:[#allocation9 + $0x18] sm:$0xff]
    %v3831 = vld [vmem:[#allocation9 + $0x20] sm:$0xff]
    %v3832 = vld [vmem:[#allocation9 + $0x28] sm:$0xff]
    %v3833 = vld [vmem:[#allocation9 + $0x30] sm:$0xff]
    %v3834 = vld [vmem:[#allocation9 + $0x38] sm:$0xff]
    %v3835 = vld [vmem:[#allocation9 + $0x40] sm:$0xff]
    %v3836 = vld [vmem:[#allocation9 + $0x48] sm:$0xff]
    %v3837 = vld [vmem:[#allocation9 + $0x50] sm:$0xff]
    %v3838 = vld [vmem:[#allocation9 + $0x58] sm:$0xff]
    %v3839 = vld [vmem:[#allocation9 + $0x60] sm:$0xff]
    %v3840 = vld [vmem:[#allocation9 + $0x68] sm:$0xff]
    %v3841 = vld [vmem:[#allocation9 + $0x70] sm:$0xff]
    %v3842 = vld [vmem:[#allocation9 + $0x78] sm:$0xff]
    %v3843 = vld [vmem:[#allocation9 + $0x80] sm:$0xff]
    %v3844 = vld [vmem:[#allocation9 + $0x88] sm:$0xff]
    %v3845 = vld [vmem:[#allocation9 + $0x90] sm:$0xff]
    %v3846 = vld [vmem:[#allocation9 + $0x98] sm:$0xff]
    %v3847 = vld [vmem:[#allocation9 + $0xa0] sm:$0xff]
    %v3848 = vld [vmem:[#allocation9 + $0xa8] sm:$0xff]
    %v3849 = vld [vmem:[#allocation9 + $0xb0] sm:$0xff]
    %v3850 = vld [vmem:[#allocation9 + $0xb8] sm:$0xff]
    %v3851 = vld [vmem:[#allocation9 + $0xc0] sm:$0xff]
    %v3852 = vld [vmem:[#allocation9 + $0xc8] sm:$0xff]
    %v3853 = vld [vmem:[#allocation9 + $0xd0] sm:$0xff]
    %v3854 = vld [vmem:[#allocation9 + $0xd8] sm:$0xff]
    %v3855 = vld [vmem:[#allocation9 + $0xe0] sm:$0xff]
    %v3856 = vld [vmem:[#allocation9 + $0xe8] sm:$0xff]
    %v3857 = vld [vmem:[#allocation9 + $0xf0] sm:$0xff]
    %v3858 = vld [vmem:[#allocation9 + $0xf8] sm:$0xff]
    %v3891 = vunpack.c.l.b16 %v3827
    %v3892 = vunpack.c.h.b16 %v3827
    %v3893 = vunpack.c.l.b16 %v3828
    %v3894 = vunpack.c.h.b16 %v3828
    %v3895 = vunpack.c.l.b16 %v3829
    %v3896 = vunpack.c.h.b16 %v3829
    %v3897 = vunpack.c.l.b16 %v3830
    %v3898 = vunpack.c.h.b16 %v3830
    %v3899 = vunpack.c.l.b16 %v3831
    %v3900 = vunpack.c.h.b16 %v3831
    %v3901 = vunpack.c.l.b16 %v3832
    %v3902 = vunpack.c.h.b16 %v3832
    %v3903 = vunpack.c.l.b16 %v3833
    %v3904 = vunpack.c.h.b16 %v3833
    %v3905 = vunpack.c.l.b16 %v3834
    %v3906 = vunpack.c.h.b16 %v3834
    %v3907 = vunpack.c.l.b16 %v3835
    %v3908 = vunpack.c.h.b16 %v3835
    %v3909 = vunpack.c.l.b16 %v3836
    %v3910 = vunpack.c.h.b16 %v3836
    %v3911 = vunpack.c.l.b16 %v3837
    %v3912 = vunpack.c.h.b16 %v3837
    %v3913 = vunpack.c.l.b16 %v3838
    %v3914 = vunpack.c.h.b16 %v3838
    %v3915 = vunpack.c.l.b16 %v3839
    %v3916 = vunpack.c.h.b16 %v3839
    %v3917 = vunpack.c.l.b16 %v3840
    %v3918 = vunpack.c.h.b16 %v3840
    %v3919 = vunpack.c.l.b16 %v3841
    %v3920 = vunpack.c.h.b16 %v3841
    %v3921 = vunpack.c.l.b16 %v3842
    %v3922 = vunpack.c.h.b16 %v3842
    %v3923 = vunpack.c.l.b16 %v3843
    %v3924 = vunpack.c.h.b16 %v3843
    %v3925 = vunpack.c.l.b16 %v3844
    %v3926 = vunpack.c.h.b16 %v3844
    %v3927 = vunpack.c.l.b16 %v3845
    %v3928 = vunpack.c.h.b16 %v3845
    %v3929 = vunpack.c.l.b16 %v3846
    %v3930 = vunpack.c.h.b16 %v3846
    %v3931 = vunpack.c.l.b16 %v3847
    %v3932 = vunpack.c.h.b16 %v3847
    %v3933 = vunpack.c.l.b16 %v3848
    %v3934 = vunpack.c.h.b16 %v3848
    %v3935 = vunpack.c.l.b16 %v3849
    %v3936 = vunpack.c.h.b16 %v3849
    %v3937 = vunpack.c.l.b16 %v3850
    %v3938 = vunpack.c.h.b16 %v3850
    %v3939 = vunpack.c.l.b16 %v3851
    %v3940 = vunpack.c.h.b16 %v3851
    %v3941 = vunpack.c.l.b16 %v3852
    %v3942 = vunpack.c.h.b16 %v3852
    %v3943 = vunpack.c.l.b16 %v3853
    %v3944 = vunpack.c.h.b16 %v3853
    %v3945 = vunpack.c.l.b16 %v3854
    %v3946 = vunpack.c.h.b16 %v3854
    %v3947 = vunpack.c.l.b16 %v3855
    %v3948 = vunpack.c.h.b16 %v3855
    %v3949 = vunpack.c.l.b16 %v3856
    %v3950 = vunpack.c.h.b16 %v3856
    %v3951 = vunpack.c.l.b16 %v3857
    %v3952 = vunpack.c.h.b16 %v3857
    %v3953 = vunpack.c.l.b16 %v3858
    %v3954 = vunpack.c.h.b16 %v3858
    %v3955 = vpack.c.b16 %v3895, %v3891
    %v3956 = vpack.c.b16 %v3896, %v3892
    %v3957 = vpack.c.b16 %v3897, %v3893
    %v3958 = vpack.c.b16 %v3898, %v3894
    %v3959 = vpack.c.b16 %v3903, %v3899
    %v3960 = vpack.c.b16 %v3904, %v3900
    %v3961 = vpack.c.b16 %v3905, %v3901
    %v3962 = vpack.c.b16 %v3906, %v3902
    %v3963 = vpack.c.b16 %v3911, %v3907
    %v3964 = vpack.c.b16 %v3912, %v3908
    %v3965 = vpack.c.b16 %v3913, %v3909
    %v3966 = vpack.c.b16 %v3914, %v3910
    %v3967 = vpack.c.b16 %v3919, %v3915
    %v3968 = vpack.c.b16 %v3920, %v3916
    %v3969 = vpack.c.b16 %v3921, %v3917
    %v3970 = vpack.c.b16 %v3922, %v3918
    %v3971 = vpack.c.b16 %v3927, %v3923
    %v3972 = vpack.c.b16 %v3928, %v3924
    %v3973 = vpack.c.b16 %v3929, %v3925
    %v3974 = vpack.c.b16 %v3930, %v3926
    %v3975 = vpack.c.b16 %v3935, %v3931
    %v3976 = vpack.c.b16 %v3936, %v3932
    %v3977 = vpack.c.b16 %v3937, %v3933
    %v3978 = vpack.c.b16 %v3938, %v3934
    %v3979 = vpack.c.b16 %v3943, %v3939
    %v3980 = vpack.c.b16 %v3944, %v3940
    %v3981 = vpack.c.b16 %v3945, %v3941
    %v3982 = vpack.c.b16 %v3946, %v3942
    %v3983 = vpack.c.b16 %v3951, %v3947
    %v3984 = vpack.c.b16 %v3952, %v3948
    %v3985 = vpack.c.b16 %v3953, %v3949
    %v3986 = vpack.c.b16 %v3954, %v3950
    %4019 = vmatpush.bf16.msra.mxu0 %v3983
    %4020 = vmatpush.bf16.msra.mxu0 %v3979
    %4021 = vmatpush.bf16.msra.mxu0 %v3975
    %4022 = vmatpush.bf16.msra.mxu0 %v3971
    %4023 = vmatpush.bf16.msra.mxu0 %v3967
    %4024 = vmatpush.bf16.msra.mxu0 %v3963
    %4025 = vmatpush.bf16.msra.mxu0 %v3959
    %4026 = vmatpush.bf16.msra.mxu0 %v3955
    %4027 = vmatmul.bf16.gmra.mxu0 %v3826
    %v4028 = vpop.f32.mrf.mxu0
    %v4029 = vadd.f32 0.0, %v4028
    %v4030 = vpop.f32.mrf.mxu0
    %4031 = vdwg.mxu0
    %4032 = vmatpush.bf16.msra.mxu0 %v3984
    %4033 = vmatpush.bf16.msra.mxu0 %v3980
    %4034 = vmatpush.bf16.msra.mxu0 %v3976
    %4035 = vmatpush.bf16.msra.mxu0 %v3972
    %4036 = vmatpush.bf16.msra.mxu0 %v3968
    %4037 = vmatpush.bf16.msra.mxu0 %v3964
    %4038 = vmatpush.bf16.msra.mxu0 %v3960
    %4039 = vmatpush.bf16.msra.mxu0 %v3956
    %4040 = vmatmul.bf16.gmra.mxu0 %v3826
    %v4041 = vpop.f32.mrf.mxu0
    %v4042 = vadd.f32 0.0, %v4041
    %v4043 = vpop.f32.mrf.mxu0
    %4044 = vdwg.mxu0
    %4045 = vmatpush.bf16.msra.mxu0 %v3985
    %4046 = vmatpush.bf16.msra.mxu0 %v3981
    %4047 = vmatpush.bf16.msra.mxu0 %v3977
    %4048 = vmatpush.bf16.msra.mxu0 %v3973
    %4049 = vmatpush.bf16.msra.mxu0 %v3969
    %4050 = vmatpush.bf16.msra.mxu0 %v3965
    %4051 = vmatpush.bf16.msra.mxu0 %v3961
    %4052 = vmatpush.bf16.msra.mxu0 %v3957
    %4053 = vmatmul.bf16.gmra.mxu0 %v3826
    %v4054 = vpop.f32.mrf.mxu0
    %v4055 = vadd.f32 0.0, %v4054
    %v4056 = vpop.f32.mrf.mxu0
    %4057 = vdwg.mxu0
    %4058 = vmatpush.bf16.msra.mxu0 %v3986
    %4059 = vmatpush.bf16.msra.mxu0 %v3982
    %4060 = vmatpush.bf16.msra.mxu0 %v3978
    %4061 = vmatpush.bf16.msra.mxu0 %v3974
    %4062 = vmatpush.bf16.msra.mxu0 %v3970
    %4063 = vmatpush.bf16.msra.mxu0 %v3966
    %4064 = vmatpush.bf16.msra.mxu0 %v3962
    %4065 = vmatpush.bf16.msra.mxu0 %v3958
    %4066 = vmatmul.bf16.gmra.mxu0 %v3826
    %v4067 = vpop.f32.mrf.mxu0
    %v4068 = vadd.f32 0.0, %v4067
    %v4069 = vpop.f32.mrf.mxu0
    %4070 = vdwg.mxu0
    %v4071 = vadd.f32 %v3822, %v4029
    %v4072 = vadd.f32 %v3823, %v4042
    %v4073 = vadd.f32 %v3824, %v4055
    %v4074 = vadd.f32 %v3825, %v4068
    %v4075 = vmul.f32 %v4071, 0.5
    %v4076 = vmul.f32 %v4072, 0.5
    %v4077 = vmul.f32 %v4073, 0.5
    %v4078 = vtanh.pop %v4075
    %v4079 = vtanh.pop %v4076
    %v4080 = vtanh.pop %v4077
    %v4081 = vmul.f32 %v4078, 0.5
    %v4082 = vmul.f32 %v4079, 0.5
    %v4083 = vmul.f32 %v4080, 0.5
    %v4084 = vadd.f32 %v4081, 0.5
    %v4085 = vadd.f32 %v4082, 0.5
    %v4086 = vadd.f32 %v4083, 0.5
    %v4087 = vtanh.pop %v4074
    %v4088 = vmul.f32 %v4085, %v3546
    %v4089 = vmul.f32 %v4084, %v4087
    %v4090 = vadd.f32 %v4088, %v4089
    %v4091 = vtanh.pop %v4090
    %v4092 = vmul.f32 %v4086, %v4091
    %4093 = vst [vmem:[#allocation4 + $0x30] sm:$0xff] %v4092
    %v4094 = vld [vmem:[#allocation3 + $0x20] sm:$0xff]
    %v4095 = vld [vmem:[#allocation3 + $0x28] sm:$0xff]
    %v4096 = vld [vmem:[#allocation3 + $0x30] sm:$0xff]
    %v4097 = vld [vmem:[#allocation3 + $0x38] sm:$0xff]
    %v4098 = vpack.c.bf16 %v3820, %v3820
    %v4099 = vld [vmem:[#allocation11] sm:$0xff]
    %v4100 = vld [vmem:[#allocation11 + $0x8] sm:$0xff]
    %v4101 = vld [vmem:[#allocation11 + $0x10] sm:$0xff]
    %v4102 = vld [vmem:[#allocation11 + $0x18] sm:$0xff]
    %v4103 = vld [vmem:[#allocation11 + $0x20] sm:$0xff]
    %v4104 = vld [vmem:[#allocation11 + $0x28] sm:$0xff]
    %v4105 = vld [vmem:[#allocation11 + $0x30] sm:$0xff]
    %v4106 = vld [vmem:[#allocation11 + $0x38] sm:$0xff]
    %v4107 = vld [vmem:[#allocation11 + $0x40] sm:$0xff]
    %v4108 = vld [vmem:[#allocation11 + $0x48] sm:$0xff]
    %v4109 = vld [vmem:[#allocation11 + $0x50] sm:$0xff]
    %v4110 = vld [vmem:[#allocation11 + $0x58] sm:$0xff]
    %v4111 = vld [vmem:[#allocation11 + $0x60] sm:$0xff]
    %v4112 = vld [vmem:[#allocation11 + $0x68] sm:$0xff]
    %v4113 = vld [vmem:[#allocation11 + $0x70] sm:$0xff]
    %v4114 = vld [vmem:[#allocation11 + $0x78] sm:$0xff]
    %v4115 = vld [vmem:[#allocation11 + $0x80] sm:$0xff]
    %v4116 = vld [vmem:[#allocation11 + $0x88] sm:$0xff]
    %v4117 = vld [vmem:[#allocation11 + $0x90] sm:$0xff]
    %v4118 = vld [vmem:[#allocation11 + $0x98] sm:$0xff]
    %v4119 = vld [vmem:[#allocation11 + $0xa0] sm:$0xff]
    %v4120 = vld [vmem:[#allocation11 + $0xa8] sm:$0xff]
    %v4121 = vld [vmem:[#allocation11 + $0xb0] sm:$0xff]
    %v4122 = vld [vmem:[#allocation11 + $0xb8] sm:$0xff]
    %v4123 = vld [vmem:[#allocation11 + $0xc0] sm:$0xff]
    %v4124 = vld [vmem:[#allocation11 + $0xc8] sm:$0xff]
    %v4125 = vld [vmem:[#allocation11 + $0xd0] sm:$0xff]
    %v4126 = vld [vmem:[#allocation11 + $0xd8] sm:$0xff]
    %v4127 = vld [vmem:[#allocation11 + $0xe0] sm:$0xff]
    %v4128 = vld [vmem:[#allocation11 + $0xe8] sm:$0xff]
    %v4129 = vld [vmem:[#allocation11 + $0xf0] sm:$0xff]
    %v4130 = vld [vmem:[#allocation11 + $0xf8] sm:$0xff]
    %v4163 = vunpack.c.l.b16 %v4099
    %v4164 = vunpack.c.h.b16 %v4099
    %v4165 = vunpack.c.l.b16 %v4100
    %v4166 = vunpack.c.h.b16 %v4100
    %v4167 = vunpack.c.l.b16 %v4101
    %v4168 = vunpack.c.h.b16 %v4101
    %v4169 = vunpack.c.l.b16 %v4102
    %v4170 = vunpack.c.h.b16 %v4102
    %v4171 = vunpack.c.l.b16 %v4103
    %v4172 = vunpack.c.h.b16 %v4103
    %v4173 = vunpack.c.l.b16 %v4104
    %v4174 = vunpack.c.h.b16 %v4104
    %v4175 = vunpack.c.l.b16 %v4105
    %v4176 = vunpack.c.h.b16 %v4105
    %v4177 = vunpack.c.l.b16 %v4106
    %v4178 = vunpack.c.h.b16 %v4106
    %v4179 = vunpack.c.l.b16 %v4107
    %v4180 = vunpack.c.h.b16 %v4107
    %v4181 = vunpack.c.l.b16 %v4108
    %v4182 = vunpack.c.h.b16 %v4108
    %v4183 = vunpack.c.l.b16 %v4109
    %v4184 = vunpack.c.h.b16 %v4109
    %v4185 = vunpack.c.l.b16 %v4110
    %v4186 = vunpack.c.h.b16 %v4110
    %v4187 = vunpack.c.l.b16 %v4111
    %v4188 = vunpack.c.h.b16 %v4111
    %v4189 = vunpack.c.l.b16 %v4112
    %v4190 = vunpack.c.h.b16 %v4112
    %v4191 = vunpack.c.l.b16 %v4113
    %v4192 = vunpack.c.h.b16 %v4113
    %v4193 = vunpack.c.l.b16 %v4114
    %v4194 = vunpack.c.h.b16 %v4114
    %v4195 = vunpack.c.l.b16 %v4115
    %v4196 = vunpack.c.h.b16 %v4115
    %v4197 = vunpack.c.l.b16 %v4116
    %v4198 = vunpack.c.h.b16 %v4116
    %v4199 = vunpack.c.l.b16 %v4117
    %v4200 = vunpack.c.h.b16 %v4117
    %v4201 = vunpack.c.l.b16 %v4118
    %v4202 = vunpack.c.h.b16 %v4118
    %v4203 = vunpack.c.l.b16 %v4119
    %v4204 = vunpack.c.h.b16 %v4119
    %v4205 = vunpack.c.l.b16 %v4120
    %v4206 = vunpack.c.h.b16 %v4120
    %v4207 = vunpack.c.l.b16 %v4121
    %v4208 = vunpack.c.h.b16 %v4121
    %v4209 = vunpack.c.l.b16 %v4122
    %v4210 = vunpack.c.h.b16 %v4122
    %v4211 = vunpack.c.l.b16 %v4123
    %v4212 = vunpack.c.h.b16 %v4123
    %v4213 = vunpack.c.l.b16 %v4124
    %v4214 = vunpack.c.h.b16 %v4124
    %v4215 = vunpack.c.l.b16 %v4125
    %v4216 = vunpack.c.h.b16 %v4125
    %v4217 = vunpack.c.l.b16 %v4126
    %v4218 = vunpack.c.h.b16 %v4126
    %v4219 = vunpack.c.l.b16 %v4127
    %v4220 = vunpack.c.h.b16 %v4127
    %v4221 = vunpack.c.l.b16 %v4128
    %v4222 = vunpack.c.h.b16 %v4128
    %v4223 = vunpack.c.l.b16 %v4129
    %v4224 = vunpack.c.h.b16 %v4129
    %v4225 = vunpack.c.l.b16 %v4130
    %v4226 = vunpack.c.h.b16 %v4130
    %v4227 = vpack.c.b16 %v4167, %v4163
    %v4228 = vpack.c.b16 %v4168, %v4164
    %v4229 = vpack.c.b16 %v4169, %v4165
    %v4230 = vpack.c.b16 %v4170, %v4166
    %v4231 = vpack.c.b16 %v4175, %v4171
    %v4232 = vpack.c.b16 %v4176, %v4172
    %v4233 = vpack.c.b16 %v4177, %v4173
    %v4234 = vpack.c.b16 %v4178, %v4174
    %v4235 = vpack.c.b16 %v4183, %v4179
    %v4236 = vpack.c.b16 %v4184, %v4180
    %v4237 = vpack.c.b16 %v4185, %v4181
    %v4238 = vpack.c.b16 %v4186, %v4182
    %v4239 = vpack.c.b16 %v4191, %v4187
    %v4240 = vpack.c.b16 %v4192, %v4188
    %v4241 = vpack.c.b16 %v4193, %v4189
    %v4242 = vpack.c.b16 %v4194, %v4190
    %v4243 = vpack.c.b16 %v4199, %v4195
    %v4244 = vpack.c.b16 %v4200, %v4196
    %v4245 = vpack.c.b16 %v4201, %v4197
    %v4246 = vpack.c.b16 %v4202, %v4198
    %v4247 = vpack.c.b16 %v4207, %v4203
    %v4248 = vpack.c.b16 %v4208, %v4204
    %v4249 = vpack.c.b16 %v4209, %v4205
    %v4250 = vpack.c.b16 %v4210, %v4206
    %v4251 = vpack.c.b16 %v4215, %v4211
    %v4252 = vpack.c.b16 %v4216, %v4212
    %v4253 = vpack.c.b16 %v4217, %v4213
    %v4254 = vpack.c.b16 %v4218, %v4214
    %v4255 = vpack.c.b16 %v4223, %v4219
    %v4256 = vpack.c.b16 %v4224, %v4220
    %v4257 = vpack.c.b16 %v4225, %v4221
    %v4258 = vpack.c.b16 %v4226, %v4222
    %4291 = vmatpush.bf16.msra.mxu0 %v4255
    %4292 = vmatpush.bf16.msra.mxu0 %v4251
    %4293 = vmatpush.bf16.msra.mxu0 %v4247
    %4294 = vmatpush.bf16.msra.mxu0 %v4243
    %4295 = vmatpush.bf16.msra.mxu0 %v4239
    %4296 = vmatpush.bf16.msra.mxu0 %v4235
    %4297 = vmatpush.bf16.msra.mxu0 %v4231
    %4298 = vmatpush.bf16.msra.mxu0 %v4227
    %4299 = vmatmul.bf16.gmra.mxu0 %v4098
    %v4300 = vpop.f32.mrf.mxu0
    %v4301 = vadd.f32 0.0, %v4300
    %v4302 = vpop.f32.mrf.mxu0
    %4303 = vdwg.mxu0
    %4304 = vmatpush.bf16.msra.mxu0 %v4256
    %4305 = vmatpush.bf16.msra.mxu0 %v4252
    %4306 = vmatpush.bf16.msra.mxu0 %v4248
    %4307 = vmatpush.bf16.msra.mxu0 %v4244
    %4308 = vmatpush.bf16.msra.mxu0 %v4240
    %4309 = vmatpush.bf16.msra.mxu0 %v4236
    %4310 = vmatpush.bf16.msra.mxu0 %v4232
    %4311 = vmatpush.bf16.msra.mxu0 %v4228
    %4312 = vmatmul.bf16.gmra.mxu0 %v4098
    %v4313 = vpop.f32.mrf.mxu0
    %v4314 = vadd.f32 0.0, %v4313
    %v4315 = vpop.f32.mrf.mxu0
    %4316 = vdwg.mxu0
    %4317 = vmatpush.bf16.msra.mxu0 %v4257
    %4318 = vmatpush.bf16.msra.mxu0 %v4253
    %4319 = vmatpush.bf16.msra.mxu0 %v4249
    %4320 = vmatpush.bf16.msra.mxu0 %v4245
    %4321 = vmatpush.bf16.msra.mxu0 %v4241
    %4322 = vmatpush.bf16.msra.mxu0 %v4237
    %4323 = vmatpush.bf16.msra.mxu0 %v4233
    %4324 = vmatpush.bf16.msra.mxu0 %v4229
    %4325 = vmatmul.bf16.gmra.mxu0 %v4098
    %v4326 = vpop.f32.mrf.mxu0
    %v4327 = vadd.f32 0.0, %v4326
    %v4328 = vpop.f32.mrf.mxu0
    %4329 = vdwg.mxu0
    %4330 = vmatpush.bf16.msra.mxu0 %v4258
    %4331 = vmatpush.bf16.msra.mxu0 %v4254
    %4332 = vmatpush.bf16.msra.mxu0 %v4250
    %4333 = vmatpush.bf16.msra.mxu0 %v4246
    %4334 = vmatpush.bf16.msra.mxu0 %v4242
    %4335 = vmatpush.bf16.msra.mxu0 %v4238
    %4336 = vmatpush.bf16.msra.mxu0 %v4234
    %4337 = vmatpush.bf16.msra.mxu0 %v4230
    %4338 = vmatmul.bf16.gmra.mxu0 %v4098
    %v4339 = vpop.f32.mrf.mxu0
    %v4340 = vadd.f32 0.0, %v4339
    %v4341 = vpop.f32.mrf.mxu0
    %4342 = vdwg.mxu0
    %v4343 = vadd.f32 %v4094, %v4301
    %v4344 = vadd.f32 %v4095, %v4314
    %v4345 = vadd.f32 %v4096, %v4327
    %v4346 = vadd.f32 %v4097, %v4340
    %v4347 = vmul.f32 %v4343, 0.5
    %v4348 = vmul.f32 %v4344, 0.5
    %v4349 = vmul.f32 %v4345, 0.5
    %v4350 = vtanh.pop %v4347
    %v4351 = vtanh.pop %v4348
    %v4352 = vtanh.pop %v4349
    %v4353 = vmul.f32 %v4350, 0.5
    %v4354 = vmul.f32 %v4351, 0.5
    %v4355 = vmul.f32 %v4352, 0.5
    %v4356 = vadd.f32 %v4353, 0.5
    %v4357 = vadd.f32 %v4354, 0.5
    %v4358 = vadd.f32 %v4355, 0.5
    %v4359 = vtanh.pop %v4346
    %v4360 = vmul.f32 %v4357, %v3818
    %v4361 = vmul.f32 %v4356, %v4359
    %v4362 = vadd.f32 %v4360, %v4361
    %v4363 = vtanh.pop %v4362
    %v4364 = vmul.f32 %v4358, %v4363
    %4365 = vst [vmem:[#allocation5 + $0x8] sm:$0xff] %v4364
    %v4366 = vld [vmem:[#allocation2 + $0xe0] sm:$0xff]
    %v4367 = vld [vmem:[#allocation2 + $0xe8] sm:$0xff]
    %v4368 = vld [vmem:[#allocation2 + $0xf0] sm:$0xff]
    %v4369 = vld [vmem:[#allocation2 + $0xf8] sm:$0xff]
    %v4370 = vpack.c.bf16 %v4092, %v4092
    %v4371 = vld [vmem:[#allocation9] sm:$0xff]
    %v4372 = vld [vmem:[#allocation9 + $0x8] sm:$0xff]
    %v4373 = vld [vmem:[#allocation9 + $0x10] sm:$0xff]
    %v4374 = vld [vmem:[#allocation9 + $0x18] sm:$0xff]
    %v4375 = vld [vmem:[#allocation9 + $0x20] sm:$0xff]
    %v4376 = vld [vmem:[#allocation9 + $0x28] sm:$0xff]
    %v4377 = vld [vmem:[#allocation9 + $0x30] sm:$0xff]
    %v4378 = vld [vmem:[#allocation9 + $0x38] sm:$0xff]
    %v4379 = vld [vmem:[#allocation9 + $0x40] sm:$0xff]
    %v4380 = vld [vmem:[#allocation9 + $0x48] sm:$0xff]
    %v4381 = vld [vmem:[#allocation9 + $0x50] sm:$0xff]
    %v4382 = vld [vmem:[#allocation9 + $0x58] sm:$0xff]
    %v4383 = vld [vmem:[#allocation9 + $0x60] sm:$0xff]
    %v4384 = vld [vmem:[#allocation9 + $0x68] sm:$0xff]
    %v4385 = vld [vmem:[#allocation9 + $0x70] sm:$0xff]
    %v4386 = vld [vmem:[#allocation9 + $0x78] sm:$0xff]
    %v4387 = vld [vmem:[#allocation9 + $0x80] sm:$0xff]
    %v4388 = vld [vmem:[#allocation9 + $0x88] sm:$0xff]
    %v4389 = vld [vmem:[#allocation9 + $0x90] sm:$0xff]
    %v4390 = vld [vmem:[#allocation9 + $0x98] sm:$0xff]
    %v4391 = vld [vmem:[#allocation9 + $0xa0] sm:$0xff]
    %v4392 = vld [vmem:[#allocation9 + $0xa8] sm:$0xff]
    %v4393 = vld [vmem:[#allocation9 + $0xb0] sm:$0xff]
    %v4394 = vld [vmem:[#allocation9 + $0xb8] sm:$0xff]
    %v4395 = vld [vmem:[#allocation9 + $0xc0] sm:$0xff]
    %v4396 = vld [vmem:[#allocation9 + $0xc8] sm:$0xff]
    %v4397 = vld [vmem:[#allocation9 + $0xd0] sm:$0xff]
    %v4398 = vld [vmem:[#allocation9 + $0xd8] sm:$0xff]
    %v4399 = vld [vmem:[#allocation9 + $0xe0] sm:$0xff]
    %v4400 = vld [vmem:[#allocation9 + $0xe8] sm:$0xff]
    %v4401 = vld [vmem:[#allocation9 + $0xf0] sm:$0xff]
    %v4402 = vld [vmem:[#allocation9 + $0xf8] sm:$0xff]
    %v4435 = vunpack.c.l.b16 %v4371
    %v4436 = vunpack.c.h.b16 %v4371
    %v4437 = vunpack.c.l.b16 %v4372
    %v4438 = vunpack.c.h.b16 %v4372
    %v4439 = vunpack.c.l.b16 %v4373
    %v4440 = vunpack.c.h.b16 %v4373
    %v4441 = vunpack.c.l.b16 %v4374
    %v4442 = vunpack.c.h.b16 %v4374
    %v4443 = vunpack.c.l.b16 %v4375
    %v4444 = vunpack.c.h.b16 %v4375
    %v4445 = vunpack.c.l.b16 %v4376
    %v4446 = vunpack.c.h.b16 %v4376
    %v4447 = vunpack.c.l.b16 %v4377
    %v4448 = vunpack.c.h.b16 %v4377
    %v4449 = vunpack.c.l.b16 %v4378
    %v4450 = vunpack.c.h.b16 %v4378
    %v4451 = vunpack.c.l.b16 %v4379
    %v4452 = vunpack.c.h.b16 %v4379
    %v4453 = vunpack.c.l.b16 %v4380
    %v4454 = vunpack.c.h.b16 %v4380
    %v4455 = vunpack.c.l.b16 %v4381
    %v4456 = vunpack.c.h.b16 %v4381
    %v4457 = vunpack.c.l.b16 %v4382
    %v4458 = vunpack.c.h.b16 %v4382
    %v4459 = vunpack.c.l.b16 %v4383
    %v4460 = vunpack.c.h.b16 %v4383
    %v4461 = vunpack.c.l.b16 %v4384
    %v4462 = vunpack.c.h.b16 %v4384
    %v4463 = vunpack.c.l.b16 %v4385
    %v4464 = vunpack.c.h.b16 %v4385
    %v4465 = vunpack.c.l.b16 %v4386
    %v4466 = vunpack.c.h.b16 %v4386
    %v4467 = vunpack.c.l.b16 %v4387
    %v4468 = vunpack.c.h.b16 %v4387
    %v4469 = vunpack.c.l.b16 %v4388
    %v4470 = vunpack.c.h.b16 %v4388
    %v4471 = vunpack.c.l.b16 %v4389
    %v4472 = vunpack.c.h.b16 %v4389
    %v4473 = vunpack.c.l.b16 %v4390
    %v4474 = vunpack.c.h.b16 %v4390
    %v4475 = vunpack.c.l.b16 %v4391
    %v4476 = vunpack.c.h.b16 %v4391
    %v4477 = vunpack.c.l.b16 %v4392
    %v4478 = vunpack.c.h.b16 %v4392
    %v4479 = vunpack.c.l.b16 %v4393
    %v4480 = vunpack.c.h.b16 %v4393
    %v4481 = vunpack.c.l.b16 %v4394
    %v4482 = vunpack.c.h.b16 %v4394
    %v4483 = vunpack.c.l.b16 %v4395
    %v4484 = vunpack.c.h.b16 %v4395
    %v4485 = vunpack.c.l.b16 %v4396
    %v4486 = vunpack.c.h.b16 %v4396
    %v4487 = vunpack.c.l.b16 %v4397
    %v4488 = vunpack.c.h.b16 %v4397
    %v4489 = vunpack.c.l.b16 %v4398
    %v4490 = vunpack.c.h.b16 %v4398
    %v4491 = vunpack.c.l.b16 %v4399
    %v4492 = vunpack.c.h.b16 %v4399
    %v4493 = vunpack.c.l.b16 %v4400
    %v4494 = vunpack.c.h.b16 %v4400
    %v4495 = vunpack.c.l.b16 %v4401
    %v4496 = vunpack.c.h.b16 %v4401
    %v4497 = vunpack.c.l.b16 %v4402
    %v4498 = vunpack.c.h.b16 %v4402
    %v4499 = vpack.c.b16 %v4439, %v4435
    %v4500 = vpack.c.b16 %v4440, %v4436
    %v4501 = vpack.c.b16 %v4441, %v4437
    %v4502 = vpack.c.b16 %v4442, %v4438
    %v4503 = vpack.c.b16 %v4447, %v4443
    %v4504 = vpack.c.b16 %v4448, %v4444
    %v4505 = vpack.c.b16 %v4449, %v4445
    %v4506 = vpack.c.b16 %v4450, %v4446
    %v4507 = vpack.c.b16 %v4455, %v4451
    %v4508 = vpack.c.b16 %v4456, %v4452
    %v4509 = vpack.c.b16 %v4457, %v4453
    %v4510 = vpack.c.b16 %v4458, %v4454
    %v4511 = vpack.c.b16 %v4463, %v4459
    %v4512 = vpack.c.b16 %v4464, %v4460
    %v4513 = vpack.c.b16 %v4465, %v4461
    %v4514 = vpack.c.b16 %v4466, %v4462
    %v4515 = vpack.c.b16 %v4471, %v4467
    %v4516 = vpack.c.b16 %v4472, %v4468
    %v4517 = vpack.c.b16 %v4473, %v4469
    %v4518 = vpack.c.b16 %v4474, %v4470
    %v4519 = vpack.c.b16 %v4479, %v4475
    %v4520 = vpack.c.b16 %v4480, %v4476
    %v4521 = vpack.c.b16 %v4481, %v4477
    %v4522 = vpack.c.b16 %v4482, %v4478
    %v4523 = vpack.c.b16 %v4487, %v4483
    %v4524 = vpack.c.b16 %v4488, %v4484
    %v4525 = vpack.c.b16 %v4489, %v4485
    %v4526 = vpack.c.b16 %v4490, %v4486
    %v4527 = vpack.c.b16 %v4495, %v4491
    %v4528 = vpack.c.b16 %v4496, %v4492
    %v4529 = vpack.c.b16 %v4497, %v4493
    %v4530 = vpack.c.b16 %v4498, %v4494
    %4563 = vmatpush.bf16.msra.mxu0 %v4527
    %4564 = vmatpush.bf16.msra.mxu0 %v4523
    %4565 = vmatpush.bf16.msra.mxu0 %v4519
    %4566 = vmatpush.bf16.msra.mxu0 %v4515
    %4567 = vmatpush.bf16.msra.mxu0 %v4511
    %4568 = vmatpush.bf16.msra.mxu0 %v4507
    %4569 = vmatpush.bf16.msra.mxu0 %v4503
    %4570 = vmatpush.bf16.msra.mxu0 %v4499
    %4571 = vmatmul.bf16.gmra.mxu0 %v4370
    %v4572 = vpop.f32.mrf.mxu0
    %v4573 = vadd.f32 0.0, %v4572
    %v4574 = vpop.f32.mrf.mxu0
    %4575 = vdwg.mxu0
    %4576 = vmatpush.bf16.msra.mxu0 %v4528
    %4577 = vmatpush.bf16.msra.mxu0 %v4524
    %4578 = vmatpush.bf16.msra.mxu0 %v4520
    %4579 = vmatpush.bf16.msra.mxu0 %v4516
    %4580 = vmatpush.bf16.msra.mxu0 %v4512
    %4581 = vmatpush.bf16.msra.mxu0 %v4508
    %4582 = vmatpush.bf16.msra.mxu0 %v4504
    %4583 = vmatpush.bf16.msra.mxu0 %v4500
    %4584 = vmatmul.bf16.gmra.mxu0 %v4370
    %v4585 = vpop.f32.mrf.mxu0
    %v4586 = vadd.f32 0.0, %v4585
    %v4587 = vpop.f32.mrf.mxu0
    %4588 = vdwg.mxu0
    %4589 = vmatpush.bf16.msra.mxu0 %v4529
    %4590 = vmatpush.bf16.msra.mxu0 %v4525
    %4591 = vmatpush.bf16.msra.mxu0 %v4521
    %4592 = vmatpush.bf16.msra.mxu0 %v4517
    %4593 = vmatpush.bf16.msra.mxu0 %v4513
    %4594 = vmatpush.bf16.msra.mxu0 %v4509
    %4595 = vmatpush.bf16.msra.mxu0 %v4505
    %4596 = vmatpush.bf16.msra.mxu0 %v4501
    %4597 = vmatmul.bf16.gmra.mxu0 %v4370
    %v4598 = vpop.f32.mrf.mxu0
    %v4599 = vadd.f32 0.0, %v4598
    %v4600 = vpop.f32.mrf.mxu0
    %4601 = vdwg.mxu0
    %4602 = vmatpush.bf16.msra.mxu0 %v4530
    %4603 = vmatpush.bf16.msra.mxu0 %v4526
    %4604 = vmatpush.bf16.msra.mxu0 %v4522
    %4605 = vmatpush.bf16.msra.mxu0 %v4518
    %4606 = vmatpush.bf16.msra.mxu0 %v4514
    %4607 = vmatpush.bf16.msra.mxu0 %v4510
    %4608 = vmatpush.bf16.msra.mxu0 %v4506
    %4609 = vmatpush.bf16.msra.mxu0 %v4502
    %4610 = vmatmul.bf16.gmra.mxu0 %v4370
    %v4611 = vpop.f32.mrf.mxu0
    %v4612 = vadd.f32 0.0, %v4611
    %v4613 = vpop.f32.mrf.mxu0
    %4614 = vdwg.mxu0
    %v4615 = vadd.f32 %v4366, %v4573
    %v4616 = vadd.f32 %v4367, %v4586
    %v4617 = vadd.f32 %v4368, %v4599
    %v4618 = vadd.f32 %v4369, %v4612
    %v4619 = vmul.f32 %v4615, 0.5
    %v4620 = vmul.f32 %v4616, 0.5
    %v4621 = vmul.f32 %v4617, 0.5
    %v4622 = vtanh.pop %v4619
    %v4623 = vtanh.pop %v4620
    %v4624 = vtanh.pop %v4621
    %v4625 = vmul.f32 %v4622, 0.5
    %v4626 = vmul.f32 %v4623, 0.5
    %v4627 = vmul.f32 %v4624, 0.5
    %v4628 = vadd.f32 %v4625, 0.5
    %v4629 = vadd.f32 %v4626, 0.5
    %v4630 = vadd.f32 %v4627, 0.5
    %v4631 = vtanh.pop %v4618
    %v4632 = vmul.f32 %v4629, %v4090
    %v4633 = vmul.f32 %v4628, %v4631
    %v4634 = vadd.f32 %v4632, %v4633
    %v4635 = vtanh.pop %v4634
    %v4636 = vmul.f32 %v4630, %v4635
    %4637 = vst [vmem:[#allocation4 + $0x38] sm:$0xff] %v4636
    %v4638 = vld [vmem:[#allocation3] sm:$0xff]
    %v4639 = vld [vmem:[#allocation3 + $0x8] sm:$0xff]
    %v4640 = vld [vmem:[#allocation3 + $0x10] sm:$0xff]
    %v4641 = vld [vmem:[#allocation3 + $0x18] sm:$0xff]
    %v4642 = vpack.c.bf16 %v4364, %v4364
    %v4643 = vld [vmem:[#allocation11] sm:$0xff]
    %v4644 = vld [vmem:[#allocation11 + $0x8] sm:$0xff]
    %v4645 = vld [vmem:[#allocation11 + $0x10] sm:$0xff]
    %v4646 = vld [vmem:[#allocation11 + $0x18] sm:$0xff]
    %v4647 = vld [vmem:[#allocation11 + $0x20] sm:$0xff]
    %v4648 = vld [vmem:[#allocation11 + $0x28] sm:$0xff]
    %v4649 = vld [vmem:[#allocation11 + $0x30] sm:$0xff]
    %v4650 = vld [vmem:[#allocation11 + $0x38] sm:$0xff]
    %v4651 = vld [vmem:[#allocation11 + $0x40] sm:$0xff]
    %v4652 = vld [vmem:[#allocation11 + $0x48] sm:$0xff]
    %v4653 = vld [vmem:[#allocation11 + $0x50] sm:$0xff]
    %v4654 = vld [vmem:[#allocation11 + $0x58] sm:$0xff]
    %v4655 = vld [vmem:[#allocation11 + $0x60] sm:$0xff]
    %v4656 = vld [vmem:[#allocation11 + $0x68] sm:$0xff]
    %v4657 = vld [vmem:[#allocation11 + $0x70] sm:$0xff]
    %v4658 = vld [vmem:[#allocation11 + $0x78] sm:$0xff]
    %v4659 = vld [vmem:[#allocation11 + $0x80] sm:$0xff]
    %v4660 = vld [vmem:[#allocation11 + $0x88] sm:$0xff]
    %v4661 = vld [vmem:[#allocation11 + $0x90] sm:$0xff]
    %v4662 = vld [vmem:[#allocation11 + $0x98] sm:$0xff]
    %v4663 = vld [vmem:[#allocation11 + $0xa0] sm:$0xff]
    %v4664 = vld [vmem:[#allocation11 + $0xa8] sm:$0xff]
    %v4665 = vld [vmem:[#allocation11 + $0xb0] sm:$0xff]
    %v4666 = vld [vmem:[#allocation11 + $0xb8] sm:$0xff]
    %v4667 = vld [vmem:[#allocation11 + $0xc0] sm:$0xff]
    %v4668 = vld [vmem:[#allocation11 + $0xc8] sm:$0xff]
    %v4669 = vld [vmem:[#allocation11 + $0xd0] sm:$0xff]
    %v4670 = vld [vmem:[#allocation11 + $0xd8] sm:$0xff]
    %v4671 = vld [vmem:[#allocation11 + $0xe0] sm:$0xff]
    %v4672 = vld [vmem:[#allocation11 + $0xe8] sm:$0xff]
    %v4673 = vld [vmem:[#allocation11 + $0xf0] sm:$0xff]
    %v4674 = vld [vmem:[#allocation11 + $0xf8] sm:$0xff]
    %v4707 = vunpack.c.l.b16 %v4643
    %v4708 = vunpack.c.h.b16 %v4643
    %v4709 = vunpack.c.l.b16 %v4644
    %v4710 = vunpack.c.h.b16 %v4644
    %v4711 = vunpack.c.l.b16 %v4645
    %v4712 = vunpack.c.h.b16 %v4645
    %v4713 = vunpack.c.l.b16 %v4646
    %v4714 = vunpack.c.h.b16 %v4646
    %v4715 = vunpack.c.l.b16 %v4647
    %v4716 = vunpack.c.h.b16 %v4647
    %v4717 = vunpack.c.l.b16 %v4648
    %v4718 = vunpack.c.h.b16 %v4648
    %v4719 = vunpack.c.l.b16 %v4649
    %v4720 = vunpack.c.h.b16 %v4649
    %v4721 = vunpack.c.l.b16 %v4650
    %v4722 = vunpack.c.h.b16 %v4650
    %v4723 = vunpack.c.l.b16 %v4651
    %v4724 = vunpack.c.h.b16 %v4651
    %v4725 = vunpack.c.l.b16 %v4652
    %v4726 = vunpack.c.h.b16 %v4652
    %v4727 = vunpack.c.l.b16 %v4653
    %v4728 = vunpack.c.h.b16 %v4653
    %v4729 = vunpack.c.l.b16 %v4654
    %v4730 = vunpack.c.h.b16 %v4654
    %v4731 = vunpack.c.l.b16 %v4655
    %v4732 = vunpack.c.h.b16 %v4655
    %v4733 = vunpack.c.l.b16 %v4656
    %v4734 = vunpack.c.h.b16 %v4656
    %v4735 = vunpack.c.l.b16 %v4657
    %v4736 = vunpack.c.h.b16 %v4657
    %v4737 = vunpack.c.l.b16 %v4658
    %v4738 = vunpack.c.h.b16 %v4658
    %v4739 = vunpack.c.l.b16 %v4659
    %v4740 = vunpack.c.h.b16 %v4659
    %v4741 = vunpack.c.l.b16 %v4660
    %v4742 = vunpack.c.h.b16 %v4660
    %v4743 = vunpack.c.l.b16 %v4661
    %v4744 = vunpack.c.h.b16 %v4661
    %v4745 = vunpack.c.l.b16 %v4662
    %v4746 = vunpack.c.h.b16 %v4662
    %v4747 = vunpack.c.l.b16 %v4663
    %v4748 = vunpack.c.h.b16 %v4663
    %v4749 = vunpack.c.l.b16 %v4664
    %v4750 = vunpack.c.h.b16 %v4664
    %v4751 = vunpack.c.l.b16 %v4665
    %v4752 = vunpack.c.h.b16 %v4665
    %v4753 = vunpack.c.l.b16 %v4666
    %v4754 = vunpack.c.h.b16 %v4666
    %v4755 = vunpack.c.l.b16 %v4667
    %v4756 = vunpack.c.h.b16 %v4667
    %v4757 = vunpack.c.l.b16 %v4668
    %v4758 = vunpack.c.h.b16 %v4668
    %v4759 = vunpack.c.l.b16 %v4669
    %v4760 = vunpack.c.h.b16 %v4669
    %v4761 = vunpack.c.l.b16 %v4670
    %v4762 = vunpack.c.h.b16 %v4670
    %v4763 = vunpack.c.l.b16 %v4671
    %v4764 = vunpack.c.h.b16 %v4671
    %v4765 = vunpack.c.l.b16 %v4672
    %v4766 = vunpack.c.h.b16 %v4672
    %v4767 = vunpack.c.l.b16 %v4673
    %v4768 = vunpack.c.h.b16 %v4673
    %v4769 = vunpack.c.l.b16 %v4674
    %v4770 = vunpack.c.h.b16 %v4674
    %v4771 = vpack.c.b16 %v4711, %v4707
    %v4772 = vpack.c.b16 %v4712, %v4708
    %v4773 = vpack.c.b16 %v4713, %v4709
    %v4774 = vpack.c.b16 %v4714, %v4710
    %v4775 = vpack.c.b16 %v4719, %v4715
    %v4776 = vpack.c.b16 %v4720, %v4716
    %v4777 = vpack.c.b16 %v4721, %v4717
    %v4778 = vpack.c.b16 %v4722, %v4718
    %v4779 = vpack.c.b16 %v4727, %v4723
    %v4780 = vpack.c.b16 %v4728, %v4724
    %v4781 = vpack.c.b16 %v4729, %v4725
    %v4782 = vpack.c.b16 %v4730, %v4726
    %v4783 = vpack.c.b16 %v4735, %v4731
    %v4784 = vpack.c.b16 %v4736, %v4732
    %v4785 = vpack.c.b16 %v4737, %v4733
    %v4786 = vpack.c.b16 %v4738, %v4734
    %v4787 = vpack.c.b16 %v4743, %v4739
    %v4788 = vpack.c.b16 %v4744, %v4740
    %v4789 = vpack.c.b16 %v4745, %v4741
    %v4790 = vpack.c.b16 %v4746, %v4742
    %v4791 = vpack.c.b16 %v4751, %v4747
    %v4792 = vpack.c.b16 %v4752, %v4748
    %v4793 = vpack.c.b16 %v4753, %v4749
    %v4794 = vpack.c.b16 %v4754, %v4750
    %v4795 = vpack.c.b16 %v4759, %v4755
    %v4796 = vpack.c.b16 %v4760, %v4756
    %v4797 = vpack.c.b16 %v4761, %v4757
    %v4798 = vpack.c.b16 %v4762, %v4758
    %v4799 = vpack.c.b16 %v4767, %v4763
    %v4800 = vpack.c.b16 %v4768, %v4764
    %v4801 = vpack.c.b16 %v4769, %v4765
    %v4802 = vpack.c.b16 %v4770, %v4766
    %4835 = vmatpush.bf16.msra.mxu0 %v4799
    %4836 = vmatpush.bf16.msra.mxu0 %v4795
    %4837 = vmatpush.bf16.msra.mxu0 %v4791
    %4838 = vmatpush.bf16.msra.mxu0 %v4787
    %4839 = vmatpush.bf16.msra.mxu0 %v4783
    %4840 = vmatpush.bf16.msra.mxu0 %v4779
    %4841 = vmatpush.bf16.msra.mxu0 %v4775
    %4842 = vmatpush.bf16.msra.mxu0 %v4771
    %4843 = vmatmul.bf16.gmra.mxu0 %v4642
    %v4844 = vpop.f32.mrf.mxu0
    %v4845 = vadd.f32 0.0, %v4844
    %v4846 = vpop.f32.mrf.mxu0
    %4847 = vdwg.mxu0
    %4848 = vmatpush.bf16.msra.mxu0 %v4800
    %4849 = vmatpush.bf16.msra.mxu0 %v4796
    %4850 = vmatpush.bf16.msra.mxu0 %v4792
    %4851 = vmatpush.bf16.msra.mxu0 %v4788
    %4852 = vmatpush.bf16.msra.mxu0 %v4784
    %4853 = vmatpush.bf16.msra.mxu0 %v4780
    %4854 = vmatpush.bf16.msra.mxu0 %v4776
    %4855 = vmatpush.bf16.msra.mxu0 %v4772
    %4856 = vmatmul.bf16.gmra.mxu0 %v4642
    %v4857 = vpop.f32.mrf.mxu0
    %v4858 = vadd.f32 0.0, %v4857
    %v4859 = vpop.f32.mrf.mxu0
    %4860 = vdwg.mxu0
    %4861 = vmatpush.bf16.msra.mxu0 %v4801
    %4862 = vmatpush.bf16.msra.mxu0 %v4797
    %4863 = vmatpush.bf16.msra.mxu0 %v4793
    %4864 = vmatpush.bf16.msra.mxu0 %v4789
    %4865 = vmatpush.bf16.msra.mxu0 %v4785
    %4866 = vmatpush.bf16.msra.mxu0 %v4781
    %4867 = vmatpush.bf16.msra.mxu0 %v4777
    %4868 = vmatpush.bf16.msra.mxu0 %v4773
    %4869 = vmatmul.bf16.gmra.mxu0 %v4642
    %v4870 = vpop.f32.mrf.mxu0
    %v4871 = vadd.f32 0.0, %v4870
    %v4872 = vpop.f32.mrf.mxu0
    %4873 = vdwg.mxu0
    %4874 = vmatpush.bf16.msra.mxu0 %v4802
    %4875 = vmatpush.bf16.msra.mxu0 %v4798
    %4876 = vmatpush.bf16.msra.mxu0 %v4794
    %4877 = vmatpush.bf16.msra.mxu0 %v4790
    %4878 = vmatpush.bf16.msra.mxu0 %v4786
    %4879 = vmatpush.bf16.msra.mxu0 %v4782
    %4880 = vmatpush.bf16.msra.mxu0 %v4778
    %4881 = vmatpush.bf16.msra.mxu0 %v4774
    %4882 = vmatmul.bf16.gmra.mxu0 %v4642
    %v4883 = vpop.f32.mrf.mxu0
    %v4884 = vadd.f32 0.0, %v4883
    %v4885 = vpop.f32.mrf.mxu0
    %4886 = vdwg.mxu0
    %v4887 = vadd.f32 %v4638, %v4845
    %v4888 = vadd.f32 %v4639, %v4858
    %v4889 = vadd.f32 %v4640, %v4871
    %v4890 = vadd.f32 %v4641, %v4884
    %v4891 = vmul.f32 %v4887, 0.5
    %v4892 = vmul.f32 %v4888, 0.5
    %v4893 = vmul.f32 %v4889, 0.5
    %v4894 = vtanh.pop %v4891
    %v4895 = vtanh.pop %v4892
    %v4896 = vtanh.pop %v4893
    %v4897 = vmul.f32 %v4894, 0.5
    %v4898 = vmul.f32 %v4895, 0.5
    %v4899 = vmul.f32 %v4896, 0.5
    %v4900 = vadd.f32 %v4897, 0.5
    %v4901 = vadd.f32 %v4898, 0.5
    %v4902 = vadd.f32 %v4899, 0.5
    %v4903 = vtanh.pop %v4890
    %v4904 = vmul.f32 %v4901, %v4362
    %v4905 = vmul.f32 %v4900, %v4903
    %v4906 = vadd.f32 %v4904, %v4905
    %v4907 = vtanh.pop %v4906
    %v4908 = vmul.f32 %v4902, %v4907
    %4909 = vst [vmem:[#allocation5] sm:$0xff] %v4908
    %v4910 = vld [vmem:[#allocation4] sm:$0xff]
    %v4911 = vld [vmem:[#allocation4 + $0x8] sm:$0xff]
    %v4912 = vld [vmem:[#allocation4 + $0x10] sm:$0xff]
    %v4913 = vld [vmem:[#allocation4 + $0x18] sm:$0xff]
    %v4914 = vld [vmem:[#allocation4 + $0x20] sm:$0xff]
    %v4915 = vld [vmem:[#allocation4 + $0x28] sm:$0xff]
    %v4916 = vld [vmem:[#allocation4 + $0x30] sm:$0xff]
    %v4917 = vld [vmem:[#allocation4 + $0x38] sm:$0xff]
    %v4918 = vld [vmem:[#allocation12] sm:$0xf]
    %v4919 = vld [vmem:[#allocation12 + $0x4] sm:$0xf]
    %v4920 = vld [vmem:[#allocation12 + $0x8] sm:$0xf]
    %v4921 = vld [vmem:[#allocation12 + $0xc] sm:$0xf]
    %v4922 = vld [vmem:[#allocation12 + $0x10] sm:$0xf]
    %v4923 = vld [vmem:[#allocation12 + $0x14] sm:$0xf]
    %v4924 = vld [vmem:[#allocation12 + $0x18] sm:$0xf]
    %v4925 = vld [vmem:[#allocation12 + $0x1c] sm:$0xf]
    %v4926 = vld [vmem:[#allocation12 + $0x20] sm:$0xf]
    %v4927 = vld [vmem:[#allocation12 + $0x24] sm:$0xf]
    %v4928 = vld [vmem:[#allocation12 + $0x28] sm:$0xf]
    %v4929 = vld [vmem:[#allocation12 + $0x2c] sm:$0xf]
    %v4930 = vld [vmem:[#allocation12 + $0x30] sm:$0xf]
    %v4931 = vld [vmem:[#allocation12 + $0x34] sm:$0xf]
    %v4932 = vld [vmem:[#allocation12 + $0x38] sm:$0xf]
    %v4933 = vld [vmem:[#allocation12 + $0x3c] sm:$0xf]
    %v4934 = vld [vmem:[#allocation5] sm:$0xff]
    %v4935 = vld [vmem:[#allocation5 + $0x8] sm:$0xff]
    %v4936 = vld [vmem:[#allocation5 + $0x10] sm:$0xff]
    %v4937 = vld [vmem:[#allocation5 + $0x18] sm:$0xff]
    %v4938 = vld [vmem:[#allocation5 + $0x20] sm:$0xff]
    %v4939 = vld [vmem:[#allocation5 + $0x28] sm:$0xff]
    %v4940 = vld [vmem:[#allocation5 + $0x30] sm:$0xff]
    %v4941 = vld [vmem:[#allocation5 + $0x38] sm:$0xff]
    %v4942 = vld [vmem:[#allocation14] sm:$0xf]
    %v4943 = vld [vmem:[#allocation14 + $0x4] sm:$0xf]
    %v4944 = vld [vmem:[#allocation14 + $0x8] sm:$0xf]
    %v4945 = vld [vmem:[#allocation14 + $0xc] sm:$0xf]
    %v4946 = vld [vmem:[#allocation14 + $0x10] sm:$0xf]
    %v4947 = vld [vmem:[#allocation14 + $0x14] sm:$0xf]
    %v4948 = vld [vmem:[#allocation14 + $0x18] sm:$0xf]
    %v4949 = vld [vmem:[#allocation14 + $0x1c] sm:$0xf]
    %v4950 = vld [vmem:[#allocation14 + $0x20] sm:$0xf]
    %v4951 = vld [vmem:[#allocation14 + $0x24] sm:$0xf]
    %v4952 = vld [vmem:[#allocation14 + $0x28] sm:$0xf]
    %v4953 = vld [vmem:[#allocation14 + $0x2c] sm:$0xf]
    %v4954 = vld [vmem:[#allocation14 + $0x30] sm:$0xf]
    %v4955 = vld [vmem:[#allocation14 + $0x34] sm:$0xf]
    %v4956 = vld [vmem:[#allocation14 + $0x38] sm:$0xf]
    %v4957 = vld [vmem:[#allocation14 + $0x3c] sm:$0xf]
    %v4974 = vunpack.c.l.b16 %v4942
    %v4975 = vunpack.c.l.b16 %v4943
    %v4976 = vunpack.c.l.b16 %v4944
    %v4977 = vunpack.c.l.b16 %v4945
    %v4978 = vunpack.c.l.b16 %v4946
    %v4979 = vunpack.c.l.b16 %v4947
    %v4980 = vunpack.c.l.b16 %v4948
    %v4981 = vunpack.c.l.b16 %v4949
    %v4982 = vunpack.c.l.b16 %v4950
    %v4983 = vunpack.c.l.b16 %v4951
    %v4984 = vunpack.c.l.b16 %v4952
    %v4985 = vunpack.c.l.b16 %v4953
    %v4986 = vunpack.c.l.b16 %v4954
    %v4987 = vunpack.c.l.b16 %v4955
    %v4988 = vunpack.c.l.b16 %v4956
    %v4989 = vunpack.c.l.b16 %v4957
    %v4990 = vpack.c.b16 %v4975, %v4974
    %v4991 = vpack.c.b16 %v4977, %v4976
    %v4992 = vpack.c.b16 %v4979, %v4978
    %v4993 = vpack.c.b16 %v4981, %v4980
    %v4994 = vpack.c.b16 %v4983, %v4982
    %v4995 = vpack.c.b16 %v4985, %v4984
    %v4996 = vpack.c.b16 %v4987, %v4986
    %v4997 = vpack.c.b16 %v4989, %v4988
    %5006 = vmatpush.bf16.msra.mxu0 %v4997
    %5007 = vmatpush.bf16.msra.mxu0 %v4996
    %5008 = vmatpush.bf16.msra.mxu0 %v4995
    %5009 = vmatpush.bf16.msra.mxu0 %v4994
    %5010 = vmatpush.bf16.msra.mxu0 %v4993
    %5011 = vmatpush.bf16.msra.mxu0 %v4992
    %5012 = vmatpush.bf16.msra.mxu0 %v4991
    %5013 = vmatpush.bf16.msra.mxu0 %v4990
    %5014 = vmatmul.f32.gmra.mxu0 %v4934
    %v5015 = vpop.f32.mrf.mxu0
    %v5016 = vadd.f32 0.0, %v5015
    %5017 = vmatmul.f32.gmra.mxu0 %v4935
    %v5018 = vpop.f32.mrf.mxu0
    %v5019 = vadd.f32 0.0, %v5018
    %5020 = vmatmul.f32.gmra.mxu0 %v4936
    %v5021 = vpop.f32.mrf.mxu0
    %v5022 = vadd.f32 0.0, %v5021
    %5023 = vmatmul.f32.gmra.mxu0 %v4937
    %v5024 = vpop.f32.mrf.mxu0
    %v5025 = vadd.f32 0.0, %v5024
    %5026 = vmatmul.f32.gmra.mxu0 %v4938
    %v5027 = vpop.f32.mrf.mxu0
    %v5028 = vadd.f32 0.0, %v5027
    %5029 = vmatmul.f32.gmra.mxu0 %v4939
    %v5030 = vpop.f32.mrf.mxu0
    %v5031 = vadd.f32 0.0, %v5030
    %5032 = vmatmul.f32.gmra.mxu0 %v4940
    %v5033 = vpop.f32.mrf.mxu0
    %v5034 = vadd.f32 0.0, %v5033
    %5035 = vmatmul.f32.gmra.mxu0 %v4941
    %v5036 = vpop.f32.mrf.mxu0
    %v5037 = vadd.f32 0.0, %v5036
    %5038 = vdwg.mxu0
    %v5055 = vunpack.c.l.b16 %v4918
    %v5056 = vunpack.c.l.b16 %v4919
    %v5057 = vunpack.c.l.b16 %v4920
    %v5058 = vunpack.c.l.b16 %v4921
    %v5059 = vunpack.c.l.b16 %v4922
    %v5060 = vunpack.c.l.b16 %v4923
    %v5061 = vunpack.c.l.b16 %v4924
    %v5062 = vunpack.c.l.b16 %v4925
    %v5063 = vunpack.c.l.b16 %v4926
    %v5064 = vunpack.c.l.b16 %v4927
    %v5065 = vunpack.c.l.b16 %v4928
    %v5066 = vunpack.c.l.b16 %v4929
    %v5067 = vunpack.c.l.b16 %v4930
    %v5068 = vunpack.c.l.b16 %v4931
    %v5069 = vunpack.c.l.b16 %v4932
    %v5070 = vunpack.c.l.b16 %v4933
    %v5071 = vpack.c.b16 %v5056, %v5055
    %v5072 = vpack.c.b16 %v5058, %v5057
    %v5073 = vpack.c.b16 %v5060, %v5059
    %v5074 = vpack.c.b16 %v5062, %v5061
    %v5075 = vpack.c.b16 %v5064, %v5063
    %v5076 = vpack.c.b16 %v5066, %v5065
    %v5077 = vpack.c.b16 %v5068, %v5067
    %v5078 = vpack.c.b16 %v5070, %v5069
    %5087 = vmatpush.bf16.msra.mxu0 %v5078
    %5088 = vmatpush.bf16.msra.mxu0 %v5077
    %5089 = vmatpush.bf16.msra.mxu0 %v5076
    %5090 = vmatpush.bf16.msra.mxu0 %v5075
    %5091 = vmatpush.bf16.msra.mxu0 %v5074
    %5092 = vmatpush.bf16.msra.mxu0 %v5073
    %5093 = vmatpush.bf16.msra.mxu0 %v5072
    %5094 = vmatpush.bf16.msra.mxu0 %v5071
    %5095 = vmatmul.f32.gmra.mxu0 %v4910
    %v5096 = vpop.f32.mrf.mxu0
    %v5097 = vadd.f32 %v5016, %v5096
    %5098 = vmatmul.f32.gmra.mxu0 %v4911
    %v5099 = vpop.f32.mrf.mxu0
    %v5100 = vadd.f32 %v5019, %v5099
    %5101 = vmatmul.f32.gmra.mxu0 %v4912
    %v5102 = vpop.f32.mrf.mxu0
    %v5103 = vadd.f32 %v5022, %v5102
    %5104 = vmatmul.f32.gmra.mxu0 %v4913
    %v5105 = vpop.f32.mrf.mxu0
    %v5106 = vadd.f32 %v5025, %v5105
    %5107 = vmatmul.f32.gmra.mxu0 %v4914
    %v5108 = vpop.f32.mrf.mxu0
    %v5109 = vadd.f32 %v5028, %v5108
    %5110 = vmatmul.f32.gmra.mxu0 %v4915
    %v5111 = vpop.f32.mrf.mxu0
    %v5112 = vadd.f32 %v5031, %v5111
    %5113 = vmatmul.f32.gmra.mxu0 %v4916
    %v5114 = vpop.f32.mrf.mxu0
    %v5115 = vadd.f32 %v5034, %v5114
    %5116 = vmatmul.f32.gmra.mxu0 %v4917
    %v5117 = vpop.f32.mrf.mxu0
    %v5118 = vadd.f32 %v5037, %v5117
    %5119 = vdwg.mxu0
    %v5120 = vld [vmem:[%s9] sm:$0x1]
    %v5122 = vperm.slane %v5120, 0
    %v5124 = vadd.f32 %v5097, %v5122
    %v5125 = vadd.f32 %v5100, %v5122
    %v5126 = vadd.f32 %v5103, %v5122
    %v5127 = vadd.f32 %v5106, %v5122
    %v5128 = vadd.f32 %v5109, %v5122
    %v5129 = vadd.f32 %v5112, %v5122
    %v5130 = vadd.f32 %v5115, %v5122
    %v5131 = vadd.f32 %v5118, %v5122
    %5132 = vst [vmem:[#allocation15] sm:$0xff] %v5124
    %5133 = vst [vmem:[#allocation15 + $0x8] sm:$0xff] %v5125
    %5134 = vst [vmem:[#allocation15 + $0x10] sm:$0xff] %v5126
    %5135 = vst [vmem:[#allocation15 + $0x18] sm:$0xff] %v5127
    %5136 = vst [vmem:[#allocation15 + $0x20] sm:$0xff] %v5128
    %5137 = vst [vmem:[#allocation15 + $0x28] sm:$0xff] %v5129
    %5138 = vst [vmem:[#allocation15 + $0x30] sm:$0xff] %v5130
    %5139 = vst [vmem:[#allocation15 + $0x38] sm:$0xff] %v5131
    // Predicated region
    $region62: #{tpu_custom_call.1} parent=1 // pred_check
      _
    $region63: #{tpu_custom_call.1} parent=1 // pred_check_branch
      %5141 = sbr.rel (0) target = $region65
    $region64: #{tpu_custom_call.1} parent=1 // pred_region
      %5143 = vsyncadd [#allocation8], 0
      %s5144 = sshll.u32 [#allocation15], 4
      %s5145 = int_to_ptr.vmem [resolvable:$true] %s5144
      %s5146 = sshll.u32 %s10, 4
      %s5147 = int_to_ptr.hbm [resolvable:$true] %s5146
      %5152 = dma.vmem_to_hbm [thread:$0]  %s5145, 1024, %s5147, [#allocation8], 128, 128, 8
    $region65: #{tpu_custom_call.1} parent=1 // pred_fallthru
      _
    // Predicated region
    $region66: #{tpu_custom_call.1} parent=1 // pred_check
      _
    $region67: #{tpu_custom_call.1} parent=1 // pred_check_branch
      %5154 = sbr.rel (0) target = $region69
    $region68: #{tpu_custom_call.1} parent=1 // pred_region
      %5156 = dma.done [#allocation8], 1024
    $region69: #{tpu_custom_call.1} parent=1 // pred_fallthru
      _
    %5157 = vsyncpa [#allocation7], 1
    %5158 = vsyncpa [#allocation10], 1
    %5159 = vsyncpa [#allocation13], 1
    %5160 = vsyncpa [#allocation8], 1

</llo_original>
